<compile_context>
chip_gen: v6e
topology: v6e:2x2x1
jax: 0.10.0
libtpu: 0.0.40
codegen_flags: <defaults>
</compile_context>

<pallas_src>
import functools

import jax
import jax.numpy as jnp
from jax.experimental import pallas as pl
from jax.experimental.pallas import tpu as pltpu


# --------------------------------------------------------------------- tiling utils
def _pick_tile_m(m):
    """Largest tile dividing m that still leaves >= 2 parallel blocks (megacore)."""
    prefs = (256, 128, 64, 32, 16, 8)
    for t in prefs:
        if m % t == 0 and m // t >= 2:
            return t
    for t in prefs:
        if m % t == 0:
            return t
    return m  # block == full dim is always legal


def _pick_tile_n(n):
    for t in (512, 256, 128):
        if n % t == 0:
            return t
    return n  # block == full dim is always legal


# ------------------------------------------------------------------- Pallas kernels
def _mm1_kernel(*refs, relu, has_res):
    """Single-step matmul: out = act((x @ w) * scale + bias [+ residual]).

    x/w/residual are bf16 (MXU-native); accumulation and epilogue are f32.
    """
    if has_res:
        x_ref, w_ref, s_ref, b_ref, r_ref, o_ref = refs
    else:
        x_ref, w_ref, s_ref, b_ref, o_ref = refs
        r_ref = None
    y = jnp.dot(x_ref[...], w_ref[...], preferred_element_type=jnp.float32)
    y = y * s_ref[...] + b_ref[...]
    if has_res:
        y = y + r_ref[...].astype(jnp.float32)
    if relu:
        y = jnp.maximum(y, 0.0)
    o_ref[...] = y.astype(o_ref.dtype)


def _conv3x3_kernel(x_ref, w_ref, s_ref, b_ref, o_ref, *, stride, dil, Ho, Wo):
    """Fused 3x3 conv + BN + ReLU for one batch image.

    x_ref:  (stride*stride, Hps, Wps, Cin)  phase-split, spatially padded, bf16
    w_ref:  (9, Cin, Cout)                  per-tap weights, bf16 (resident)
    s_ref/b_ref: (1, Cout)                  folded BN scale / bias, f32
    o_ref:  (1, Ho, Wo, Cout)               bf16
    The 9 taps are accumulated in-kernel (f32) — no im2col through HBM.
    """
    Cin = x_ref.shape[-1]
    Cout = o_ref.shape[-1]
    acc = jnp.zeros((Ho * Wo, Cout), jnp.float32)
    for t in range(9):
        ky, kx = divmod(t, 3)
        r, c = ky * dil, kx * dil
        pidx = (r % stride) * stride + (c % stride)
        r0, c0 = r // stride, c // stride
        patch = x_ref[pidx, pl.ds(r0, Ho), pl.ds(c0, Wo), :]          # (Ho, Wo, Cin)
        acc = acc + jnp.dot(patch.reshape(Ho * Wo, Cin), w_ref[t],
                            preferred_element_type=jnp.float32)
    y = acc * s_ref[...] + b_ref[...]
    y = jnp.maximum(y, 0.0)
    o_ref[0] = y.reshape(Ho, Wo, Cout).astype(o_ref.dtype)


# --------------------------------------------------------------------- conv wrappers
def _matmul_bn_act(x2d, w, scale, bias, relu, residual2d):
    """x2d: [M, K] bf16, w: [K, Cout] bf16, scale/bias: [1, Cout] f32."""
    M, K = x2d.shape
    _, Cout = w.shape
    tm = _pick_tile_m(M)
    tn = _pick_tile_n(Cout)
    grid = (M // tm, Cout // tn)

    in_specs = [
        pl.BlockSpec((tm, K), lambda i, j: (i, 0)),
        pl.BlockSpec((K, tn), lambda i, j: (0, j)),
        pl.BlockSpec((1, tn), lambda i, j: (0, j)),
        pl.BlockSpec((1, tn), lambda i, j: (0, j)),
    ]
    args = [x2d, w, scale, bias]
    has_res = residual2d is not None
    if has_res:
        in_specs.append(pl.BlockSpec((tm, tn), lambda i, j: (i, j)))
        args.append(residual2d)

    return pl.pallas_call(
        functools.partial(_mm1_kernel, relu=relu, has_res=has_res),
        out_shape=jax.ShapeDtypeStruct((M, Cout), jnp.bfloat16),
        grid_spec=pltpu.PrefetchScalarGridSpec(
            num_scalar_prefetch=0,
            grid=grid,
            in_specs=in_specs,
            out_specs=pl.BlockSpec((tm, tn), lambda i, j: (i, j)),
        ),
        compiler_params=pltpu.CompilerParams(
            dimension_semantics=("parallel", "parallel")),
    )(*args)


def conv1x1_bn_act(x, w, scale, bias, relu=False, residual=None, stride=1):
    """x: [N,H,W,Cin] bf16 NHWC; w: [Cin,Cout] bf16. 1x1 conv == plain matmul."""
    if stride != 1:
        x = x[:, ::stride, ::stride, :]
    N, H, W, Cin = x.shape
    Cout = w.shape[1]
    M = N * H * W
    r2d = residual.reshape(M, Cout) if residual is not None else None
    y = _matmul_bn_act(x.reshape(M, Cin), w, scale, bias, relu, r2d)
    return y.reshape(N, H, W, Cout)


def conv3x3_bn_relu(x, w_taps, scale, bias, stride=1, dilation=1):
    """x: [N,H,W,Cin] bf16; w_taps: [9,Cin,Cout] bf16; padding = dilation (Bottleneck)."""
    N, H, W, Cin = x.shape
    Cout = w_taps.shape[-1]
    s, d = stride, dilation
    pad = d
    Ho = (H + 2 * pad - 2 * d - 1) // s + 1
    Wo = (W + 2 * pad - 2 * d - 1) // s + 1
    Hp, Wp = H + 2 * pad, W + 2 * pad
    Hp2 = -(-Hp // s) * s
    Wp2 = -(-Wp // s) * s
    xp = jnp.pad(x, ((0, 0), (pad, pad + Hp2 - Hp), (pad, pad + Wp2 - Wp), (0, 0)))
    Hps, Wps = Hp2 // s, Wp2 // s
    if s == 1:
        xph = xp                                                  # (N, Hp2, Wp2, Cin)
    else:
        # phase split so the in-kernel tap slices are contiguous (no strided reads)
        xph = jnp.stack([xp[:, pr::s, pc::s, :]
                         for pr in range(s) for pc in range(s)], axis=1)
        xph = xph.reshape(N * s * s, Hps, Wps, Cin)
    ph = s * s

    return pl.pallas_call(
        functools.partial(_conv3x3_kernel, stride=s, dil=d, Ho=Ho, Wo=Wo),
        out_shape=jax.ShapeDtypeStruct((N, Ho, Wo, Cout), jnp.bfloat16),
        grid_spec=pltpu.PrefetchScalarGridSpec(
            num_scalar_prefetch=0,
            grid=(N,),
            in_specs=[
                pl.BlockSpec((ph, Hps, Wps, Cin), lambda n: (n, 0, 0, 0)),
                pl.BlockSpec((9, Cin, Cout), lambda n: (0, 0, 0)),
                pl.BlockSpec((1, Cout), lambda n: (0, 0)),
                pl.BlockSpec((1, Cout), lambda n: (0, 0)),
            ],
            out_specs=pl.BlockSpec((1, Ho, Wo, Cout), lambda n: (n, 0, 0, 0)),
        ),
        compiler_params=pltpu.CompilerParams(dimension_semantics=("parallel",)),
    )(xph, w_taps, scale, bias)


# ------------------------------------------------------------------ parameter build
def _kaiming(key, shape_hwio):
    kh, kw, cin, _ = shape_hwio
    std = (2.0 / (kh * kw * cin)) ** 0.5
    return std * jax.random.normal(key, shape_hwio, dtype=jnp.float32)


def _fold_bn(c, eps=1e-5):
    gamma = jnp.ones((c,), jnp.float32)
    beta = jnp.zeros((c,), jnp.float32)
    mean = jnp.zeros((c,), jnp.float32)
    var = jnp.ones((c,), jnp.float32)
    scale = gamma / jnp.sqrt(var + eps)
    bias = beta - mean * scale
    return scale.reshape(1, c), bias.reshape(1, c)


def init_bottleneck_params(key, inplanes, planes, stride=1, rate=1):
    """Weights pre-reshaped for the kernels and pre-cast to bf16 (done once)."""
    k1, k2, k3, k4 = jax.random.split(key, 4)
    p = {
        "stride": stride, "rate": rate,
        "w1": _kaiming(k1, (1, 1, inplanes, planes)).reshape(inplanes, planes).astype(jnp.bfloat16),
        "bn1": _fold_bn(planes),
        "w2": _kaiming(k2, (3, 3, planes, planes)).reshape(9, planes, planes).astype(jnp.bfloat16),
        "bn2": _fold_bn(planes),
        "w3": _kaiming(k3, (1, 1, planes, 4 * planes)).reshape(planes, 4 * planes).astype(jnp.bfloat16),
        "bn3": _fold_bn(4 * planes),
    }
    if stride != 1 or inplanes != 4 * planes:
        p["wd"] = _kaiming(k4, (1, 1, inplanes, 4 * planes)).reshape(inplanes, 4 * planes).astype(jnp.bfloat16)
        p["bnd"] = _fold_bn(4 * planes)
    return p


# ------------------------------------------------------------------------- forward
def bottleneck_forward_nhwc(p, x):
    """x: [N,H,W,Cin] bf16 NHWC -> [N,Ho,Wo,4*planes] bf16 NHWC."""
    stride, rate = p["stride"], p["rate"]
    out = conv1x1_bn_act(x, p["w1"], *p["bn1"], relu=True)
    out = conv3x3_bn_relu(out, p["w2"], *p["bn2"], stride=stride, dilation=rate)
    if "wd" in p:
        identity = conv1x1_bn_act(x, p["wd"], *p["bnd"], relu=False, stride=stride)
    else:
        identity = x
    # conv3 + bn3 + residual add + ReLU fused into one kernel (matches PyTorch order)
    out = conv1x1_bn_act(out, p["w3"], *p["bn3"], relu=True, residual=identity)
    return out


def bottleneck_forward(p, x_nchw):
    """PyTorch-convention NCHW f32 in / NCHW f32 out."""
    x = jnp.transpose(x_nchw, (0, 2, 3, 1)).astype(jnp.bfloat16)
    y = bottleneck_forward_nhwc(p, x)
    return jnp.transpose(y, (0, 3, 1, 2)).astype(jnp.float32)


# ------------------------------------------------------------- pure-JAX f32 reference
def _conv_ref(x, w_hwio, stride, pad, dil, scale, bias, relu, residual=None):
    y = jax.lax.conv_general_dilated(
        x, w_hwio, window_strides=(stride, stride),
        padding=((pad, pad), (pad, pad)), rhs_dilation=(dil, dil),
        dimension_numbers=("NHWC", "HWIO", "NHWC"),
        precision=jax.lax.Precision.HIGHEST)
    y = y * scale.reshape(1, 1, 1, -1) + bias.reshape(1, 1, 1, -1)
    if residual is not None:
        y = y + residual
    if relu:
        y = jnp.maximum(y, 0.0)
    return y


def bottleneck_ref_nhwc(p, x):
    stride, rate = p["stride"], p["rate"]
    cin, planes = p["w1"].shape
    w1 = p["w1"].astype(jnp.float32).reshape(1, 1, cin, planes)
    w2 = p["w2"].astype(jnp.float32).reshape(3, 3, planes, planes)
    w3 = p["w3"].astype(jnp.float32).reshape(1, 1, planes, 4 * planes)
    out = _conv_ref(x, w1, 1, 0, 1, *p["bn1"], relu=True)
    out = _conv_ref(out, w2, stride, rate, rate, *p["bn2"], relu=True)
    if "wd" in p:
        wd = p["wd"].astype(jnp.float32).reshape(1, 1, cin, 4 * planes)
        identity = _conv_ref(x, wd, stride, 0, 1, *p["bnd"], relu=False)
    else:
        identity = x
    out = _conv_ref(out, w3, 1, 0, 1, *p["bn3"], relu=True, residual=identity)
    return out


# ----------------------------------------------------------------------------- main
if __name__ == "__main__":
    root = jax.random.PRNGKey(0)
    kx, ka, kb = jax.random.split(root, 3)

    # small but representative: one block with downsample + stride, one dilated identity block
    x = jax.random.normal(kx, (2, 32, 16, 16), dtype=jnp.float32)          # NCHW
    pA = init_bottleneck_params(ka, inplanes=32, planes=16, stride=2, rate=1)  # downsample path
    pB = init_bottleneck_params(kb, inplanes=64, planes=16, stride=1, rate=2)  # identity, dilated

    @jax.jit
    def fwd(x_nchw):
        h = jnp.transpose(x_nchw, (0, 2, 3, 1)).astype(jnp.bfloat16)
        h = bottleneck_forward_nhwc(pA, h)
        h = bottleneck_forward_nhwc(pB, h)
        return jnp.transpose(h, (0, 3, 1, 2)).astype(jnp.float32)

    out = jax.block_until_ready(fwd(x))
    assert out.shape == (2, 64, 8, 8), out.shape
    assert bool(jnp.all(jnp.isfinite(out)))

    # validate the bf16 MXU path against a plain-JAX f32 reference (same folded weights)
    xr = jnp.transpose(x, (0, 2, 3, 1)).astype(jnp.bfloat16).astype(jnp.float32)
    ref = bottleneck_ref_nhwc(pB, bottleneck_ref_nhwc(pA, xr))
    ref = jnp.transpose(ref, (0, 3, 1, 2))
    rel_err = float(jnp.max(jnp.abs(out - ref)) / (jnp.max(jnp.abs(ref)) + 1e-6))
    assert rel_err < 0.1, rel_err

    print("KERNEL_OK")
</pallas_src>

<mosaic_0001>
module attributes {stable_mosaic.version = 11 : i64} {
  func.func @_mm1_kernel(%arg0: i32, %arg1: i32, %arg2: memref<256x32xbf16, #tpu.memory_space<vmem>>, %arg3: memref<32x16xbf16, #tpu.memory_space<vmem>>, %arg4: memref<1x16xf32, #tpu.memory_space<vmem>>, %arg5: memref<1x16xf32, #tpu.memory_space<vmem>>, %arg6: memref<256x16xbf16, #tpu.memory_space<vmem>>) attributes {dimension_semantics = [#tpu.dimension_semantics<parallel>, #tpu.dimension_semantics<parallel>], iteration_bounds = array<i64: 2, 1>, scalar_prefetch = 0 : i64, scratch_operands = 0 : i64, tpu.core_type = #tpu.core_type<tc>, window_params = [{transform_indices = @transform_0, window_bounds = array<i64: 256, 32>}, {transform_indices = @transform_1, window_bounds = array<i64: 32, 16>}, {transform_indices = @transform_2, window_bounds = array<i64: 1, 16>}, {transform_indices = @transform_3, window_bounds = array<i64: 1, 16>}, {transform_indices = @transform_4, window_bounds = array<i64: 256, 16>}]} {
    %c0 = arith.constant 0 : index
    %c0_0 = arith.constant 0 : index
    %0 = vector.load %arg2[%c0, %c0_0] : memref<256x32xbf16, #tpu.memory_space<vmem>>, vector<256x32xbf16>
    %c0_1 = arith.constant 0 : index
    %c0_2 = arith.constant 0 : index
    %1 = vector.load %arg3[%c0_1, %c0_2] : memref<32x16xbf16, #tpu.memory_space<vmem>>, vector<32x16xbf16>
    %cst = arith.constant dense<0.000000e+00> : vector<256x16xf32>
    %2 = tpu.matmul %0, %1, %cst {dimension_numbers = #tpu.dot_dimension_numbers<[1], [0], [0], [1], [0, 0, 1, 1], [], []>} : vector<256x32xbf16>, vector<32x16xbf16>, vector<256x16xf32> -> vector<256x16xf32>
    %c0_3 = arith.constant 0 : index
    %c0_4 = arith.constant 0 : index
    %3 = vector.load %arg4[%c0_3, %c0_4] : memref<1x16xf32, #tpu.memory_space<vmem>>, vector<1x16xf32>
    %4 = vector.broadcast %3 : vector<1x16xf32> to vector<256x16xf32>
    %5 = arith.mulf %2, %4 : vector<256x16xf32>
    %c0_5 = arith.constant 0 : index
    %c0_6 = arith.constant 0 : index
    %6 = vector.load %arg5[%c0_5, %c0_6] : memref<1x16xf32, #tpu.memory_space<vmem>>, vector<1x16xf32>
    %7 = vector.broadcast %6 : vector<1x16xf32> to vector<256x16xf32>
    %8 = arith.addf %5, %7 : vector<256x16xf32>
    %cst_7 = arith.constant 0.000000e+00 : f32
    %9 = vector.broadcast %cst_7 : f32 to vector<256x16xf32>
    %10 = arith.maximumf %8, %9 : vector<256x16xf32>
    %11 = arith.truncf %10 : vector<256x16xf32> to vector<256x16xbf16>
    %c0_8 = arith.constant 0 : index
    %c0_9 = arith.constant 0 : index
    %12 = vector.load %arg6[%c0_8, %c0_9] : memref<256x16xbf16, #tpu.memory_space<vmem>>, vector<256x16xbf16>
    tpu.vector_store %arg6[%c0_8, %c0_9], %11 {strides = array<i32>} : memref<256x16xbf16, #tpu.memory_space<vmem>>, vector<256x16xbf16>,
    return
  }
  func.func @transform_0(%arg0: i32, %arg1: i32) -> (i32, i32) {
    %c0_i32 = arith.constant 0 : i32
    %c0_i32_0 = arith.constant 0 : i32
    return %arg0, %c0_i32 : i32, i32
  }
  func.func @transform_1(%arg0: i32, %arg1: i32) -> (i32, i32) {
    %c0_i32 = arith.constant 0 : i32
    %c0_i32_0 = arith.constant 0 : i32
    return %c0_i32, %arg1 : i32, i32
  }
  func.func @transform_2(%arg0: i32, %arg1: i32) -> (i32, i32) {
    %c0_i32 = arith.constant 0 : i32
    %c0_i32_0 = arith.constant 0 : i32
    return %c0_i32, %arg1 : i32, i32
  }
  func.func @transform_3(%arg0: i32, %arg1: i32) -> (i32, i32) {
    %c0_i32 = arith.constant 0 : i32
    %c0_i32_0 = arith.constant 0 : i32
    return %c0_i32, %arg1 : i32, i32
  }
  func.func @transform_4(%arg0: i32, %arg1: i32) -> (i32, i32) {
    %c0_i32 = arith.constant 0 : i32
    return %arg0, %arg1 : i32, i32
  }
}

module attributes {stable_mosaic.version = 11 : i64} {
  func.func @_conv3x3_kernel(%arg0: i32, %arg1: memref<4x9x9x16xbf16, #tpu.memory_space<vmem>>, %arg2: memref<9x16x16xbf16, #tpu.memory_space<vmem>>, %arg3: memref<1x16xf32, #tpu.memory_space<vmem>>, %arg4: memref<1x16xf32, #tpu.memory_space<vmem>>, %arg5: memref<1x8x8x16xbf16, #tpu.memory_space<vmem>>) attributes {dimension_semantics = [#tpu.dimension_semantics<parallel>], iteration_bounds = array<i64: 2>, scalar_prefetch = 0 : i64, scratch_operands = 0 : i64, tpu.core_type = #tpu.core_type<tc>, window_params = [{transform_indices = @transform_0, window_bounds = array<i64: 4, 9, 9, 16>}, {pipeline_mode = #tpu.pipeline_mode<synchronous>, transform_indices = @transform_1, window_bounds = array<i64: 9, 16, 16>}, {pipeline_mode = #tpu.pipeline_mode<synchronous>, transform_indices = @transform_2, window_bounds = array<i64: 1, 16>}, {pipeline_mode = #tpu.pipeline_mode<synchronous>, transform_indices = @transform_3, window_bounds = array<i64: 1, 16>}, {transform_indices = @transform_4, window_bounds = array<i64: 1, 8, 8, 16>}]} {
    %cst = arith.constant 0.000000e+00 : f32
    %0 = vector.broadcast %cst : f32 to vector<64x16xf32>
    %c0 = arith.constant 0 : index
    %c0_0 = arith.constant 0 : index
    %c0_1 = arith.constant 0 : index
    %c0_2 = arith.constant 0 : index
    %1 = vector.load %arg1[%c0, %c0_0, %c0_1, %c0_2] : memref<4x9x9x16xbf16, #tpu.memory_space<vmem>>, vector<1x8x8x16xbf16>
    %2 = vector.shape_cast %1 : vector<1x8x8x16xbf16> to vector<8x8x16xbf16>
    %3 = vector.shape_cast %2 : vector<8x8x16xbf16> to vector<64x16xbf16>
    %c0_3 = arith.constant 0 : index
    %c0_4 = arith.constant 0 : index
    %c0_5 = arith.constant 0 : index
    %4 = vector.load %arg2[%c0_3, %c0_4, %c0_5] : memref<9x16x16xbf16, #tpu.memory_space<vmem>>, vector<1x16x16xbf16>
    %5 = vector.shape_cast %4 : vector<1x16x16xbf16> to vector<16x16xbf16>
    %cst_6 = arith.constant dense<0.000000e+00> : vector<64x16xf32>
    %6 = tpu.matmul %3, %5, %cst_6 {dimension_numbers = #tpu.dot_dimension_numbers<[1], [0], [0], [1], [0, 0, 1, 1], [], []>} : vector<64x16xbf16>, vector<16x16xbf16>, vector<64x16xf32> -> vector<64x16xf32>
    %7 = arith.addf %0, %6 : vector<64x16xf32>
    %c1 = arith.constant 1 : index
    %c0_7 = arith.constant 0 : index
    %c0_8 = arith.constant 0 : index
    %c0_9 = arith.constant 0 : index
    %8 = vector.load %arg1[%c1, %c0_7, %c0_8, %c0_9] : memref<4x9x9x16xbf16, #tpu.memory_space<vmem>>, vector<1x8x8x16xbf16>
    %9 = vector.shape_cast %8 : vector<1x8x8x16xbf16> to vector<8x8x16xbf16>
    %10 = vector.shape_cast %9 : vector<8x8x16xbf16> to vector<64x16xbf16>
    %c1_10 = arith.constant 1 : index
    %c0_11 = arith.constant 0 : index
    %c0_12 = arith.constant 0 : index
    %11 = vector.load %arg2[%c1_10, %c0_11, %c0_12] : memref<9x16x16xbf16, #tpu.memory_space<vmem>>, vector<1x16x16xbf16>
    %12 = vector.shape_cast %11 : vector<1x16x16xbf16> to vector<16x16xbf16>
    %cst_13 = arith.constant dense<0.000000e+00> : vector<64x16xf32>
    %13 = tpu.matmul %10, %12, %cst_13 {dimension_numbers = #tpu.dot_dimension_numbers<[1], [0], [0], [1], [0, 0, 1, 1], [], []>} : vector<64x16xbf16>, vector<16x16xbf16>, vector<64x16xf32> -> vector<64x16xf32>
    %14 = arith.addf %7, %13 : vector<64x16xf32>
    %c0_14 = arith.constant 0 : index
    %c0_15 = arith.constant 0 : index
    %c1_16 = arith.constant 1 : index
    %c0_17 = arith.constant 0 : index
    %15 = vector.load %arg1[%c0_14, %c0_15, %c1_16, %c0_17] : memref<4x9x9x16xbf16, #tpu.memory_space<vmem>>, vector<1x8x8x16xbf16>
    %16 = vector.shape_cast %15 : vector<1x8x8x16xbf16> to vector<8x8x16xbf16>
    %17 = vector.shape_cast %16 : vector<8x8x16xbf16> to vector<64x16xbf16>
    %c2 = arith.constant 2 : index
    %c0_18 = arith.constant 0 : index
    %c0_19 = arith.constant 0 : index
    %18 = vector.load %arg2[%c2, %c0_18, %c0_19] : memref<9x16x16xbf16, #tpu.memory_space<vmem>>, vector<1x16x16xbf16>
    %19 = vector.shape_cast %18 : vector<1x16x16xbf16> to vector<16x16xbf16>
    %cst_20 = arith.constant dense<0.000000e+00> : vector<64x16xf32>
    %20 = tpu.matmul %17, %19, %cst_20 {dimension_numbers = #tpu.dot_dimension_numbers<[1], [0], [0], [1], [0, 0, 1, 1], [], []>} : vector<64x16xbf16>, vector<16x16xbf16>, vector<64x16xf32> -> vector<64x16xf32>
    %21 = arith.addf %14, %20 : vector<64x16xf32>
    %c2_21 = arith.constant 2 : index
    %c0_22 = arith.constant 0 : index
    %c0_23 = arith.constant 0 : index
    %c0_24 = arith.constant 0 : index
    %22 = vector.load %arg1[%c2_21, %c0_22, %c0_23, %c0_24] : memref<4x9x9x16xbf16, #tpu.memory_space<vmem>>, vector<1x8x8x16xbf16>
    %23 = vector.shape_cast %22 : vector<1x8x8x16xbf16> to vector<8x8x16xbf16>
    %24 = vector.shape_cast %23 : vector<8x8x16xbf16> to vector<64x16xbf16>
    %c3 = arith.constant 3 : index
    %c0_25 = arith.constant 0 : index
    %c0_26 = arith.constant 0 : index
    %25 = vector.load %arg2[%c3, %c0_25, %c0_26] : memref<9x16x16xbf16, #tpu.memory_space<vmem>>, vector<1x16x16xbf16>
    %26 = vector.shape_cast %25 : vector<1x16x16xbf16> to vector<16x16xbf16>
    %cst_27 = arith.constant dense<0.000000e+00> : vector<64x16xf32>
    %27 = tpu.matmul %24, %26, %cst_27 {dimension_numbers = #tpu.dot_dimension_numbers<[1], [0], [0], [1], [0, 0, 1, 1], [], []>} : vector<64x16xbf16>, vector<16x16xbf16>, vector<64x16xf32> -> vector<64x16xf32>
    %28 = arith.addf %21, %27 : vector<64x16xf32>
    %c3_28 = arith.constant 3 : index
    %c0_29 = arith.constant 0 : index
    %c0_30 = arith.constant 0 : index
    %c0_31 = arith.constant 0 : index
    %29 = vector.load %arg1[%c3_28, %c0_29, %c0_30, %c0_31] : memref<4x9x9x16xbf16, #tpu.memory_space<vmem>>, vector<1x8x8x16xbf16>
    %30 = vector.shape_cast %29 : vector<1x8x8x16xbf16> to vector<8x8x16xbf16>
    %31 = vector.shape_cast %30 : vector<8x8x16xbf16> to vector<64x16xbf16>
    %c4 = arith.constant 4 : index
    %c0_32 = arith.constant 0 : index
    %c0_33 = arith.constant 0 : index
    %32 = vector.load %arg2[%c4, %c0_32, %c0_33] : memref<9x16x16xbf16, #tpu.memory_space<vmem>>, vector<1x16x16xbf16>
    %33 = vector.shape_cast %32 : vector<1x16x16xbf16> to vector<16x16xbf16>
    %cst_34 = arith.constant dense<0.000000e+00> : vector<64x16xf32>
    %34 = tpu.matmul %31, %33, %cst_34 {dimension_numbers = #tpu.dot_dimension_numbers<[1], [0], [0], [1], [0, 0, 1, 1], [], []>} : vector<64x16xbf16>, vector<16x16xbf16>, vector<64x16xf32> -> vector<64x16xf32>
    %35 = arith.addf %28, %34 : vector<64x16xf32>
    %c2_35 = arith.constant 2 : index
    %c0_36 = arith.constant 0 : index
    %c1_37 = arith.constant 1 : index
    %c0_38 = arith.constant 0 : index
    %36 = vector.load %arg1[%c2_35, %c0_36, %c1_37, %c0_38] : memref<4x9x9x16xbf16, #tpu.memory_space<vmem>>, vector<1x8x8x16xbf16>
    %37 = vector.shape_cast %36 : vector<1x8x8x16xbf16> to vector<8x8x16xbf16>
    %38 = vector.shape_cast %37 : vector<8x8x16xbf16> to vector<64x16xbf16>
    %c5 = arith.constant 5 : index
    %c0_39 = arith.constant 0 : index
    %c0_40 = arith.constant 0 : index
    %39 = vector.load %arg2[%c5, %c0_39, %c0_40] : memref<9x16x16xbf16, #tpu.memory_space<vmem>>, vector<1x16x16xbf16>
    %40 = vector.shape_cast %39 : vector<1x16x16xbf16> to vector<16x16xbf16>
    %cst_41 = arith.constant dense<0.000000e+00> : vector<64x16xf32>
    %41 = tpu.matmul %38, %40, %cst_41 {dimension_numbers = #tpu.dot_dimension_numbers<[1], [0], [0], [1], [0, 0, 1, 1], [], []>} : vector<64x16xbf16>, vector<16x16xbf16>, vector<64x16xf32> -> vector<64x16xf32>
    %42 = arith.addf %35, %41 : vector<64x16xf32>
    %c0_42 = arith.constant 0 : index
    %c1_43 = arith.constant 1 : index
    %c0_44 = arith.constant 0 : index
    %c0_45 = arith.constant 0 : index
    %43 = vector.load %arg1[%c0_42, %c1_43, %c0_44, %c0_45] : memref<4x9x9x16xbf16, #tpu.memory_space<vmem>>, vector<1x8x8x16xbf16>
    %44 = vector.shape_cast %43 : vector<1x8x8x16xbf16> to vector<8x8x16xbf16>
    %45 = vector.shape_cast %44 : vector<8x8x16xbf16> to vector<64x16xbf16>
    %c6 = arith.constant 6 : index
    %c0_46 = arith.constant 0 : index
    %c0_47 = arith.constant 0 : index
    %46 = vector.load %arg2[%c6, %c0_46, %c0_47] : memref<9x16x16xbf16, #tpu.memory_space<vmem>>, vector<1x16x16xbf16>
    %47 = vector.shape_cast %46 : vector<1x16x16xbf16> to vector<16x16xbf16>
    %cst_48 = arith.constant dense<0.000000e+00> : vector<64x16xf32>
    %48 = tpu.matmul %45, %47, %cst_48 {dimension_numbers = #tpu.dot_dimension_numbers<[1], [0], [0], [1], [0, 0, 1, 1], [], []>} : vector<64x16xbf16>, vector<16x16xbf16>, vector<64x16xf32> -> vector<64x16xf32>
    %49 = arith.addf %42, %48 : vector<64x16xf32>
    %c1_49 = arith.constant 1 : index
    %c1_50 = arith.constant 1 : index
    %c0_51 = arith.constant 0 : index
    %c0_52 = arith.constant 0 : index
    %50 = vector.load %arg1[%c1_49, %c1_50, %c0_51, %c0_52] : memref<4x9x9x16xbf16, #tpu.memory_space<vmem>>, vector<1x8x8x16xbf16>
    %51 = vector.shape_cast %50 : vector<1x8x8x16xbf16> to vector<8x8x16xbf16>
    %52 = vector.shape_cast %51 : vector<8x8x16xbf16> to vector<64x16xbf16>
    %c7 = arith.constant 7 : index
    %c0_53 = arith.constant 0 : index
    %c0_54 = arith.constant 0 : index
    %53 = vector.load %arg2[%c7, %c0_53, %c0_54] : memref<9x16x16xbf16, #tpu.memory_space<vmem>>, vector<1x16x16xbf16>
    %54 = vector.shape_cast %53 : vector<1x16x16xbf16> to vector<16x16xbf16>
    %cst_55 = arith.constant dense<0.000000e+00> : vector<64x16xf32>
    %55 = tpu.matmul %52, %54, %cst_55 {dimension_numbers = #tpu.dot_dimension_numbers<[1], [0], [0], [1], [0, 0, 1, 1], [], []>} : vector<64x16xbf16>, vector<16x16xbf16>, vector<64x16xf32> -> vector<64x16xf32>
    %56 = arith.addf %49, %55 : vector<64x16xf32>
    %c0_56 = arith.constant 0 : index
    %c1_57 = arith.constant 1 : index
    %c1_58 = arith.constant 1 : index
    %c0_59 = arith.constant 0 : index
    %57 = vector.load %arg1[%c0_56, %c1_57, %c1_58, %c0_59] : memref<4x9x9x16xbf16, #tpu.memory_space<vmem>>, vector<1x8x8x16xbf16>
    %58 = vector.shape_cast %57 : vector<1x8x8x16xbf16> to vector<8x8x16xbf16>
    %59 = vector.shape_cast %58 : vector<8x8x16xbf16> to vector<64x16xbf16>
    %c8 = arith.constant 8 : index
    %c0_60 = arith.constant 0 : index
    %c0_61 = arith.constant 0 : index
    %60 = vector.load %arg2[%c8, %c0_60, %c0_61] : memref<9x16x16xbf16, #tpu.memory_space<vmem>>, vector<1x16x16xbf16>
    %61 = vector.shape_cast %60 : vector<1x16x16xbf16> to vector<16x16xbf16>
    %cst_62 = arith.constant dense<0.000000e+00> : vector<64x16xf32>
    %62 = tpu.matmul %59, %61, %cst_62 {dimension_numbers = #tpu.dot_dimension_numbers<[1], [0], [0], [1], [0, 0, 1, 1], [], []>} : vector<64x16xbf16>, vector<16x16xbf16>, vector<64x16xf32> -> vector<64x16xf32>
    %63 = arith.addf %56, %62 : vector<64x16xf32>
    %c0_63 = arith.constant 0 : index
    %c0_64 = arith.constant 0 : index
    %64 = vector.load %arg3[%c0_63, %c0_64] : memref<1x16xf32, #tpu.memory_space<vmem>>, vector<1x16xf32>
    %65 = vector.broadcast %64 : vector<1x16xf32> to vector<64x16xf32>
    %66 = arith.mulf %63, %65 : vector<64x16xf32>
    %c0_65 = arith.constant 0 : index
    %c0_66 = arith.constant 0 : index
    %67 = vector.load %arg4[%c0_65, %c0_66] : memref<1x16xf32, #tpu.memory_space<vmem>>, vector<1x16xf32>
    %68 = vector.broadcast %67 : vector<1x16xf32> to vector<64x16xf32>
    %69 = arith.addf %66, %68 : vector<64x16xf32>
    %cst_67 = arith.constant 0.000000e+00 : f32
    %70 = vector.broadcast %cst_67 : f32 to vector<64x16xf32>
    %71 = arith.maximumf %69, %70 : vector<64x16xf32>
    %72 = vector.shape_cast %71 : vector<64x16xf32> to vector<8x8x16xf32>
    %73 = arith.truncf %72 : vector<8x8x16xf32> to vector<8x8x16xbf16>
    %c0_68 = arith.constant 0 : index
    %c0_69 = arith.constant 0 : index
    %c0_70 = arith.constant 0 : index
    %c0_71 = arith.constant 0 : index
    %74 = vector.load %arg5[%c0_68, %c0_69, %c0_70, %c0_71] : memref<1x8x8x16xbf16, #tpu.memory_space<vmem>>, vector<1x8x8x16xbf16>
    %75 = vector.shape_cast %74 : vector<1x8x8x16xbf16> to vector<8x8x16xbf16>
    %76 = vector.shape_cast %73 : vector<8x8x16xbf16> to vector<1x8x8x16xbf16>
    tpu.vector_store %arg5[%c0_68, %c0_69, %c0_70, %c0_71], %76 {strides = array<i32>} : memref<1x8x8x16xbf16, #tpu.memory_space<vmem>>, vector<1x8x8x16xbf16>,
    return
  }
  func.func @transform_0(%arg0: i32) -> (i32, i32, i32, i32) {
    %c0_i32 = arith.constant 0 : i32
    %c0_i32_0 = arith.constant 0 : i32
    %c0_i32_1 = arith.constant 0 : i32
    %c0_i32_2 = arith.constant 0 : i32
    return %arg0, %c0_i32, %c0_i32_0, %c0_i32_1 : i32, i32, i32, i32
  }
  func.func @transform_1(%arg0: i32) -> (i32, i32, i32) {
    %c0_i32 = arith.constant 0 : i32
    %c0_i32_0 = arith.constant 0 : i32
    %c0_i32_1 = arith.constant 0 : i32
    %c0_i32_2 = arith.constant 0 : i32
    return %c0_i32, %c0_i32_0, %c0_i32_1 : i32, i32, i32
  }
  func.func @transform_2(%arg0: i32) -> (i32, i32) {
    %c0_i32 = arith.constant 0 : i32
    %c0_i32_0 = arith.constant 0 : i32
    %c0_i32_1 = arith.constant 0 : i32
    return %c0_i32, %c0_i32_0 : i32, i32
  }
  func.func @transform_3(%arg0: i32) -> (i32, i32) {
    %c0_i32 = arith.constant 0 : i32
    %c0_i32_0 = arith.constant 0 : i32
    %c0_i32_1 = arith.constant 0 : i32
    return %c0_i32, %c0_i32_0 : i32, i32
  }
  func.func @transform_4(%arg0: i32) -> (i32, i32, i32, i32) {
    %c0_i32 = arith.constant 0 : i32
    %c0_i32_0 = arith.constant 0 : i32
    %c0_i32_1 = arith.constant 0 : i32
    %c0_i32_2 = arith.constant 0 : i32
    return %arg0, %c0_i32, %c0_i32_0, %c0_i32_1 : i32, i32, i32, i32
  }
}

module attributes {stable_mosaic.version = 11 : i64} {
  func.func @_mm1_kernel(%arg0: i32, %arg1: i32, %arg2: memref<64x32xbf16, #tpu.memory_space<vmem>>, %arg3: memref<32x64xbf16, #tpu.memory_space<vmem>>, %arg4: memref<1x64xf32, #tpu.memory_space<vmem>>, %arg5: memref<1x64xf32, #tpu.memory_space<vmem>>, %arg6: memref<64x64xbf16, #tpu.memory_space<vmem>>) attributes {dimension_semantics = [#tpu.dimension_semantics<parallel>, #tpu.dimension_semantics<parallel>], iteration_bounds = array<i64: 2, 1>, scalar_prefetch = 0 : i64, scratch_operands = 0 : i64, tpu.core_type = #tpu.core_type<tc>, window_params = [{transform_indices = @transform_0, window_bounds = array<i64: 64, 32>}, {transform_indices = @transform_1, window_bounds = array<i64: 32, 64>}, {transform_indices = @transform_2, window_bounds = array<i64: 1, 64>}, {transform_indices = @transform_3, window_bounds = array<i64: 1, 64>}, {transform_indices = @transform_4, window_bounds = array<i64: 64, 64>}]} {
    %c0 = arith.constant 0 : index
    %c0_0 = arith.constant 0 : index
    %0 = vector.load %arg2[%c0, %c0_0] : memref<64x32xbf16, #tpu.memory_space<vmem>>, vector<64x32xbf16>
    %c0_1 = arith.constant 0 : index
    %c0_2 = arith.constant 0 : index
    %1 = vector.load %arg3[%c0_1, %c0_2] : memref<32x64xbf16, #tpu.memory_space<vmem>>, vector<32x64xbf16>
    %cst = arith.constant dense<0.000000e+00> : vector<64x64xf32>
    %2 = tpu.matmul %0, %1, %cst {dimension_numbers = #tpu.dot_dimension_numbers<[1], [0], [0], [1], [0, 0, 1, 1], [], []>} : vector<64x32xbf16>, vector<32x64xbf16>, vector<64x64xf32> -> vector<64x64xf32>
    %c0_3 = arith.constant 0 : index
    %c0_4 = arith.constant 0 : index
    %3 = vector.load %arg4[%c0_3, %c0_4] : memref<1x64xf32, #tpu.memory_space<vmem>>, vector<1x64xf32>
    %4 = vector.broadcast %3 : vector<1x64xf32> to vector<64x64xf32>
    %5 = arith.mulf %2, %4 : vector<64x64xf32>
    %c0_5 = arith.constant 0 : index
    %c0_6 = arith.constant 0 : index
    %6 = vector.load %arg5[%c0_5, %c0_6] : memref<1x64xf32, #tpu.memory_space<vmem>>, vector<1x64xf32>
    %7 = vector.broadcast %6 : vector<1x64xf32> to vector<64x64xf32>
    %8 = arith.addf %5, %7 : vector<64x64xf32>
    %9 = arith.truncf %8 : vector<64x64xf32> to vector<64x64xbf16>
    %c0_7 = arith.constant 0 : index
    %c0_8 = arith.constant 0 : index
    %10 = vector.load %arg6[%c0_7, %c0_8] : memref<64x64xbf16, #tpu.memory_space<vmem>>, vector<64x64xbf16>
    tpu.vector_store %arg6[%c0_7, %c0_8], %9 {strides = array<i32>} : memref<64x64xbf16, #tpu.memory_space<vmem>>, vector<64x64xbf16>,
    return
  }
  func.func @transform_0(%arg0: i32, %arg1: i32) -> (i32, i32) {
    %c0_i32 = arith.constant 0 : i32
    %c0_i32_0 = arith.constant 0 : i32
    return %arg0, %c0_i32 : i32, i32
  }
  func.func @transform_1(%arg0: i32, %arg1: i32) -> (i32, i32) {
    %c0_i32 = arith.constant 0 : i32
    %c0_i32_0 = arith.constant 0 : i32
    return %c0_i32, %arg1 : i32, i32
  }
  func.func @transform_2(%arg0: i32, %arg1: i32) -> (i32, i32) {
    %c0_i32 = arith.constant 0 : i32
    %c0_i32_0 = arith.constant 0 : i32
    return %c0_i32, %arg1 : i32, i32
  }
  func.func @transform_3(%arg0: i32, %arg1: i32) -> (i32, i32) {
    %c0_i32 = arith.constant 0 : i32
    %c0_i32_0 = arith.constant 0 : i32
    return %c0_i32, %arg1 : i32, i32
  }
  func.func @transform_4(%arg0: i32, %arg1: i32) -> (i32, i32) {
    %c0_i32 = arith.constant 0 : i32
    return %arg0, %arg1 : i32, i32
  }
}

module attributes {stable_mosaic.version = 11 : i64} {
  func.func @_mm1_kernel(%arg0: i32, %arg1: i32, %arg2: memref<64x16xbf16, #tpu.memory_space<vmem>>, %arg3: memref<16x64xbf16, #tpu.memory_space<vmem>>, %arg4: memref<1x64xf32, #tpu.memory_space<vmem>>, %arg5: memref<1x64xf32, #tpu.memory_space<vmem>>, %arg6: memref<64x64xbf16, #tpu.memory_space<vmem>>, %arg7: memref<64x64xbf16, #tpu.memory_space<vmem>>) attributes {dimension_semantics = [#tpu.dimension_semantics<parallel>, #tpu.dimension_semantics<parallel>], iteration_bounds = array<i64: 2, 1>, scalar_prefetch = 0 : i64, scratch_operands = 0 : i64, tpu.core_type = #tpu.core_type<tc>, window_params = [{transform_indices = @transform_0, window_bounds = array<i64: 64, 16>}, {transform_indices = @transform_1, window_bounds = array<i64: 16, 64>}, {transform_indices = @transform_2, window_bounds = array<i64: 1, 64>}, {transform_indices = @transform_3, window_bounds = array<i64: 1, 64>}, {transform_indices = @transform_4, window_bounds = array<i64: 64, 64>}, {transform_indices = @transform_5, window_bounds = array<i64: 64, 64>}]} {
    %c0 = arith.constant 0 : index
    %c0_0 = arith.constant 0 : index
    %0 = vector.load %arg2[%c0, %c0_0] : memref<64x16xbf16, #tpu.memory_space<vmem>>, vector<64x16xbf16>
    %c0_1 = arith.constant 0 : index
    %c0_2 = arith.constant 0 : index
    %1 = vector.load %arg3[%c0_1, %c0_2] : memref<16x64xbf16, #tpu.memory_space<vmem>>, vector<16x64xbf16>
    %cst = arith.constant dense<0.000000e+00> : vector<64x64xf32>
    %2 = tpu.matmul %0, %1, %cst {dimension_numbers = #tpu.dot_dimension_numbers<[1], [0], [0], [1], [0, 0, 1, 1], [], []>} : vector<64x16xbf16>, vector<16x64xbf16>, vector<64x64xf32> -> vector<64x64xf32>
    %c0_3 = arith.constant 0 : index
    %c0_4 = arith.constant 0 : index
    %3 = vector.load %arg4[%c0_3, %c0_4] : memref<1x64xf32, #tpu.memory_space<vmem>>, vector<1x64xf32>
    %4 = vector.broadcast %3 : vector<1x64xf32> to vector<64x64xf32>
    %5 = arith.mulf %2, %4 : vector<64x64xf32>
    %c0_5 = arith.constant 0 : index
    %c0_6 = arith.constant 0 : index
    %6 = vector.load %arg5[%c0_5, %c0_6] : memref<1x64xf32, #tpu.memory_space<vmem>>, vector<1x64xf32>
    %7 = vector.broadcast %6 : vector<1x64xf32> to vector<64x64xf32>
    %8 = arith.addf %5, %7 : vector<64x64xf32>
    %c0_7 = arith.constant 0 : index
    %c0_8 = arith.constant 0 : index
    %9 = vector.load %arg6[%c0_7, %c0_8] : memref<64x64xbf16, #tpu.memory_space<vmem>>, vector<64x64xbf16>
    %10 = arith.extf %9 : vector<64x64xbf16> to vector<64x64xf32>
    %11 = arith.addf %8, %10 : vector<64x64xf32>
    %cst_9 = arith.constant 0.000000e+00 : f32
    %12 = vector.broadcast %cst_9 : f32 to vector<64x64xf32>
    %13 = arith.maximumf %11, %12 : vector<64x64xf32>
    %14 = arith.truncf %13 : vector<64x64xf32> to vector<64x64xbf16>
    %c0_10 = arith.constant 0 : index
    %c0_11 = arith.constant 0 : index
    %15 = vector.load %arg7[%c0_10, %c0_11] : memref<64x64xbf16, #tpu.memory_space<vmem>>, vector<64x64xbf16>
    tpu.vector_store %arg7[%c0_10, %c0_11], %14 {strides = array<i32>} : memref<64x64xbf16, #tpu.memory_space<vmem>>, vector<64x64xbf16>,
    return
  }
  func.func @transform_0(%arg0: i32, %arg1: i32) -> (i32, i32) {
    %c0_i32 = arith.constant 0 : i32
    %c0_i32_0 = arith.constant 0 : i32
    return %arg0, %c0_i32 : i32, i32
  }
  func.func @transform_1(%arg0: i32, %arg1: i32) -> (i32, i32) {
    %c0_i32 = arith.constant 0 : i32
    %c0_i32_0 = arith.constant 0 : i32
    return %c0_i32, %arg1 : i32, i32
  }
  func.func @transform_2(%arg0: i32, %arg1: i32) -> (i32, i32) {
    %c0_i32 = arith.constant 0 : i32
    %c0_i32_0 = arith.constant 0 : i32
    return %c0_i32, %arg1 : i32, i32
  }
  func.func @transform_3(%arg0: i32, %arg1: i32) -> (i32, i32) {
    %c0_i32 = arith.constant 0 : i32
    %c0_i32_0 = arith.constant 0 : i32
    return %c0_i32, %arg1 : i32, i32
  }
  func.func @transform_4(%arg0: i32, %arg1: i32) -> (i32, i32) {
    %c0_i32 = arith.constant 0 : i32
    return %arg0, %arg1 : i32, i32
  }
  func.func @transform_5(%arg0: i32, %arg1: i32) -> (i32, i32) {
    %c0_i32 = arith.constant 0 : i32
    return %arg0, %arg1 : i32, i32
  }
}

module attributes {stable_mosaic.version = 11 : i64} {
  func.func @_mm1_kernel(%arg0: i32, %arg1: i32, %arg2: memref<64x64xbf16, #tpu.memory_space<vmem>>, %arg3: memref<64x16xbf16, #tpu.memory_space<vmem>>, %arg4: memref<1x16xf32, #tpu.memory_space<vmem>>, %arg5: memref<1x16xf32, #tpu.memory_space<vmem>>, %arg6: memref<64x16xbf16, #tpu.memory_space<vmem>>) attributes {dimension_semantics = [#tpu.dimension_semantics<parallel>, #tpu.dimension_semantics<parallel>], iteration_bounds = array<i64: 2, 1>, scalar_prefetch = 0 : i64, scratch_operands = 0 : i64, tpu.core_type = #tpu.core_type<tc>, window_params = [{transform_indices = @transform_0, window_bounds = array<i64: 64, 64>}, {transform_indices = @transform_1, window_bounds = array<i64: 64, 16>}, {transform_indices = @transform_2, window_bounds = array<i64: 1, 16>}, {transform_indices = @transform_3, window_bounds = array<i64: 1, 16>}, {transform_indices = @transform_4, window_bounds = array<i64: 64, 16>}]} {
    %c0 = arith.constant 0 : index
    %c0_0 = arith.constant 0 : index
    %0 = vector.load %arg2[%c0, %c0_0] : memref<64x64xbf16, #tpu.memory_space<vmem>>, vector<64x64xbf16>
    %c0_1 = arith.constant 0 : index
    %c0_2 = arith.constant 0 : index
    %1 = vector.load %arg3[%c0_1, %c0_2] : memref<64x16xbf16, #tpu.memory_space<vmem>>, vector<64x16xbf16>
    %cst = arith.constant dense<0.000000e+00> : vector<64x16xf32>
    %2 = tpu.matmul %0, %1, %cst {dimension_numbers = #tpu.dot_dimension_numbers<[1], [0], [0], [1], [0, 0, 1, 1], [], []>} : vector<64x64xbf16>, vector<64x16xbf16>, vector<64x16xf32> -> vector<64x16xf32>
    %c0_3 = arith.constant 0 : index
    %c0_4 = arith.constant 0 : index
    %3 = vector.load %arg4[%c0_3, %c0_4] : memref<1x16xf32, #tpu.memory_space<vmem>>, vector<1x16xf32>
    %4 = vector.broadcast %3 : vector<1x16xf32> to vector<64x16xf32>
    %5 = arith.mulf %2, %4 : vector<64x16xf32>
    %c0_5 = arith.constant 0 : index
    %c0_6 = arith.constant 0 : index
    %6 = vector.load %arg5[%c0_5, %c0_6] : memref<1x16xf32, #tpu.memory_space<vmem>>, vector<1x16xf32>
    %7 = vector.broadcast %6 : vector<1x16xf32> to vector<64x16xf32>
    %8 = arith.addf %5, %7 : vector<64x16xf32>
    %cst_7 = arith.constant 0.000000e+00 : f32
    %9 = vector.broadcast %cst_7 : f32 to vector<64x16xf32>
    %10 = arith.maximumf %8, %9 : vector<64x16xf32>
    %11 = arith.truncf %10 : vector<64x16xf32> to vector<64x16xbf16>
    %c0_8 = arith.constant 0 : index
    %c0_9 = arith.constant 0 : index
    %12 = vector.load %arg6[%c0_8, %c0_9] : memref<64x16xbf16, #tpu.memory_space<vmem>>, vector<64x16xbf16>
    tpu.vector_store %arg6[%c0_8, %c0_9], %11 {strides = array<i32>} : memref<64x16xbf16, #tpu.memory_space<vmem>>, vector<64x16xbf16>,
    return
  }
  func.func @transform_0(%arg0: i32, %arg1: i32) -> (i32, i32) {
    %c0_i32 = arith.constant 0 : i32
    %c0_i32_0 = arith.constant 0 : i32
    return %arg0, %c0_i32 : i32, i32
  }
  func.func @transform_1(%arg0: i32, %arg1: i32) -> (i32, i32) {
    %c0_i32 = arith.constant 0 : i32
    %c0_i32_0 = arith.constant 0 : i32
    return %c0_i32, %arg1 : i32, i32
  }
  func.func @transform_2(%arg0: i32, %arg1: i32) -> (i32, i32) {
    %c0_i32 = arith.constant 0 : i32
    %c0_i32_0 = arith.constant 0 : i32
    return %c0_i32, %arg1 : i32, i32
  }
  func.func @transform_3(%arg0: i32, %arg1: i32) -> (i32, i32) {
    %c0_i32 = arith.constant 0 : i32
    %c0_i32_0 = arith.constant 0 : i32
    return %c0_i32, %arg1 : i32, i32
  }
  func.func @transform_4(%arg0: i32, %arg1: i32) -> (i32, i32) {
    %c0_i32 = arith.constant 0 : i32
    return %arg0, %arg1 : i32, i32
  }
}

module attributes {stable_mosaic.version = 11 : i64} {
  func.func @_conv3x3_kernel(%arg0: i32, %arg1: memref<1x12x12x16xbf16, #tpu.memory_space<vmem>>, %arg2: memref<9x16x16xbf16, #tpu.memory_space<vmem>>, %arg3: memref<1x16xf32, #tpu.memory_space<vmem>>, %arg4: memref<1x16xf32, #tpu.memory_space<vmem>>, %arg5: memref<1x8x8x16xbf16, #tpu.memory_space<vmem>>) attributes {dimension_semantics = [#tpu.dimension_semantics<parallel>], iteration_bounds = array<i64: 2>, scalar_prefetch = 0 : i64, scratch_operands = 0 : i64, tpu.core_type = #tpu.core_type<tc>, window_params = [{transform_indices = @transform_0, window_bounds = array<i64: 1, 12, 12, 16>}, {pipeline_mode = #tpu.pipeline_mode<synchronous>, transform_indices = @transform_1, window_bounds = array<i64: 9, 16, 16>}, {pipeline_mode = #tpu.pipeline_mode<synchronous>, transform_indices = @transform_2, window_bounds = array<i64: 1, 16>}, {pipeline_mode = #tpu.pipeline_mode<synchronous>, transform_indices = @transform_3, window_bounds = array<i64: 1, 16>}, {transform_indices = @transform_4, window_bounds = array<i64: 1, 8, 8, 16>}]} {
    %cst = arith.constant 0.000000e+00 : f32
    %0 = vector.broadcast %cst : f32 to vector<64x16xf32>
    %c0 = arith.constant 0 : index
    %c0_0 = arith.constant 0 : index
    %c0_1 = arith.constant 0 : index
    %c0_2 = arith.constant 0 : index
    %1 = vector.load %arg1[%c0, %c0_0, %c0_1, %c0_2] : memref<1x12x12x16xbf16, #tpu.memory_space<vmem>>, vector<1x8x8x16xbf16>
    %2 = vector.shape_cast %1 : vector<1x8x8x16xbf16> to vector<8x8x16xbf16>
    %3 = vector.shape_cast %2 : vector<8x8x16xbf16> to vector<64x16xbf16>
    %c0_3 = arith.constant 0 : index
    %c0_4 = arith.constant 0 : index
    %c0_5 = arith.constant 0 : index
    %4 = vector.load %arg2[%c0_3, %c0_4, %c0_5] : memref<9x16x16xbf16, #tpu.memory_space<vmem>>, vector<1x16x16xbf16>
    %5 = vector.shape_cast %4 : vector<1x16x16xbf16> to vector<16x16xbf16>
    %cst_6 = arith.constant dense<0.000000e+00> : vector<64x16xf32>
    %6 = tpu.matmul %3, %5, %cst_6 {dimension_numbers = #tpu.dot_dimension_numbers<[1], [0], [0], [1], [0, 0, 1, 1], [], []>} : vector<64x16xbf16>, vector<16x16xbf16>, vector<64x16xf32> -> vector<64x16xf32>
    %7 = arith.addf %0, %6 : vector<64x16xf32>
    %c0_7 = arith.constant 0 : index
    %c0_8 = arith.constant 0 : index
    %c2 = arith.constant 2 : index
    %c0_9 = arith.constant 0 : index
    %8 = vector.load %arg1[%c0_7, %c0_8, %c2, %c0_9] : memref<1x12x12x16xbf16, #tpu.memory_space<vmem>>, vector<1x8x8x16xbf16>
    %9 = vector.shape_cast %8 : vector<1x8x8x16xbf16> to vector<8x8x16xbf16>
    %10 = vector.shape_cast %9 : vector<8x8x16xbf16> to vector<64x16xbf16>
    %c1 = arith.constant 1 : index
    %c0_10 = arith.constant 0 : index
    %c0_11 = arith.constant 0 : index
    %11 = vector.load %arg2[%c1, %c0_10, %c0_11] : memref<9x16x16xbf16, #tpu.memory_space<vmem>>, vector<1x16x16xbf16>
    %12 = vector.shape_cast %11 : vector<1x16x16xbf16> to vector<16x16xbf16>
    %cst_12 = arith.constant dense<0.000000e+00> : vector<64x16xf32>
    %13 = tpu.matmul %10, %12, %cst_12 {dimension_numbers = #tpu.dot_dimension_numbers<[1], [0], [0], [1], [0, 0, 1, 1], [], []>} : vector<64x16xbf16>, vector<16x16xbf16>, vector<64x16xf32> -> vector<64x16xf32>
    %14 = arith.addf %7, %13 : vector<64x16xf32>
    %c0_13 = arith.constant 0 : index
    %c0_14 = arith.constant 0 : index
    %c4 = arith.constant 4 : index
    %c0_15 = arith.constant 0 : index
    %15 = vector.load %arg1[%c0_13, %c0_14, %c4, %c0_15] : memref<1x12x12x16xbf16, #tpu.memory_space<vmem>>, vector<1x8x8x16xbf16>
    %16 = vector.shape_cast %15 : vector<1x8x8x16xbf16> to vector<8x8x16xbf16>
    %17 = vector.shape_cast %16 : vector<8x8x16xbf16> to vector<64x16xbf16>
    %c2_16 = arith.constant 2 : index
    %c0_17 = arith.constant 0 : index
    %c0_18 = arith.constant 0 : index
    %18 = vector.load %arg2[%c2_16, %c0_17, %c0_18] : memref<9x16x16xbf16, #tpu.memory_space<vmem>>, vector<1x16x16xbf16>
    %19 = vector.shape_cast %18 : vector<1x16x16xbf16> to vector<16x16xbf16>
    %cst_19 = arith.constant dense<0.000000e+00> : vector<64x16xf32>
    %20 = tpu.matmul %17, %19, %cst_19 {dimension_numbers = #tpu.dot_dimension_numbers<[1], [0], [0], [1], [0, 0, 1, 1], [], []>} : vector<64x16xbf16>, vector<16x16xbf16>, vector<64x16xf32> -> vector<64x16xf32>
    %21 = arith.addf %14, %20 : vector<64x16xf32>
    %c0_20 = arith.constant 0 : index
    %c2_21 = arith.constant 2 : index
    %c0_22 = arith.constant 0 : index
    %c0_23 = arith.constant 0 : index
    %22 = vector.load %arg1[%c0_20, %c2_21, %c0_22, %c0_23] : memref<1x12x12x16xbf16, #tpu.memory_space<vmem>>, vector<1x8x8x16xbf16>
    %23 = vector.shape_cast %22 : vector<1x8x8x16xbf16> to vector<8x8x16xbf16>
    %24 = vector.shape_cast %23 : vector<8x8x16xbf16> to vector<64x16xbf16>
    %c3 = arith.constant 3 : index
    %c0_24 = arith.constant 0 : index
    %c0_25 = arith.constant 0 : index
    %25 = vector.load %arg2[%c3, %c0_24, %c0_25] : memref<9x16x16xbf16, #tpu.memory_space<vmem>>, vector<1x16x16xbf16>
    %26 = vector.shape_cast %25 : vector<1x16x16xbf16> to vector<16x16xbf16>
    %cst_26 = arith.constant dense<0.000000e+00> : vector<64x16xf32>
    %27 = tpu.matmul %24, %26, %cst_26 {dimension_numbers = #tpu.dot_dimension_numbers<[1], [0], [0], [1], [0, 0, 1, 1], [], []>} : vector<64x16xbf16>, vector<16x16xbf16>, vector<64x16xf32> -> vector<64x16xf32>
    %28 = arith.addf %21, %27 : vector<64x16xf32>
    %c0_27 = arith.constant 0 : index
    %c2_28 = arith.constant 2 : index
    %c2_29 = arith.constant 2 : index
    %c0_30 = arith.constant 0 : index
    %29 = vector.load %arg1[%c0_27, %c2_28, %c2_29, %c0_30] : memref<1x12x12x16xbf16, #tpu.memory_space<vmem>>, vector<1x8x8x16xbf16>
    %30 = vector.shape_cast %29 : vector<1x8x8x16xbf16> to vector<8x8x16xbf16>
    %31 = vector.shape_cast %30 : vector<8x8x16xbf16> to vector<64x16xbf16>
    %c4_31 = arith.constant 4 : index
    %c0_32 = arith.constant 0 : index
    %c0_33 = arith.constant 0 : index
    %32 = vector.load %arg2[%c4_31, %c0_32, %c0_33] : memref<9x16x16xbf16, #tpu.memory_space<vmem>>, vector<1x16x16xbf16>
    %33 = vector.shape_cast %32 : vector<1x16x16xbf16> to vector<16x16xbf16>
    %cst_34 = arith.constant dense<0.000000e+00> : vector<64x16xf32>
    %34 = tpu.matmul %31, %33, %cst_34 {dimension_numbers = #tpu.dot_dimension_numbers<[1], [0], [0], [1], [0, 0, 1, 1], [], []>} : vector<64x16xbf16>, vector<16x16xbf16>, vector<64x16xf32> -> vector<64x16xf32>
    %35 = arith.addf %28, %34 : vector<64x16xf32>
    %c0_35 = arith.constant 0 : index
    %c2_36 = arith.constant 2 : index
    %c4_37 = arith.constant 4 : index
    %c0_38 = arith.constant 0 : index
    %36 = vector.load %arg1[%c0_35, %c2_36, %c4_37, %c0_38] : memref<1x12x12x16xbf16, #tpu.memory_space<vmem>>, vector<1x8x8x16xbf16>
    %37 = vector.shape_cast %36 : vector<1x8x8x16xbf16> to vector<8x8x16xbf16>
    %38 = vector.shape_cast %37 : vector<8x8x16xbf16> to vector<64x16xbf16>
    %c5 = arith.constant 5 : index
    %c0_39 = arith.constant 0 : index
    %c0_40 = arith.constant 0 : index
    %39 = vector.load %arg2[%c5, %c0_39, %c0_40] : memref<9x16x16xbf16, #tpu.memory_space<vmem>>, vector<1x16x16xbf16>
    %40 = vector.shape_cast %39 : vector<1x16x16xbf16> to vector<16x16xbf16>
    %cst_41 = arith.constant dense<0.000000e+00> : vector<64x16xf32>
    %41 = tpu.matmul %38, %40, %cst_41 {dimension_numbers = #tpu.dot_dimension_numbers<[1], [0], [0], [1], [0, 0, 1, 1], [], []>} : vector<64x16xbf16>, vector<16x16xbf16>, vector<64x16xf32> -> vector<64x16xf32>
    %42 = arith.addf %35, %41 : vector<64x16xf32>
    %c0_42 = arith.constant 0 : index
    %c4_43 = arith.constant 4 : index
    %c0_44 = arith.constant 0 : index
    %c0_45 = arith.constant 0 : index
    %43 = vector.load %arg1[%c0_42, %c4_43, %c0_44, %c0_45] : memref<1x12x12x16xbf16, #tpu.memory_space<vmem>>, vector<1x8x8x16xbf16>
    %44 = vector.shape_cast %43 : vector<1x8x8x16xbf16> to vector<8x8x16xbf16>
    %45 = vector.shape_cast %44 : vector<8x8x16xbf16> to vector<64x16xbf16>
    %c6 = arith.constant 6 : index
    %c0_46 = arith.constant 0 : index
    %c0_47 = arith.constant 0 : index
    %46 = vector.load %arg2[%c6, %c0_46, %c0_47] : memref<9x16x16xbf16, #tpu.memory_space<vmem>>, vector<1x16x16xbf16>
    %47 = vector.shape_cast %46 : vector<1x16x16xbf16> to vector<16x16xbf16>
    %cst_48 = arith.constant dense<0.000000e+00> : vector<64x16xf32>
    %48 = tpu.matmul %45, %47, %cst_48 {dimension_numbers = #tpu.dot_dimension_numbers<[1], [0], [0], [1], [0, 0, 1, 1], [], []>} : vector<64x16xbf16>, vector<16x16xbf16>, vector<64x16xf32> -> vector<64x16xf32>
    %49 = arith.addf %42, %48 : vector<64x16xf32>
    %c0_49 = arith.constant 0 : index
    %c4_50 = arith.constant 4 : index
    %c2_51 = arith.constant 2 : index
    %c0_52 = arith.constant 0 : index
    %50 = vector.load %arg1[%c0_49, %c4_50, %c2_51, %c0_52] : memref<1x12x12x16xbf16, #tpu.memory_space<vmem>>, vector<1x8x8x16xbf16>
    %51 = vector.shape_cast %50 : vector<1x8x8x16xbf16> to vector<8x8x16xbf16>
    %52 = vector.shape_cast %51 : vector<8x8x16xbf16> to vector<64x16xbf16>
    %c7 = arith.constant 7 : index
    %c0_53 = arith.constant 0 : index
    %c0_54 = arith.constant 0 : index
    %53 = vector.load %arg2[%c7, %c0_53, %c0_54] : memref<9x16x16xbf16, #tpu.memory_space<vmem>>, vector<1x16x16xbf16>
    %54 = vector.shape_cast %53 : vector<1x16x16xbf16> to vector<16x16xbf16>
    %cst_55 = arith.constant dense<0.000000e+00> : vector<64x16xf32>
    %55 = tpu.matmul %52, %54, %cst_55 {dimension_numbers = #tpu.dot_dimension_numbers<[1], [0], [0], [1], [0, 0, 1, 1], [], []>} : vector<64x16xbf16>, vector<16x16xbf16>, vector<64x16xf32> -> vector<64x16xf32>
    %56 = arith.addf %49, %55 : vector<64x16xf32>
    %c0_56 = arith.constant 0 : index
    %c4_57 = arith.constant 4 : index
    %c4_58 = arith.constant 4 : index
    %c0_59 = arith.constant 0 : index
    %57 = vector.load %arg1[%c0_56, %c4_57, %c4_58, %c0_59] : memref<1x12x12x16xbf16, #tpu.memory_space<vmem>>, vector<1x8x8x16xbf16>
    %58 = vector.shape_cast %57 : vector<1x8x8x16xbf16> to vector<8x8x16xbf16>
    %59 = vector.shape_cast %58 : vector<8x8x16xbf16> to vector<64x16xbf16>
    %c8 = arith.constant 8 : index
    %c0_60 = arith.constant 0 : index
    %c0_61 = arith.constant 0 : index
    %60 = vector.load %arg2[%c8, %c0_60, %c0_61] : memref<9x16x16xbf16, #tpu.memory_space<vmem>>, vector<1x16x16xbf16>
    %61 = vector.shape_cast %60 : vector<1x16x16xbf16> to vector<16x16xbf16>
    %cst_62 = arith.constant dense<0.000000e+00> : vector<64x16xf32>
    %62 = tpu.matmul %59, %61, %cst_62 {dimension_numbers = #tpu.dot_dimension_numbers<[1], [0], [0], [1], [0, 0, 1, 1], [], []>} : vector<64x16xbf16>, vector<16x16xbf16>, vector<64x16xf32> -> vector<64x16xf32>
    %63 = arith.addf %56, %62 : vector<64x16xf32>
    %c0_63 = arith.constant 0 : index
    %c0_64 = arith.constant 0 : index
    %64 = vector.load %arg3[%c0_63, %c0_64] : memref<1x16xf32, #tpu.memory_space<vmem>>, vector<1x16xf32>
    %65 = vector.broadcast %64 : vector<1x16xf32> to vector<64x16xf32>
    %66 = arith.mulf %63, %65 : vector<64x16xf32>
    %c0_65 = arith.constant 0 : index
    %c0_66 = arith.constant 0 : index
    %67 = vector.load %arg4[%c0_65, %c0_66] : memref<1x16xf32, #tpu.memory_space<vmem>>, vector<1x16xf32>
    %68 = vector.broadcast %67 : vector<1x16xf32> to vector<64x16xf32>
    %69 = arith.addf %66, %68 : vector<64x16xf32>
    %cst_67 = arith.constant 0.000000e+00 : f32
    %70 = vector.broadcast %cst_67 : f32 to vector<64x16xf32>
    %71 = arith.maximumf %69, %70 : vector<64x16xf32>
    %72 = vector.shape_cast %71 : vector<64x16xf32> to vector<8x8x16xf32>
    %73 = arith.truncf %72 : vector<8x8x16xf32> to vector<8x8x16xbf16>
    %c0_68 = arith.constant 0 : index
    %c0_69 = arith.constant 0 : index
    %c0_70 = arith.constant 0 : index
    %c0_71 = arith.constant 0 : index
    %74 = vector.load %arg5[%c0_68, %c0_69, %c0_70, %c0_71] : memref<1x8x8x16xbf16, #tpu.memory_space<vmem>>, vector<1x8x8x16xbf16>
    %75 = vector.shape_cast %74 : vector<1x8x8x16xbf16> to vector<8x8x16xbf16>
    %76 = vector.shape_cast %73 : vector<8x8x16xbf16> to vector<1x8x8x16xbf16>
    tpu.vector_store %arg5[%c0_68, %c0_69, %c0_70, %c0_71], %76 {strides = array<i32>} : memref<1x8x8x16xbf16, #tpu.memory_space<vmem>>, vector<1x8x8x16xbf16>,
    return
  }
  func.func @transform_0(%arg0: i32) -> (i32, i32, i32, i32) {
    %c0_i32 = arith.constant 0 : i32
    %c0_i32_0 = arith.constant 0 : i32
    %c0_i32_1 = arith.constant 0 : i32
    %c0_i32_2 = arith.constant 0 : i32
    return %arg0, %c0_i32, %c0_i32_0, %c0_i32_1 : i32, i32, i32, i32
  }
  func.func @transform_1(%arg0: i32) -> (i32, i32, i32) {
    %c0_i32 = arith.constant 0 : i32
    %c0_i32_0 = arith.constant 0 : i32
    %c0_i32_1 = arith.constant 0 : i32
    %c0_i32_2 = arith.constant 0 : i32
    return %c0_i32, %c0_i32_0, %c0_i32_1 : i32, i32, i32
  }
  func.func @transform_2(%arg0: i32) -> (i32, i32) {
    %c0_i32 = arith.constant 0 : i32
    %c0_i32_0 = arith.constant 0 : i32
    %c0_i32_1 = arith.constant 0 : i32
    return %c0_i32, %c0_i32_0 : i32, i32
  }
  func.func @transform_3(%arg0: i32) -> (i32, i32) {
    %c0_i32 = arith.constant 0 : i32
    %c0_i32_0 = arith.constant 0 : i32
    %c0_i32_1 = arith.constant 0 : i32
    return %c0_i32, %c0_i32_0 : i32, i32
  }
  func.func @transform_4(%arg0: i32) -> (i32, i32, i32, i32) {
    %c0_i32 = arith.constant 0 : i32
    %c0_i32_0 = arith.constant 0 : i32
    %c0_i32_1 = arith.constant 0 : i32
    %c0_i32_2 = arith.constant 0 : i32
    return %arg0, %c0_i32, %c0_i32_0, %c0_i32_1 : i32, i32, i32, i32
  }
}

</mosaic_0001>

<llo_original>
// kernel: fwd.7
$region0: #{fwd.7}
  #allocation0 [shape = 'u32[]', space=smem, size = 0x4, offset = 0x4, fixed_abs, tag = 'smem constant byte address 0x4 - core index']
  #allocation1 [shape = 'u32[144,128]{1,0:T(1,128)}', space=vmem, size = 0x12000, scoped, tag = 'internal scratch']
  %s0 = inlined_call_operand.vmem [shape: bf16[512,32], index: 0, kind: input, shape index: {}]
  %s1 = inlined_call_operand.vmem [shape: bf16[32,16], index: 1, kind: input, shape index: {}]
  %s2 = inlined_call_operand.vmem [shape: f32[1,16], index: 2, kind: input, shape index: {}]
  %s3 = inlined_call_operand.vmem [shape: f32[1,16], index: 3, kind: input, shape index: {}]
  %s4 = inlined_call_operand.vmem [shape: bf16[512,16], index: 4, kind: output, shape index: {}]
  %s5 = sld [smem:[#allocation0]]
  $region49: #{fwd.7} parent=0
    _
  %s7 = ssub.s32 1, %s5
  %s8 = scalar_select 0, %s7, %s5
  loop: start=0, step=1, limit=4
  $region2: #{fwd.7} parent=0 // loop_pre_header
    _
  $region3: #{fwd.7} parent=0 // loop_header
    %s10 = sphi 0, %s14
    %p11 = scmp.ge.s32.totalorder %s10, 4
    %s17 = sphi 0, %s29
    %s18 = sphi 0, %s25
    %s19 = sphi 0, %s17
    %s20 = sphi 0, %s18
    %s21 = sphi 0, %s19
    %s22 = sphi 0, %s20
    %s32 = sphi 0, %s34
    %s35 = sphi 0, %s32
    %s36 = sphi 0, %s35
    %s52 = sphi 0, %s36
    %s58 = sphi 0, %s60
    %s61 = sphi 0, %s58
    %s62 = sphi 0, %s61
    %s78 = sphi 0, %s62
    %s84 = sphi 0, %s86
    %s87 = sphi 0, %s84
    %s88 = sphi 0, %s87
    %s104 = sphi 0, %s88
    %s110 = sphi 0, %s112
    %s113 = sphi 0, %s110
    %s114 = sphi 0, %s113
    %s130 = sphi 0, %s114
    %s138 = sphi 0, %s140
    %s141 = sphi 0, %s138
    %s142 = sphi 0, %s141
    %s158 = sphi 0, %s142
  $region4: #{fwd.7} parent=0 // loop_header_branch
    %13 = sbr.rel (%p11) target = $region8
  $region5: #{fwd.7} parent=0 // loop_body
    %s15 = ssub.s32 %s10, 1
    %s16 = ssub.s32 %s10, 2
    %s23 = sadd.s32 1, %s18
    %p24 = scmp.ge.s32.totalorder %s23, 1
    %s25 = scalar_select %p24, 0, %s23
    %s26 = sadd.s32 1, %s17
    %s27 = scalar_select %p24, %s26, %s17
    %p28 = scmp.ge.s32.totalorder %s27, 2
    %s29 = scalar_select %p28, 0, %s27
    %s30 = ssub.s32 %s17, %s29
    %p31 = scmp.eq.s32.totalorder %s30, 0
    %s33 = sadd.s32 %s32, 1
    %s34 = scalar_select %p31, %s32, %s33
    %p37 = pneg %p31
    %p38 = scmp.eq.s32.totalorder %s10, 1
    %p39 = por %p37, %p38
    %p40 = scmp.ne.s32.totalorder %s32, %s35
    %p41 = scmp.eq.s32.totalorder %s10, 0
    %p42 = por %p40, %p41
    %p43 = scmp.ne.s32.totalorder %s32, %s35
    %p44 = scmp.eq.s32.totalorder %s15, 1
    %p45 = por %p43, %p44
    %p46 = scmp.ne.s32.totalorder %s35, %s36
    %p47 = scmp.eq.s32.totalorder %s15, 0
    %p48 = por %p46, %p47
    %p49 = scmp.ne.s32.totalorder %s35, %s36
    %p50 = scmp.eq.s32.totalorder %s16, 1
    %p51 = por %p49, %p50
    %p53 = scmp.ne.s32.totalorder %s36, %s52
    %p54 = scmp.eq.s32.totalorder %s16, 0
    %p55 = por %p53, %p54
    %s56 = ssub.s32 %s18, %s25
    %p57 = scmp.eq.s32.totalorder %s56, 0
    %s59 = sadd.s32 %s58, 1
    %s60 = scalar_select %p57, %s58, %s59
    %p63 = pneg %p57
    %p64 = scmp.eq.s32.totalorder %s10, 1
    %p65 = por %p63, %p64
    %p66 = scmp.ne.s32.totalorder %s58, %s61
    %p67 = scmp.eq.s32.totalorder %s10, 0
    %p68 = por %p66, %p67
    %p69 = scmp.ne.s32.totalorder %s58, %s61
    %p70 = scmp.eq.s32.totalorder %s15, 1
    %p71 = por %p69, %p70
    %p72 = scmp.ne.s32.totalorder %s61, %s62
    %p73 = scmp.eq.s32.totalorder %s15, 0
    %p74 = por %p72, %p73
    %p75 = scmp.ne.s32.totalorder %s61, %s62
    %p76 = scmp.eq.s32.totalorder %s16, 1
    %p77 = por %p75, %p76
    %p79 = scmp.ne.s32.totalorder %s62, %s78
    %p80 = scmp.eq.s32.totalorder %s16, 0
    %p81 = por %p79, %p80
    %s82 = ssub.s32 %s18, %s25
    %p83 = scmp.eq.s32.totalorder %s82, 0
    %s85 = sadd.s32 %s84, 1
    %s86 = scalar_select %p83, %s84, %s85
    %p89 = pneg %p83
    %p90 = scmp.eq.s32.totalorder %s10, 1
    %p91 = por %p89, %p90
    %p92 = scmp.ne.s32.totalorder %s84, %s87
    %p93 = scmp.eq.s32.totalorder %s10, 0
    %p94 = por %p92, %p93
    %p95 = scmp.ne.s32.totalorder %s84, %s87
    %p96 = scmp.eq.s32.totalorder %s15, 1
    %p97 = por %p95, %p96
    %p98 = scmp.ne.s32.totalorder %s87, %s88
    %p99 = scmp.eq.s32.totalorder %s15, 0
    %p100 = por %p98, %p99
    %p101 = scmp.ne.s32.totalorder %s87, %s88
    %p102 = scmp.eq.s32.totalorder %s16, 1
    %p103 = por %p101, %p102
    %p105 = scmp.ne.s32.totalorder %s88, %s104
    %p106 = scmp.eq.s32.totalorder %s16, 0
    %p107 = por %p105, %p106
    %s108 = ssub.s32 %s18, %s25
    %p109 = scmp.eq.s32.totalorder %s108, 0
    %s111 = sadd.s32 %s110, 1
    %s112 = scalar_select %p109, %s110, %s111
    %p115 = pneg %p109
    %p116 = scmp.eq.s32.totalorder %s10, 1
    %p117 = por %p115, %p116
    %p118 = scmp.ne.s32.totalorder %s110, %s113
    %p119 = scmp.eq.s32.totalorder %s10, 0
    %p120 = por %p118, %p119
    %p121 = scmp.ne.s32.totalorder %s110, %s113
    %p122 = scmp.eq.s32.totalorder %s15, 1
    %p123 = por %p121, %p122
    %p124 = scmp.ne.s32.totalorder %s113, %s114
    %p125 = scmp.eq.s32.totalorder %s15, 0
    %p126 = por %p124, %p125
    %p127 = scmp.ne.s32.totalorder %s113, %s114
    %p128 = scmp.eq.s32.totalorder %s16, 1
    %p129 = por %p127, %p128
    %p131 = scmp.ne.s32.totalorder %s114, %s130
    %p132 = scmp.eq.s32.totalorder %s16, 0
    %p133 = por %p131, %p132
    %s134 = ssub.s32 %s17, %s29
    %s135 = ssub.s32 %s18, %s25
    %s136 = sor.u32 %s134, %s135
    %p137 = scmp.eq.s32.totalorder %s136, 0
    %s139 = sadd.s32 %s138, 1
    %s140 = scalar_select %p137, %s138, %s139
    %p143 = pneg %p137
    %p144 = scmp.eq.s32.totalorder %s10, 1
    %p145 = por %p143, %p144
    %p146 = scmp.ne.s32.totalorder %s138, %s141
    %p147 = scmp.eq.s32.totalorder %s10, 0
    %p148 = por %p146, %p147
    %p149 = scmp.ne.s32.totalorder %s138, %s141
    %p150 = scmp.eq.s32.totalorder %s15, 1
    %p151 = por %p149, %p150
    %p152 = scmp.ne.s32.totalorder %s141, %s142
    %p153 = scmp.eq.s32.totalorder %s15, 0
    %p154 = por %p152, %p153
    %p155 = scmp.ne.s32.totalorder %s141, %s142
    %p156 = scmp.eq.s32.totalorder %s16, 1
    %p157 = por %p155, %p156
    %p159 = scmp.ne.s32.totalorder %s142, %s158
    %p160 = scmp.eq.s32.totalorder %s16, 0
    %p161 = por %p159, %p160
    %p162 = scmp.le.s32.totalorder 1, %s10
    %p163 = scmp.lt.s32.totalorder %s10, 3
    %p164 = pnand %p162, %p163
    %p165 = pneg %p164
    // Predicated region
    $region9: #{fwd.7} parent=5 // pred_check
      _
    $region10: #{fwd.7} parent=5 // pred_check_branch
      %167 = sbr.rel (%p164) target = $region12
    $region11: #{fwd.7} parent=5 // pred_region
      %s168 = ssub.s32 %s10, 1
      // Predicated region
      $region13: #{fwd.7} parent=11 // pred_check
        %p169 = pneg %p74
      $region14: #{fwd.7} parent=11 // pred_check_branch
        %171 = sbr.rel (%p169) target = $region16
      $region15: #{fwd.7} parent=11 // pred_region
        %p172 = scmp.lt.s32.totalorder %s20, 0
        %s173 = scalar_select %p172, %s20, 0
        %s174 = smul.addr %s173, 4
        %s175 = scalar_lea.vmem %s1, %s174
      $region16: #{fwd.7} parent=11 // pred_fallthru
        _
      // Predicated region
      $region17: #{fwd.7} parent=11 // pred_check
        %p176 = pneg %p100
      $region18: #{fwd.7} parent=11 // pred_check_branch
        %178 = sbr.rel (%p176) target = $region20
      $region19: #{fwd.7} parent=11 // pred_region
        %p179 = scmp.lt.s32.totalorder %s20, 0
        %s180 = scalar_select %p179, %s20, 0
        %s181 = scalar_lea.vmem %s2, %s180
      $region20: #{fwd.7} parent=11 // pred_fallthru
        _
      // Predicated region
      $region21: #{fwd.7} parent=11 // pred_check
        %p182 = pneg %p126
      $region22: #{fwd.7} parent=11 // pred_check_branch
        %184 = sbr.rel (%p182) target = $region24
      $region23: #{fwd.7} parent=11 // pred_region
        %p185 = scmp.lt.s32.totalorder %s20, 0
        %s186 = scalar_select %p185, %s20, 0
        %s187 = scalar_lea.vmem %s3, %s186
      $region24: #{fwd.7} parent=11 // pred_fallthru
        _
    $region12: #{fwd.7} parent=5 // pred_fallthru
      _
    %p188 = scmp.lt.s32.totalorder %s10, 2
    // Predicated region
    $region25: #{fwd.7} parent=5 // pred_check
      %p189 = pneg %p188
    $region26: #{fwd.7} parent=5 // pred_check_branch
      %191 = sbr.rel (%p189) target = $region28
    $region27: #{fwd.7} parent=5 // pred_region
      // Predicated region
      $region29: #{fwd.7} parent=27 // pred_check
        %p192 = pneg %p42
      $region30: #{fwd.7} parent=27 // pred_check_branch
        %194 = sbr.rel (%p192) target = $region32
      $region31: #{fwd.7} parent=27 // pred_region
        %s195 = smul.u32 32, %s17
        %p196 = scmp.lt.s32.totalorder %s195, 63
        %s197 = scalar_select %p196, %s195, 63
        %s198 = smul.addr %s197, 4
        %s199 = scalar_lea.vmem %s0, %s198
        %s200 = smul.u32 32, %s17
      $region32: #{fwd.7} parent=27 // pred_fallthru
        _
    $region28: #{fwd.7} parent=5 // pred_fallthru
      _
    %p201 = scmp.le.s32.totalorder 1, %s10
    %p202 = scmp.lt.s32.totalorder %s10, 3
    %p203 = pnand %p201, %p202
    %p204 = pneg %p203
    // Predicated region
    $region33: #{fwd.7} parent=5 // pred_check
      _
    $region34: #{fwd.7} parent=5 // pred_check_branch
      %206 = sbr.rel (%p203) target = $region36
    $region35: #{fwd.7} parent=5 // pred_region
      %s207 = ssub.s32 %s10, 1
      %s208 = smul.u32 32, %s19
      %p209 = scmp.lt.s32.totalorder %s208, 63
      %s210 = scalar_select %p209, %s208, 63
      %s211 = smul.addr %s210, 4
      %s212 = scalar_lea.vmem %s0, %s211
      %p213 = pneg %p48
      %p214 = pneg %p45
      %p215 = scmp.lt.s32.totalorder %s20, 0
      %s216 = scalar_select %p215, %s20, 0
      %s217 = smul.addr %s216, 4
      %s218 = scalar_lea.vmem %s1, %s217
      %p219 = pneg %p74
      %p220 = pneg %p71
      %p221 = scmp.lt.s32.totalorder %s20, 0
      %s222 = scalar_select %p221, %s20, 0
      %s223 = scalar_lea.vmem %s2, %s222
      %p224 = pneg %p100
      %p225 = pneg %p97
      %p226 = scmp.lt.s32.totalorder %s20, 0
      %s227 = scalar_select %p226, %s20, 0
      %s228 = scalar_lea.vmem %s3, %s227
      %p229 = pneg %p126
      %p230 = pneg %p123
      %p231 = pneg %p154
      %p232 = pneg %p151
      %s233 = smul.u32 32, %s19
      %p234 = scmp.lt.s32.totalorder %s233, 63
      %s235 = scalar_select %p234, %s233, 63
      %p236 = scmp.lt.s32.totalorder %s20, 0
      %s237 = scalar_select %p236, %s20, 0
      %s238 = sadd.s32 %s237, %s235
      %s239 = smul.addr %s238, 4
      %s240 = scalar_lea.vmem %s4, %s239
      %s241 = smul.u32 32, %s19
      %p242 = scmp.lt.s32.totalorder %s241, 63
      %s243 = scalar_select %p242, %s241, 63
      %s244 = smul.addr %s243, 4
      %s245 = scalar_lea.vmem %s0, %s244
      %s246 = smul.u32 32, %s19
      %p247 = scmp.lt.s32.totalorder %s20, 0
      %s248 = scalar_select %p247, %s20, 0
      %s249 = smul.addr %s248, 4
      %s250 = scalar_lea.vmem %s1, %s249
      %p251 = scmp.lt.s32.totalorder %s20, 0
      %s252 = scalar_select %p251, %s20, 0
      %s253 = scalar_lea.vmem %s2, %s252
      %p254 = scmp.lt.s32.totalorder %s20, 0
      %s255 = scalar_select %p254, %s20, 0
      %s256 = scalar_lea.vmem %s3, %s255
      %s257 = smul.u32 32, %s19
      %p258 = scmp.lt.s32.totalorder %s257, 63
      %s259 = scalar_select %p258, %s257, 63
      %p260 = scmp.lt.s32.totalorder %s20, 0
      %s261 = scalar_select %p260, %s20, 0
      %s262 = sadd.s32 %s261, %s259
      %s263 = smul.addr %s262, 4
      %s264 = scalar_lea.vmem %s4, %s263
      %s265 = smul.u32 32, %s19
      %v267 = vld [vmem:[%s245] sm:$0xf]
      %v268 = vld [vmem:[%s245 + $0x4] sm:$0xf]
      %v269 = vld [vmem:[%s245 + $0x8] sm:$0xf]
      %v270 = vld [vmem:[%s245 + $0xc] sm:$0xf]
      %v271 = vld [vmem:[%s245 + $0x10] sm:$0xf]
      %v272 = vld [vmem:[%s245 + $0x14] sm:$0xf]
      %v273 = vld [vmem:[%s245 + $0x18] sm:$0xf]
      %v274 = vld [vmem:[%s245 + $0x1c] sm:$0xf]
      %v275 = vld [vmem:[%s245 + $0x20] sm:$0xf]
      %v276 = vld [vmem:[%s245 + $0x24] sm:$0xf]
      %v277 = vld [vmem:[%s245 + $0x28] sm:$0xf]
      %v278 = vld [vmem:[%s245 + $0x2c] sm:$0xf]
      %v279 = vld [vmem:[%s245 + $0x30] sm:$0xf]
      %v280 = vld [vmem:[%s245 + $0x34] sm:$0xf]
      %v281 = vld [vmem:[%s245 + $0x38] sm:$0xf]
      %v282 = vld [vmem:[%s245 + $0x3c] sm:$0xf]
      %v283 = vld [vmem:[%s245 + $0x40] sm:$0xf]
      %v284 = vld [vmem:[%s245 + $0x44] sm:$0xf]
      %v285 = vld [vmem:[%s245 + $0x48] sm:$0xf]
      %v286 = vld [vmem:[%s245 + $0x4c] sm:$0xf]
      %v287 = vld [vmem:[%s245 + $0x50] sm:$0xf]
      %v288 = vld [vmem:[%s245 + $0x54] sm:$0xf]
      %v289 = vld [vmem:[%s245 + $0x58] sm:$0xf]
      %v290 = vld [vmem:[%s245 + $0x5c] sm:$0xf]
      %v291 = vld [vmem:[%s245 + $0x60] sm:$0xf]
      %v292 = vld [vmem:[%s245 + $0x64] sm:$0xf]
      %v293 = vld [vmem:[%s245 + $0x68] sm:$0xf]
      %v294 = vld [vmem:[%s245 + $0x6c] sm:$0xf]
      %v295 = vld [vmem:[%s245 + $0x70] sm:$0xf]
      %v296 = vld [vmem:[%s245 + $0x74] sm:$0xf]
      %v297 = vld [vmem:[%s245 + $0x78] sm:$0xf]
      %v298 = vld [vmem:[%s245 + $0x7c] sm:$0xf]
      %v299 = vld [vmem:[%s250] sm:$0xf]
      %v300 = vld [vmem:[%s250 + $0x4] sm:$0xf]
      %v301 = vld [vmem:[%s250 + $0x8] sm:$0xf]
      %v302 = vld [vmem:[%s250 + $0xc] sm:$0xf]
      %v335 = vunpack.c.l.b16 %v267
      %v336 = vunpack.c.l.b16 %v268
      %v337 = vunpack.c.l.b16 %v269
      %v338 = vunpack.c.l.b16 %v270
      %v339 = vunpack.c.l.b16 %v271
      %v340 = vunpack.c.l.b16 %v272
      %v341 = vunpack.c.l.b16 %v273
      %v342 = vunpack.c.l.b16 %v274
      %v343 = vunpack.c.l.b16 %v275
      %v344 = vunpack.c.l.b16 %v276
      %v345 = vunpack.c.l.b16 %v277
      %v346 = vunpack.c.l.b16 %v278
      %v347 = vunpack.c.l.b16 %v279
      %v348 = vunpack.c.l.b16 %v280
      %v349 = vunpack.c.l.b16 %v281
      %v350 = vunpack.c.l.b16 %v282
      %v351 = vunpack.c.l.b16 %v283
      %v352 = vunpack.c.l.b16 %v284
      %v353 = vunpack.c.l.b16 %v285
      %v354 = vunpack.c.l.b16 %v286
      %v355 = vunpack.c.l.b16 %v287
      %v356 = vunpack.c.l.b16 %v288
      %v357 = vunpack.c.l.b16 %v289
      %v358 = vunpack.c.l.b16 %v290
      %v359 = vunpack.c.l.b16 %v291
      %v360 = vunpack.c.l.b16 %v292
      %v361 = vunpack.c.l.b16 %v293
      %v362 = vunpack.c.l.b16 %v294
      %v363 = vunpack.c.l.b16 %v295
      %v364 = vunpack.c.l.b16 %v296
      %v365 = vunpack.c.l.b16 %v297
      %v366 = vunpack.c.l.b16 %v298
      %v367 = vpack.c.b16 %v336, %v335
      %v368 = vpack.c.b16 %v338, %v337
      %v369 = vpack.c.b16 %v340, %v339
      %v370 = vpack.c.b16 %v342, %v341
      %v371 = vpack.c.b16 %v344, %v343
      %v372 = vpack.c.b16 %v346, %v345
      %v373 = vpack.c.b16 %v348, %v347
      %v374 = vpack.c.b16 %v350, %v349
      %v375 = vpack.c.b16 %v352, %v351
      %v376 = vpack.c.b16 %v354, %v353
      %v377 = vpack.c.b16 %v356, %v355
      %v378 = vpack.c.b16 %v358, %v357
      %v379 = vpack.c.b16 %v360, %v359
      %v380 = vpack.c.b16 %v362, %v361
      %v381 = vpack.c.b16 %v364, %v363
      %v382 = vpack.c.b16 %v366, %v365
      %v387 = vunpack.c.l.b16 %v299
      %v388 = vunpack.c.l.b16 %v300
      %v389 = vunpack.c.l.b16 %v301
      %v390 = vunpack.c.l.b16 %v302
      %v391 = vpack.c.b16 %v388, %v387
      %v392 = vpack.c.b16 %v390, %v389
      %vm395 = vcmask 261120
      %v397 = vsel %vm395, %v367, 0
      %v400 = vsel %vm395, %v368, 0
      %v403 = vsel %vm395, %v369, 0
      %v406 = vsel %vm395, %v370, 0
      %v409 = vsel %vm395, %v371, 0
      %v412 = vsel %vm395, %v372, 0
      %v415 = vsel %vm395, %v373, 0
      %v418 = vsel %vm395, %v374, 0
      %v421 = vsel %vm395, %v375, 0
      %v424 = vsel %vm395, %v376, 0
      %v427 = vsel %vm395, %v377, 0
      %v430 = vsel %vm395, %v378, 0
      %v433 = vsel %vm395, %v379, 0
      %v436 = vsel %vm395, %v380, 0
      %v439 = vsel %vm395, %v381, 0
      %v442 = vsel %vm395, %v382, 0
      %444 = vmatprep.subr.bf16.mxu0 0
      %445 = vmatpush1.bf16.msra.mxu0 0
      %446 = vmatprep.subr.bf16.mxu0 0
      %447 = vmatpush1.bf16.msra.mxu0 0
      %448 = vmatprep.subr.bf16.mxu0 0
      %449 = vmatpush1.bf16.msra.mxu0 0
      %450 = vmatprep.subr.bf16.mxu0 0
      %451 = vmatpush1.bf16.msra.mxu0 0
      %452 = vmatprep.subr.bf16.mxu0 0
      %453 = vmatpush1.bf16.msra.mxu0 0
      %454 = vmatprep.subr.bf16.mxu0 0
      %455 = vmatpush1.bf16.msra.mxu0 0
      %456 = vmatprep.subr.bf16.mxu0 0
      %457 = vmatpush1.bf16.msra.mxu0 %v392
      %458 = vmatprep.subr.bf16.mxu0 0
      %459 = vmatpush1.bf16.msra.mxu0 %v391
      %460 = vmatprep.subr.bf16.mxu0 0
      %461 = vmatpush2.bf16.msra.mxu0 0
      %462 = vmatprep.subr.bf16.mxu0 0
      %463 = vmatpush2.bf16.msra.mxu0 0
      %464 = vmatprep.subr.bf16.mxu0 0
      %465 = vmatpush2.bf16.msra.mxu0 0
      %466 = vmatprep.subr.bf16.mxu0 0
      %467 = vmatpush2.bf16.msra.mxu0 0
      %468 = vmatprep.subr.bf16.mxu0 0
      %469 = vmatpush2.bf16.msra.mxu0 0
      %470 = vmatprep.subr.bf16.mxu0 0
      %471 = vmatpush2.bf16.msra.mxu0 0
      %472 = vmatprep.subr.bf16.mxu0 0
      %473 = vmatpush2.bf16.msra.mxu0 0
      %474 = vmatprep.subr.bf16.mxu0 0
      %475 = vmatpush2.bf16.msra.mxu0 0
      %476 = vmatprep.mubr.bf16.mxu0 0
      %477 = vmatmul.mubr.bf16.gmra.mxu0 %v397
      %v478 = vpop.f32.mrf.mxu0
      %v479 = vadd.f32 0.0, %v478
      %v480 = vpop.f32.mrf.mxu0
      %v481 = vpop.f32.mrf.mxu0
      %v482 = vadd.f32 0.0, %v481
      %v483 = vpop.f32.mrf.mxu0
      %484 = vmatprep.mubr.bf16.mxu0 0
      %485 = vmatmul.mubr.bf16.gmra.mxu0 %v400
      %v486 = vpop.f32.mrf.mxu0
      %v487 = vadd.f32 0.0, %v486
      %v488 = vpop.f32.mrf.mxu0
      %v489 = vpop.f32.mrf.mxu0
      %v490 = vadd.f32 0.0, %v489
      %v491 = vpop.f32.mrf.mxu0
      %492 = vmatprep.mubr.bf16.mxu0 0
      %493 = vmatmul.mubr.bf16.gmra.mxu0 %v403
      %v494 = vpop.f32.mrf.mxu0
      %v495 = vadd.f32 0.0, %v494
      %v496 = vpop.f32.mrf.mxu0
      %v497 = vpop.f32.mrf.mxu0
      %v498 = vadd.f32 0.0, %v497
      %v499 = vpop.f32.mrf.mxu0
      %500 = vmatprep.mubr.bf16.mxu0 0
      %501 = vmatmul.mubr.bf16.gmra.mxu0 %v406
      %v502 = vpop.f32.mrf.mxu0
      %v503 = vadd.f32 0.0, %v502
      %v504 = vpop.f32.mrf.mxu0
      %v505 = vpop.f32.mrf.mxu0
      %v506 = vadd.f32 0.0, %v505
      %v507 = vpop.f32.mrf.mxu0
      %508 = vmatprep.mubr.bf16.mxu0 0
      %509 = vmatmul.mubr.bf16.gmra.mxu0 %v409
      %v510 = vpop.f32.mrf.mxu0
      %v511 = vadd.f32 0.0, %v510
      %v512 = vpop.f32.mrf.mxu0
      %v513 = vpop.f32.mrf.mxu0
      %v514 = vadd.f32 0.0, %v513
      %v515 = vpop.f32.mrf.mxu0
      %516 = vmatprep.mubr.bf16.mxu0 0
      %517 = vmatmul.mubr.bf16.gmra.mxu0 %v412
      %v518 = vpop.f32.mrf.mxu0
      %v519 = vadd.f32 0.0, %v518
      %v520 = vpop.f32.mrf.mxu0
      %v521 = vpop.f32.mrf.mxu0
      %v522 = vadd.f32 0.0, %v521
      %v523 = vpop.f32.mrf.mxu0
      %524 = vmatprep.mubr.bf16.mxu0 0
      %525 = vmatmul.mubr.bf16.gmra.mxu0 %v415
      %v526 = vpop.f32.mrf.mxu0
      %v527 = vadd.f32 0.0, %v526
      %v528 = vpop.f32.mrf.mxu0
      %v529 = vpop.f32.mrf.mxu0
      %v530 = vadd.f32 0.0, %v529
      %v531 = vpop.f32.mrf.mxu0
      %532 = vmatprep.mubr.bf16.mxu0 0
      %533 = vmatmul.mubr.bf16.gmra.mxu0 %v418
      %v534 = vpop.f32.mrf.mxu0
      %v535 = vadd.f32 0.0, %v534
      %v536 = vpop.f32.mrf.mxu0
      %v537 = vpop.f32.mrf.mxu0
      %v538 = vadd.f32 0.0, %v537
      %v539 = vpop.f32.mrf.mxu0
      %540 = vmatprep.mubr.bf16.mxu0 0
      %541 = vmatmul.mubr.bf16.gmra.mxu0 %v421
      %v542 = vpop.f32.mrf.mxu0
      %v543 = vadd.f32 0.0, %v542
      %v544 = vpop.f32.mrf.mxu0
      %v545 = vpop.f32.mrf.mxu0
      %v546 = vadd.f32 0.0, %v545
      %v547 = vpop.f32.mrf.mxu0
      %548 = vmatprep.mubr.bf16.mxu0 0
      %549 = vmatmul.mubr.bf16.gmra.mxu0 %v424
      %v550 = vpop.f32.mrf.mxu0
      %v551 = vadd.f32 0.0, %v550
      %v552 = vpop.f32.mrf.mxu0
      %v553 = vpop.f32.mrf.mxu0
      %v554 = vadd.f32 0.0, %v553
      %v555 = vpop.f32.mrf.mxu0
      %556 = vmatprep.mubr.bf16.mxu0 0
      %557 = vmatmul.mubr.bf16.gmra.mxu0 %v427
      %v558 = vpop.f32.mrf.mxu0
      %v559 = vadd.f32 0.0, %v558
      %v560 = vpop.f32.mrf.mxu0
      %v561 = vpop.f32.mrf.mxu0
      %v562 = vadd.f32 0.0, %v561
      %v563 = vpop.f32.mrf.mxu0
      %564 = vmatprep.mubr.bf16.mxu0 0
      %565 = vmatmul.mubr.bf16.gmra.mxu0 %v430
      %v566 = vpop.f32.mrf.mxu0
      %v567 = vadd.f32 0.0, %v566
      %v568 = vpop.f32.mrf.mxu0
      %v569 = vpop.f32.mrf.mxu0
      %v570 = vadd.f32 0.0, %v569
      %v571 = vpop.f32.mrf.mxu0
      %572 = vmatprep.mubr.bf16.mxu0 0
      %573 = vmatmul.mubr.bf16.gmra.mxu0 %v433
      %v574 = vpop.f32.mrf.mxu0
      %v575 = vadd.f32 0.0, %v574
      %v576 = vpop.f32.mrf.mxu0
      %v577 = vpop.f32.mrf.mxu0
      %v578 = vadd.f32 0.0, %v577
      %v579 = vpop.f32.mrf.mxu0
      %580 = vmatprep.mubr.bf16.mxu0 0
      %581 = vmatmul.mubr.bf16.gmra.mxu0 %v436
      %v582 = vpop.f32.mrf.mxu0
      %v583 = vadd.f32 0.0, %v582
      %v584 = vpop.f32.mrf.mxu0
      %v585 = vpop.f32.mrf.mxu0
      %v586 = vadd.f32 0.0, %v585
      %v587 = vpop.f32.mrf.mxu0
      %588 = vmatprep.mubr.bf16.mxu0 0
      %589 = vmatmul.mubr.bf16.gmra.mxu0 %v439
      %v590 = vpop.f32.mrf.mxu0
      %v591 = vadd.f32 0.0, %v590
      %v592 = vpop.f32.mrf.mxu0
      %v593 = vpop.f32.mrf.mxu0
      %v594 = vadd.f32 0.0, %v593
      %v595 = vpop.f32.mrf.mxu0
      %596 = vmatprep.mubr.bf16.mxu0 0
      %597 = vmatmul.mubr.bf16.gmra.mxu0 %v442
      %v598 = vpop.f32.mrf.mxu0
      %v599 = vadd.f32 0.0, %v598
      %v600 = vpop.f32.mrf.mxu0
      %v601 = vpop.f32.mrf.mxu0
      %v602 = vadd.f32 0.0, %v601
      %v603 = vpop.f32.mrf.mxu0
      %604 = vdwg.mxu0
      %v605 = vld [vmem:[%s253] sm:$0x1]
      %v607 = vlaneseq
      %v608 = vshrl.u32 %v607, 7
      %v609 = vsub.s32 0, %v608
      %v610 = vrot.slane %v605, %v609
      %v612 = vmul.f32 %v479, %v610
      %v613 = vmul.f32 %v482, %v610
      %v614 = vmul.f32 %v487, %v610
      %v615 = vmul.f32 %v490, %v610
      %v616 = vmul.f32 %v495, %v610
      %v617 = vmul.f32 %v498, %v610
      %v618 = vmul.f32 %v503, %v610
      %v619 = vmul.f32 %v506, %v610
      %v620 = vmul.f32 %v511, %v610
      %v621 = vmul.f32 %v514, %v610
      %v622 = vmul.f32 %v519, %v610
      %v623 = vmul.f32 %v522, %v610
      %v624 = vmul.f32 %v527, %v610
      %v625 = vmul.f32 %v530, %v610
      %v626 = vmul.f32 %v535, %v610
      %v627 = vmul.f32 %v538, %v610
      %v628 = vmul.f32 %v543, %v610
      %v629 = vmul.f32 %v546, %v610
      %v630 = vmul.f32 %v551, %v610
      %v631 = vmul.f32 %v554, %v610
      %v632 = vmul.f32 %v559, %v610
      %v633 = vmul.f32 %v562, %v610
      %v634 = vmul.f32 %v567, %v610
      %v635 = vmul.f32 %v570, %v610
      %v636 = vmul.f32 %v575, %v610
      %v637 = vmul.f32 %v578, %v610
      %v638 = vmul.f32 %v583, %v610
      %v639 = vmul.f32 %v586, %v610
      %v640 = vmul.f32 %v591, %v610
      %v641 = vmul.f32 %v594, %v610
      %v642 = vmul.f32 %v599, %v610
      %v643 = vmul.f32 %v602, %v610
      %v644 = vld [vmem:[%s256] sm:$0x1]
      %v646 = vlaneseq
      %v647 = vshrl.u32 %v646, 7
      %v648 = vsub.s32 0, %v647
      %v649 = vrot.slane %v644, %v648
      %v651 = vadd.f32 %v612, %v649
      %v652 = vadd.f32 %v613, %v649
      %v653 = vadd.f32 %v614, %v649
      %v654 = vadd.f32 %v615, %v649
      %v655 = vadd.f32 %v616, %v649
      %v656 = vadd.f32 %v617, %v649
      %v657 = vadd.f32 %v618, %v649
      %v658 = vadd.f32 %v619, %v649
      %v659 = vadd.f32 %v620, %v649
      %v660 = vadd.f32 %v621, %v649
      %v661 = vadd.f32 %v622, %v649
      %v662 = vadd.f32 %v623, %v649
      %v663 = vadd.f32 %v624, %v649
      %v664 = vadd.f32 %v625, %v649
      %v665 = vadd.f32 %v626, %v649
      %v666 = vadd.f32 %v627, %v649
      %v667 = vadd.f32 %v628, %v649
      %v668 = vadd.f32 %v629, %v649
      %v669 = vadd.f32 %v630, %v649
      %v670 = vadd.f32 %v631, %v649
      %v671 = vadd.f32 %v632, %v649
      %v672 = vadd.f32 %v633, %v649
      %v673 = vadd.f32 %v634, %v649
      %v674 = vadd.f32 %v635, %v649
      %v675 = vadd.f32 %v636, %v649
      %v676 = vadd.f32 %v637, %v649
      %v677 = vadd.f32 %v638, %v649
      %v678 = vadd.f32 %v639, %v649
      %v679 = vadd.f32 %v640, %v649
      %v680 = vadd.f32 %v641, %v649
      %v681 = vadd.f32 %v642, %v649
      %v682 = vadd.f32 %v643, %v649
      %v683 = vmax.f32 %v651, 0.0
      %v684 = vmax.f32 %v652, 0.0
      %v685 = vmax.f32 %v653, 0.0
      %v686 = vmax.f32 %v654, 0.0
      %v687 = vmax.f32 %v655, 0.0
      %v688 = vmax.f32 %v656, 0.0
      %v689 = vmax.f32 %v657, 0.0
      %v690 = vmax.f32 %v658, 0.0
      %v691 = vmax.f32 %v659, 0.0
      %v692 = vmax.f32 %v660, 0.0
      %v693 = vmax.f32 %v661, 0.0
      %v694 = vmax.f32 %v662, 0.0
      %v695 = vmax.f32 %v663, 0.0
      %v696 = vmax.f32 %v664, 0.0
      %v697 = vmax.f32 %v665, 0.0
      %v698 = vmax.f32 %v666, 0.0
      %v699 = vmax.f32 %v667, 0.0
      %v700 = vmax.f32 %v668, 0.0
      %v701 = vmax.f32 %v669, 0.0
      %v702 = vmax.f32 %v670, 0.0
      %v703 = vmax.f32 %v671, 0.0
      %v704 = vmax.f32 %v672, 0.0
      %v705 = vmax.f32 %v673, 0.0
      %v706 = vmax.f32 %v674, 0.0
      %v707 = vmax.f32 %v675, 0.0
      %v708 = vmax.f32 %v676, 0.0
      %v709 = vmax.f32 %v677, 0.0
      %v710 = vmax.f32 %v678, 0.0
      %v711 = vmax.f32 %v679, 0.0
      %v712 = vmax.f32 %v680, 0.0
      %v713 = vmax.f32 %v681, 0.0
      %v714 = vmax.f32 %v682, 0.0
      %v715 = vpack.c.bf16 %v684, %v683
      %v716 = vpack.c.bf16 %v686, %v685
      %v717 = vpack.c.bf16 %v688, %v687
      %v718 = vpack.c.bf16 %v690, %v689
      %v719 = vpack.c.bf16 %v692, %v691
      %v720 = vpack.c.bf16 %v694, %v693
      %v721 = vpack.c.bf16 %v696, %v695
      %v722 = vpack.c.bf16 %v698, %v697
      %v723 = vpack.c.bf16 %v700, %v699
      %v724 = vpack.c.bf16 %v702, %v701
      %v725 = vpack.c.bf16 %v704, %v703
      %v726 = vpack.c.bf16 %v706, %v705
      %v727 = vpack.c.bf16 %v708, %v707
      %v728 = vpack.c.bf16 %v710, %v709
      %v729 = vpack.c.bf16 %v712, %v711
      %v730 = vpack.c.bf16 %v714, %v713
      %v747 = vunpack.c.l.b16 %v715
      %v748 = vunpack.c.h.b16 %v715
      %v749 = vunpack.c.l.b16 %v716
      %v750 = vunpack.c.h.b16 %v716
      %v751 = vunpack.c.l.b16 %v717
      %v752 = vunpack.c.h.b16 %v717
      %v753 = vunpack.c.l.b16 %v718
      %v754 = vunpack.c.h.b16 %v718
      %v755 = vunpack.c.l.b16 %v719
      %v756 = vunpack.c.h.b16 %v719
      %v757 = vunpack.c.l.b16 %v720
      %v758 = vunpack.c.h.b16 %v720
      %v759 = vunpack.c.l.b16 %v721
      %v760 = vunpack.c.h.b16 %v721
      %v761 = vunpack.c.l.b16 %v722
      %v762 = vunpack.c.h.b16 %v722
      %v763 = vunpack.c.l.b16 %v723
      %v764 = vunpack.c.h.b16 %v723
      %v765 = vunpack.c.l.b16 %v724
      %v766 = vunpack.c.h.b16 %v724
      %v767 = vunpack.c.l.b16 %v725
      %v768 = vunpack.c.h.b16 %v725
      %v769 = vunpack.c.l.b16 %v726
      %v770 = vunpack.c.h.b16 %v726
      %v771 = vunpack.c.l.b16 %v727
      %v772 = vunpack.c.h.b16 %v727
      %v773 = vunpack.c.l.b16 %v728
      %v774 = vunpack.c.h.b16 %v728
      %v775 = vunpack.c.l.b16 %v729
      %v776 = vunpack.c.h.b16 %v729
      %v777 = vunpack.c.l.b16 %v730
      %v778 = vunpack.c.h.b16 %v730
      %v779 = vpack.c.b16 %v747, %v747
      %v780 = vpack.c.b16 %v748, %v748
      %v781 = vpack.c.b16 %v749, %v749
      %v782 = vpack.c.b16 %v750, %v750
      %v783 = vpack.c.b16 %v751, %v751
      %v784 = vpack.c.b16 %v752, %v752
      %v785 = vpack.c.b16 %v753, %v753
      %v786 = vpack.c.b16 %v754, %v754
      %v787 = vpack.c.b16 %v755, %v755
      %v788 = vpack.c.b16 %v756, %v756
      %v789 = vpack.c.b16 %v757, %v757
      %v790 = vpack.c.b16 %v758, %v758
      %v791 = vpack.c.b16 %v759, %v759
      %v792 = vpack.c.b16 %v760, %v760
      %v793 = vpack.c.b16 %v761, %v761
      %v794 = vpack.c.b16 %v762, %v762
      %v795 = vpack.c.b16 %v763, %v763
      %v796 = vpack.c.b16 %v764, %v764
      %v797 = vpack.c.b16 %v765, %v765
      %v798 = vpack.c.b16 %v766, %v766
      %v799 = vpack.c.b16 %v767, %v767
      %v800 = vpack.c.b16 %v768, %v768
      %v801 = vpack.c.b16 %v769, %v769
      %v802 = vpack.c.b16 %v770, %v770
      %v803 = vpack.c.b16 %v771, %v771
      %v804 = vpack.c.b16 %v772, %v772
      %v805 = vpack.c.b16 %v773, %v773
      %v806 = vpack.c.b16 %v774, %v774
      %v807 = vpack.c.b16 %v775, %v775
      %v808 = vpack.c.b16 %v776, %v776
      %v809 = vpack.c.b16 %v777, %v777
      %v810 = vpack.c.b16 %v778, %v778
      %vm843 = vcmask 125952
      %844 = vst.msk [vmem:[%s264] sm:$0xf] %vm843, %v779
      %845 = vst.msk [vmem:[%s264 + $0x4] sm:$0xf] %vm843, %v780
      %846 = vst.msk [vmem:[%s264 + $0x8] sm:$0xf] %vm843, %v781
      %847 = vst.msk [vmem:[%s264 + $0xc] sm:$0xf] %vm843, %v782
      %848 = vst.msk [vmem:[%s264 + $0x10] sm:$0xf] %vm843, %v783
      %849 = vst.msk [vmem:[%s264 + $0x14] sm:$0xf] %vm843, %v784
      %850 = vst.msk [vmem:[%s264 + $0x18] sm:$0xf] %vm843, %v785
      %851 = vst.msk [vmem:[%s264 + $0x1c] sm:$0xf] %vm843, %v786
      %852 = vst.msk [vmem:[%s264 + $0x20] sm:$0xf] %vm843, %v787
      %853 = vst.msk [vmem:[%s264 + $0x24] sm:$0xf] %vm843, %v788
      %854 = vst.msk [vmem:[%s264 + $0x28] sm:$0xf] %vm843, %v789
      %855 = vst.msk [vmem:[%s264 + $0x2c] sm:$0xf] %vm843, %v790
      %856 = vst.msk [vmem:[%s264 + $0x30] sm:$0xf] %vm843, %v791
      %857 = vst.msk [vmem:[%s264 + $0x34] sm:$0xf] %vm843, %v792
      %858 = vst.msk [vmem:[%s264 + $0x38] sm:$0xf] %vm843, %v793
      %859 = vst.msk [vmem:[%s264 + $0x3c] sm:$0xf] %vm843, %v794
      %860 = vst.msk [vmem:[%s264 + $0x40] sm:$0xf] %vm843, %v795
      %861 = vst.msk [vmem:[%s264 + $0x44] sm:$0xf] %vm843, %v796
      %862 = vst.msk [vmem:[%s264 + $0x48] sm:$0xf] %vm843, %v797
      %863 = vst.msk [vmem:[%s264 + $0x4c] sm:$0xf] %vm843, %v798
      %864 = vst.msk [vmem:[%s264 + $0x50] sm:$0xf] %vm843, %v799
      %865 = vst.msk [vmem:[%s264 + $0x54] sm:$0xf] %vm843, %v800
      %866 = vst.msk [vmem:[%s264 + $0x58] sm:$0xf] %vm843, %v801
      %867 = vst.msk [vmem:[%s264 + $0x5c] sm:$0xf] %vm843, %v802
      %868 = vst.msk [vmem:[%s264 + $0x60] sm:$0xf] %vm843, %v803
      %869 = vst.msk [vmem:[%s264 + $0x64] sm:$0xf] %vm843, %v804
      %870 = vst.msk [vmem:[%s264 + $0x68] sm:$0xf] %vm843, %v805
      %871 = vst.msk [vmem:[%s264 + $0x6c] sm:$0xf] %vm843, %v806
      %872 = vst.msk [vmem:[%s264 + $0x70] sm:$0xf] %vm843, %v807
      %873 = vst.msk [vmem:[%s264 + $0x74] sm:$0xf] %vm843, %v808
      %874 = vst.msk [vmem:[%s264 + $0x78] sm:$0xf] %vm843, %v809
      %875 = vst.msk [vmem:[%s264 + $0x7c] sm:$0xf] %vm843, %v810
      %s876 = smul.u32 32, %s19
      %p877 = scmp.lt.s32.totalorder %s876, 63
      %s878 = scalar_select %p877, %s876, 63
      %p879 = scmp.lt.s32.totalorder %s20, 0
      %s880 = scalar_select %p879, %s20, 0
      %s881 = sadd.s32 %s880, %s878
      %s882 = smul.addr %s881, 4
      %s883 = scalar_lea.vmem %s4, %s882
      // Predicated region
      $region37: #{fwd.7} parent=35 // pred_check
        %p884 = pneg %p151
      $region38: #{fwd.7} parent=35 // pred_check_branch
        %886 = sbr.rel (%p884) target = $region40
      $region39: #{fwd.7} parent=35 // pred_region
        %s887 = smul.u32 32, %s19
      $region40: #{fwd.7} parent=35 // pred_fallthru
        _
    $region36: #{fwd.7} parent=5 // pred_fallthru
      _
    %p888 = scmp.le.s32.totalorder 2, %s10
    // Predicated region
    $region41: #{fwd.7} parent=5 // pred_check
      %p889 = pneg %p888
    $region42: #{fwd.7} parent=5 // pred_check_branch
      %891 = sbr.rel (%p889) target = $region44
    $region43: #{fwd.7} parent=5 // pred_region
      %s892 = ssub.s32 %s10, 2
      // Predicated region
      $region45: #{fwd.7} parent=43 // pred_check
        %p893 = pneg %p157
      $region46: #{fwd.7} parent=43 // pred_check_branch
        %895 = sbr.rel (%p893) target = $region48
      $region47: #{fwd.7} parent=43 // pred_region
        %s896 = smul.u32 32, %s21
        %p897 = scmp.lt.s32.totalorder %s896, 63
        %s898 = scalar_select %p897, %s896, 63
        %p899 = scmp.lt.s32.totalorder %s22, 0
        %s900 = scalar_select %p899, %s22, 0
        %s901 = sadd.s32 %s900, %s898
        %s902 = smul.addr %s901, 4
        %s903 = scalar_lea.vmem %s4, %s902
      $region48: #{fwd.7} parent=43 // pred_fallthru
        _
    $region44: #{fwd.7} parent=5 // pred_fallthru
      _
  $region6: #{fwd.7} parent=0 // loop_footer
    %s14 = sadd.s32 1, %s10
  $region7: #{fwd.7} parent=0 // loop_footer_branch
    %9 = sbr.rel target = $region3
  $region8: #{fwd.7} parent=0 // loop_exit
    _

// kernel: fwd.9
$region0: #{fwd.9}
  #allocation0 [shape = 'u32[]', space=smem, size = 0x4, offset = 0x4, fixed_abs, tag = 'smem constant byte address 0x4 - core index']
  #allocation1 [shape = 'u32[144,128]{1,0:T(1,128)}', space=vmem, size = 0x12000, scoped, tag = 'internal scratch']
  %s0 = inlined_call_operand.vmem [shape: bf16[128,32], index: 0, kind: input, shape index: {}]
  %s1 = inlined_call_operand.vmem [shape: bf16[32,64], index: 1, kind: input, shape index: {}]
  %s2 = inlined_call_operand.vmem [shape: f32[1,64], index: 2, kind: input, shape index: {}]
  %s3 = inlined_call_operand.vmem [shape: f32[1,64], index: 3, kind: input, shape index: {}]
  %s4 = inlined_call_operand.vmem [shape: bf16[128,64], index: 4, kind: output, shape index: {}]
  %s5 = sld [smem:[#allocation0]]
  $region49: #{fwd.9} parent=0
    _
  %s7 = ssub.s32 1, %s5
  %s8 = scalar_select 0, %s7, %s5
  loop: start=0, step=1, limit=4
  $region2: #{fwd.9} parent=0 // loop_pre_header
    _
  $region3: #{fwd.9} parent=0 // loop_header
    %s10 = sphi 0, %s14
    %p11 = scmp.ge.s32.totalorder %s10, 4
    %s17 = sphi 0, %s29
    %s18 = sphi 0, %s25
    %s19 = sphi 0, %s17
    %s20 = sphi 0, %s18
    %s21 = sphi 0, %s19
    %s22 = sphi 0, %s20
    %s32 = sphi 0, %s34
    %s35 = sphi 0, %s32
    %s36 = sphi 0, %s35
    %s52 = sphi 0, %s36
    %s58 = sphi 0, %s60
    %s61 = sphi 0, %s58
    %s62 = sphi 0, %s61
    %s78 = sphi 0, %s62
    %s84 = sphi 0, %s86
    %s87 = sphi 0, %s84
    %s88 = sphi 0, %s87
    %s104 = sphi 0, %s88
    %s110 = sphi 0, %s112
    %s113 = sphi 0, %s110
    %s114 = sphi 0, %s113
    %s130 = sphi 0, %s114
    %s138 = sphi 0, %s140
    %s141 = sphi 0, %s138
    %s142 = sphi 0, %s141
    %s158 = sphi 0, %s142
  $region4: #{fwd.9} parent=0 // loop_header_branch
    %13 = sbr.rel (%p11) target = $region8
  $region5: #{fwd.9} parent=0 // loop_body
    %s15 = ssub.s32 %s10, 1
    %s16 = ssub.s32 %s10, 2
    %s23 = sadd.s32 1, %s18
    %p24 = scmp.ge.s32.totalorder %s23, 1
    %s25 = scalar_select %p24, 0, %s23
    %s26 = sadd.s32 1, %s17
    %s27 = scalar_select %p24, %s26, %s17
    %p28 = scmp.ge.s32.totalorder %s27, 2
    %s29 = scalar_select %p28, 0, %s27
    %s30 = ssub.s32 %s17, %s29
    %p31 = scmp.eq.s32.totalorder %s30, 0
    %s33 = sadd.s32 %s32, 1
    %s34 = scalar_select %p31, %s32, %s33
    %p37 = pneg %p31
    %p38 = scmp.eq.s32.totalorder %s10, 1
    %p39 = por %p37, %p38
    %p40 = scmp.ne.s32.totalorder %s32, %s35
    %p41 = scmp.eq.s32.totalorder %s10, 0
    %p42 = por %p40, %p41
    %p43 = scmp.ne.s32.totalorder %s32, %s35
    %p44 = scmp.eq.s32.totalorder %s15, 1
    %p45 = por %p43, %p44
    %p46 = scmp.ne.s32.totalorder %s35, %s36
    %p47 = scmp.eq.s32.totalorder %s15, 0
    %p48 = por %p46, %p47
    %p49 = scmp.ne.s32.totalorder %s35, %s36
    %p50 = scmp.eq.s32.totalorder %s16, 1
    %p51 = por %p49, %p50
    %p53 = scmp.ne.s32.totalorder %s36, %s52
    %p54 = scmp.eq.s32.totalorder %s16, 0
    %p55 = por %p53, %p54
    %s56 = ssub.s32 %s18, %s25
    %p57 = scmp.eq.s32.totalorder %s56, 0
    %s59 = sadd.s32 %s58, 1
    %s60 = scalar_select %p57, %s58, %s59
    %p63 = pneg %p57
    %p64 = scmp.eq.s32.totalorder %s10, 1
    %p65 = por %p63, %p64
    %p66 = scmp.ne.s32.totalorder %s58, %s61
    %p67 = scmp.eq.s32.totalorder %s10, 0
    %p68 = por %p66, %p67
    %p69 = scmp.ne.s32.totalorder %s58, %s61
    %p70 = scmp.eq.s32.totalorder %s15, 1
    %p71 = por %p69, %p70
    %p72 = scmp.ne.s32.totalorder %s61, %s62
    %p73 = scmp.eq.s32.totalorder %s15, 0
    %p74 = por %p72, %p73
    %p75 = scmp.ne.s32.totalorder %s61, %s62
    %p76 = scmp.eq.s32.totalorder %s16, 1
    %p77 = por %p75, %p76
    %p79 = scmp.ne.s32.totalorder %s62, %s78
    %p80 = scmp.eq.s32.totalorder %s16, 0
    %p81 = por %p79, %p80
    %s82 = ssub.s32 %s18, %s25
    %p83 = scmp.eq.s32.totalorder %s82, 0
    %s85 = sadd.s32 %s84, 1
    %s86 = scalar_select %p83, %s84, %s85
    %p89 = pneg %p83
    %p90 = scmp.eq.s32.totalorder %s10, 1
    %p91 = por %p89, %p90
    %p92 = scmp.ne.s32.totalorder %s84, %s87
    %p93 = scmp.eq.s32.totalorder %s10, 0
    %p94 = por %p92, %p93
    %p95 = scmp.ne.s32.totalorder %s84, %s87
    %p96 = scmp.eq.s32.totalorder %s15, 1
    %p97 = por %p95, %p96
    %p98 = scmp.ne.s32.totalorder %s87, %s88
    %p99 = scmp.eq.s32.totalorder %s15, 0
    %p100 = por %p98, %p99
    %p101 = scmp.ne.s32.totalorder %s87, %s88
    %p102 = scmp.eq.s32.totalorder %s16, 1
    %p103 = por %p101, %p102
    %p105 = scmp.ne.s32.totalorder %s88, %s104
    %p106 = scmp.eq.s32.totalorder %s16, 0
    %p107 = por %p105, %p106
    %s108 = ssub.s32 %s18, %s25
    %p109 = scmp.eq.s32.totalorder %s108, 0
    %s111 = sadd.s32 %s110, 1
    %s112 = scalar_select %p109, %s110, %s111
    %p115 = pneg %p109
    %p116 = scmp.eq.s32.totalorder %s10, 1
    %p117 = por %p115, %p116
    %p118 = scmp.ne.s32.totalorder %s110, %s113
    %p119 = scmp.eq.s32.totalorder %s10, 0
    %p120 = por %p118, %p119
    %p121 = scmp.ne.s32.totalorder %s110, %s113
    %p122 = scmp.eq.s32.totalorder %s15, 1
    %p123 = por %p121, %p122
    %p124 = scmp.ne.s32.totalorder %s113, %s114
    %p125 = scmp.eq.s32.totalorder %s15, 0
    %p126 = por %p124, %p125
    %p127 = scmp.ne.s32.totalorder %s113, %s114
    %p128 = scmp.eq.s32.totalorder %s16, 1
    %p129 = por %p127, %p128
    %p131 = scmp.ne.s32.totalorder %s114, %s130
    %p132 = scmp.eq.s32.totalorder %s16, 0
    %p133 = por %p131, %p132
    %s134 = ssub.s32 %s17, %s29
    %s135 = ssub.s32 %s18, %s25
    %s136 = sor.u32 %s134, %s135
    %p137 = scmp.eq.s32.totalorder %s136, 0
    %s139 = sadd.s32 %s138, 1
    %s140 = scalar_select %p137, %s138, %s139
    %p143 = pneg %p137
    %p144 = scmp.eq.s32.totalorder %s10, 1
    %p145 = por %p143, %p144
    %p146 = scmp.ne.s32.totalorder %s138, %s141
    %p147 = scmp.eq.s32.totalorder %s10, 0
    %p148 = por %p146, %p147
    %p149 = scmp.ne.s32.totalorder %s138, %s141
    %p150 = scmp.eq.s32.totalorder %s15, 1
    %p151 = por %p149, %p150
    %p152 = scmp.ne.s32.totalorder %s141, %s142
    %p153 = scmp.eq.s32.totalorder %s15, 0
    %p154 = por %p152, %p153
    %p155 = scmp.ne.s32.totalorder %s141, %s142
    %p156 = scmp.eq.s32.totalorder %s16, 1
    %p157 = por %p155, %p156
    %p159 = scmp.ne.s32.totalorder %s142, %s158
    %p160 = scmp.eq.s32.totalorder %s16, 0
    %p161 = por %p159, %p160
    %p162 = scmp.le.s32.totalorder 1, %s10
    %p163 = scmp.lt.s32.totalorder %s10, 3
    %p164 = pnand %p162, %p163
    %p165 = pneg %p164
    // Predicated region
    $region9: #{fwd.9} parent=5 // pred_check
      _
    $region10: #{fwd.9} parent=5 // pred_check_branch
      %167 = sbr.rel (%p164) target = $region12
    $region11: #{fwd.9} parent=5 // pred_region
      %s168 = ssub.s32 %s10, 1
      // Predicated region
      $region13: #{fwd.9} parent=11 // pred_check
        %p169 = pneg %p74
      $region14: #{fwd.9} parent=11 // pred_check_branch
        %171 = sbr.rel (%p169) target = $region16
      $region15: #{fwd.9} parent=11 // pred_region
        %p172 = scmp.lt.s32.totalorder %s20, 0
        %s173 = scalar_select %p172, %s20, 0
        %s174 = smul.addr %s173, 4
        %s175 = scalar_lea.vmem %s1, %s174
      $region16: #{fwd.9} parent=11 // pred_fallthru
        _
      // Predicated region
      $region17: #{fwd.9} parent=11 // pred_check
        %p176 = pneg %p100
      $region18: #{fwd.9} parent=11 // pred_check_branch
        %178 = sbr.rel (%p176) target = $region20
      $region19: #{fwd.9} parent=11 // pred_region
        %p179 = scmp.lt.s32.totalorder %s20, 0
        %s180 = scalar_select %p179, %s20, 0
        %s181 = scalar_lea.vmem %s2, %s180
      $region20: #{fwd.9} parent=11 // pred_fallthru
        _
      // Predicated region
      $region21: #{fwd.9} parent=11 // pred_check
        %p182 = pneg %p126
      $region22: #{fwd.9} parent=11 // pred_check_branch
        %184 = sbr.rel (%p182) target = $region24
      $region23: #{fwd.9} parent=11 // pred_region
        %p185 = scmp.lt.s32.totalorder %s20, 0
        %s186 = scalar_select %p185, %s20, 0
        %s187 = scalar_lea.vmem %s3, %s186
      $region24: #{fwd.9} parent=11 // pred_fallthru
        _
    $region12: #{fwd.9} parent=5 // pred_fallthru
      _
    %p188 = scmp.lt.s32.totalorder %s10, 2
    // Predicated region
    $region25: #{fwd.9} parent=5 // pred_check
      %p189 = pneg %p188
    $region26: #{fwd.9} parent=5 // pred_check_branch
      %191 = sbr.rel (%p189) target = $region28
    $region27: #{fwd.9} parent=5 // pred_region
      // Predicated region
      $region29: #{fwd.9} parent=27 // pred_check
        %p192 = pneg %p42
      $region30: #{fwd.9} parent=27 // pred_check_branch
        %194 = sbr.rel (%p192) target = $region32
      $region31: #{fwd.9} parent=27 // pred_region
        %s195 = smul.u32 8, %s17
        %p196 = scmp.lt.s32.totalorder %s195, 15
        %s197 = scalar_select %p196, %s195, 15
        %s198 = smul.addr %s197, 4
        %s199 = scalar_lea.vmem %s0, %s198
        %s200 = smul.u32 8, %s17
      $region32: #{fwd.9} parent=27 // pred_fallthru
        _
    $region28: #{fwd.9} parent=5 // pred_fallthru
      _
    %p201 = scmp.le.s32.totalorder 1, %s10
    %p202 = scmp.lt.s32.totalorder %s10, 3
    %p203 = pnand %p201, %p202
    %p204 = pneg %p203
    // Predicated region
    $region33: #{fwd.9} parent=5 // pred_check
      _
    $region34: #{fwd.9} parent=5 // pred_check_branch
      %206 = sbr.rel (%p203) target = $region36
    $region35: #{fwd.9} parent=5 // pred_region
      %s207 = ssub.s32 %s10, 1
      %s208 = smul.u32 8, %s19
      %p209 = scmp.lt.s32.totalorder %s208, 15
      %s210 = scalar_select %p209, %s208, 15
      %s211 = smul.addr %s210, 4
      %s212 = scalar_lea.vmem %s0, %s211
      %p213 = pneg %p48
      %p214 = pneg %p45
      %p215 = scmp.lt.s32.totalorder %s20, 0
      %s216 = scalar_select %p215, %s20, 0
      %s217 = smul.addr %s216, 4
      %s218 = scalar_lea.vmem %s1, %s217
      %p219 = pneg %p74
      %p220 = pneg %p71
      %p221 = scmp.lt.s32.totalorder %s20, 0
      %s222 = scalar_select %p221, %s20, 0
      %s223 = scalar_lea.vmem %s2, %s222
      %p224 = pneg %p100
      %p225 = pneg %p97
      %p226 = scmp.lt.s32.totalorder %s20, 0
      %s227 = scalar_select %p226, %s20, 0
      %s228 = scalar_lea.vmem %s3, %s227
      %p229 = pneg %p126
      %p230 = pneg %p123
      %p231 = pneg %p154
      %p232 = pneg %p151
      %s233 = smul.u32 8, %s19
      %p234 = scmp.lt.s32.totalorder %s233, 15
      %s235 = scalar_select %p234, %s233, 15
      %p236 = scmp.lt.s32.totalorder %s20, 0
      %s237 = scalar_select %p236, %s20, 0
      %s238 = sadd.s32 %s237, %s235
      %s239 = smul.addr %s238, 4
      %s240 = scalar_lea.vmem %s4, %s239
      %s241 = smul.u32 8, %s19
      %p242 = scmp.lt.s32.totalorder %s241, 15
      %s243 = scalar_select %p242, %s241, 15
      %s244 = smul.addr %s243, 4
      %s245 = scalar_lea.vmem %s0, %s244
      %s246 = smul.u32 8, %s19
      %p247 = scmp.lt.s32.totalorder %s20, 0
      %s248 = scalar_select %p247, %s20, 0
      %s249 = smul.addr %s248, 4
      %s250 = scalar_lea.vmem %s1, %s249
      %p251 = scmp.lt.s32.totalorder %s20, 0
      %s252 = scalar_select %p251, %s20, 0
      %s253 = scalar_lea.vmem %s2, %s252
      %p254 = scmp.lt.s32.totalorder %s20, 0
      %s255 = scalar_select %p254, %s20, 0
      %s256 = scalar_lea.vmem %s3, %s255
      %s257 = smul.u32 8, %s19
      %p258 = scmp.lt.s32.totalorder %s257, 15
      %s259 = scalar_select %p258, %s257, 15
      %p260 = scmp.lt.s32.totalorder %s20, 0
      %s261 = scalar_select %p260, %s20, 0
      %s262 = sadd.s32 %s261, %s259
      %s263 = smul.addr %s262, 4
      %s264 = scalar_lea.vmem %s4, %s263
      %s265 = smul.u32 8, %s19
      %v267 = vld [vmem:[%s245] sm:$0xf]
      %v268 = vld [vmem:[%s245 + $0x4] sm:$0xf]
      %v269 = vld [vmem:[%s245 + $0x8] sm:$0xf]
      %v270 = vld [vmem:[%s245 + $0xc] sm:$0xf]
      %v271 = vld [vmem:[%s245 + $0x10] sm:$0xf]
      %v272 = vld [vmem:[%s245 + $0x14] sm:$0xf]
      %v273 = vld [vmem:[%s245 + $0x18] sm:$0xf]
      %v274 = vld [vmem:[%s245 + $0x1c] sm:$0xf]
      %v275 = vld [vmem:[%s250] sm:$0xf]
      %v276 = vld [vmem:[%s250 + $0x4] sm:$0xf]
      %v277 = vld [vmem:[%s250 + $0x8] sm:$0xf]
      %v278 = vld [vmem:[%s250 + $0xc] sm:$0xf]
      %v287 = vunpack.c.l.b16 %v267
      %v288 = vunpack.c.l.b16 %v268
      %v289 = vunpack.c.l.b16 %v269
      %v290 = vunpack.c.l.b16 %v270
      %v291 = vunpack.c.l.b16 %v271
      %v292 = vunpack.c.l.b16 %v272
      %v293 = vunpack.c.l.b16 %v273
      %v294 = vunpack.c.l.b16 %v274
      %v295 = vpack.c.b16 %v288, %v287
      %v296 = vpack.c.b16 %v290, %v289
      %v297 = vpack.c.b16 %v292, %v291
      %v298 = vpack.c.b16 %v294, %v293
      %v303 = vunpack.c.l.b16 %v275
      %v304 = vunpack.c.l.b16 %v276
      %v305 = vunpack.c.l.b16 %v277
      %v306 = vunpack.c.l.b16 %v278
      %v307 = vpack.c.b16 %v304, %v303
      %v308 = vpack.c.b16 %v306, %v305
      %vm311 = vcmask 261120
      %v313 = vsel %vm311, %v295, 0
      %v316 = vsel %vm311, %v296, 0
      %v319 = vsel %vm311, %v297, 0
      %v322 = vsel %vm311, %v298, 0
      %324 = vmatprep.subr.bf16.mxu0 0
      %325 = vmatpush1.bf16.msra.mxu0 0
      %326 = vmatprep.subr.bf16.mxu0 0
      %327 = vmatpush1.bf16.msra.mxu0 0
      %328 = vmatprep.subr.bf16.mxu0 0
      %329 = vmatpush1.bf16.msra.mxu0 0
      %330 = vmatprep.subr.bf16.mxu0 0
      %331 = vmatpush1.bf16.msra.mxu0 0
      %332 = vmatprep.subr.bf16.mxu0 0
      %333 = vmatpush1.bf16.msra.mxu0 0
      %334 = vmatprep.subr.bf16.mxu0 0
      %335 = vmatpush1.bf16.msra.mxu0 0
      %336 = vmatprep.subr.bf16.mxu0 0
      %337 = vmatpush1.bf16.msra.mxu0 %v308
      %338 = vmatprep.subr.bf16.mxu0 0
      %339 = vmatpush1.bf16.msra.mxu0 %v307
      %340 = vmatprep.subr.bf16.mxu0 0
      %341 = vmatpush2.bf16.msra.mxu0 0
      %342 = vmatprep.subr.bf16.mxu0 0
      %343 = vmatpush2.bf16.msra.mxu0 0
      %344 = vmatprep.subr.bf16.mxu0 0
      %345 = vmatpush2.bf16.msra.mxu0 0
      %346 = vmatprep.subr.bf16.mxu0 0
      %347 = vmatpush2.bf16.msra.mxu0 0
      %348 = vmatprep.subr.bf16.mxu0 0
      %349 = vmatpush2.bf16.msra.mxu0 0
      %350 = vmatprep.subr.bf16.mxu0 0
      %351 = vmatpush2.bf16.msra.mxu0 0
      %352 = vmatprep.subr.bf16.mxu0 0
      %353 = vmatpush2.bf16.msra.mxu0 0
      %354 = vmatprep.subr.bf16.mxu0 0
      %355 = vmatpush2.bf16.msra.mxu0 0
      %356 = vmatprep.mubr.bf16.mxu0 0
      %357 = vmatmul.mubr.bf16.gmra.mxu0 %v313
      %v358 = vpop.f32.mrf.mxu0
      %v359 = vadd.f32 0.0, %v358
      %v360 = vpop.f32.mrf.mxu0
      %v361 = vpop.f32.mrf.mxu0
      %v362 = vadd.f32 0.0, %v361
      %v363 = vpop.f32.mrf.mxu0
      %364 = vmatprep.mubr.bf16.mxu0 0
      %365 = vmatmul.mubr.bf16.gmra.mxu0 %v316
      %v366 = vpop.f32.mrf.mxu0
      %v367 = vadd.f32 0.0, %v366
      %v368 = vpop.f32.mrf.mxu0
      %v369 = vpop.f32.mrf.mxu0
      %v370 = vadd.f32 0.0, %v369
      %v371 = vpop.f32.mrf.mxu0
      %372 = vmatprep.mubr.bf16.mxu0 0
      %373 = vmatmul.mubr.bf16.gmra.mxu0 %v319
      %v374 = vpop.f32.mrf.mxu0
      %v375 = vadd.f32 0.0, %v374
      %v376 = vpop.f32.mrf.mxu0
      %v377 = vpop.f32.mrf.mxu0
      %v378 = vadd.f32 0.0, %v377
      %v379 = vpop.f32.mrf.mxu0
      %380 = vmatprep.mubr.bf16.mxu0 0
      %381 = vmatmul.mubr.bf16.gmra.mxu0 %v322
      %v382 = vpop.f32.mrf.mxu0
      %v383 = vadd.f32 0.0, %v382
      %v384 = vpop.f32.mrf.mxu0
      %v385 = vpop.f32.mrf.mxu0
      %v386 = vadd.f32 0.0, %v385
      %v387 = vpop.f32.mrf.mxu0
      %388 = vdwg.mxu0
      %v389 = vld [vmem:[%s253] sm:$0x1]
      %v391 = vlaneseq
      %v392 = vshrl.u32 %v391, 7
      %v393 = vsub.s32 0, %v392
      %v394 = vrot.slane %v389, %v393
      %v396 = vmul.f32 %v359, %v394
      %v397 = vmul.f32 %v362, %v394
      %v398 = vmul.f32 %v367, %v394
      %v399 = vmul.f32 %v370, %v394
      %v400 = vmul.f32 %v375, %v394
      %v401 = vmul.f32 %v378, %v394
      %v402 = vmul.f32 %v383, %v394
      %v403 = vmul.f32 %v386, %v394
      %v404 = vld [vmem:[%s256] sm:$0x1]
      %v406 = vlaneseq
      %v407 = vshrl.u32 %v406, 7
      %v408 = vsub.s32 0, %v407
      %v409 = vrot.slane %v404, %v408
      %v411 = vadd.f32 %v396, %v409
      %v412 = vadd.f32 %v397, %v409
      %v413 = vadd.f32 %v398, %v409
      %v414 = vadd.f32 %v399, %v409
      %v415 = vadd.f32 %v400, %v409
      %v416 = vadd.f32 %v401, %v409
      %v417 = vadd.f32 %v402, %v409
      %v418 = vadd.f32 %v403, %v409
      %v419 = vpack.c.bf16 %v412, %v411
      %v420 = vpack.c.bf16 %v414, %v413
      %v421 = vpack.c.bf16 %v416, %v415
      %v422 = vpack.c.bf16 %v418, %v417
      %v427 = vunpack.c.l.b16 %v419
      %v428 = vunpack.c.h.b16 %v419
      %v429 = vunpack.c.l.b16 %v420
      %v430 = vunpack.c.h.b16 %v420
      %v431 = vunpack.c.l.b16 %v421
      %v432 = vunpack.c.h.b16 %v421
      %v433 = vunpack.c.l.b16 %v422
      %v434 = vunpack.c.h.b16 %v422
      %v435 = vpack.c.b16 %v427, %v427
      %v436 = vpack.c.b16 %v428, %v428
      %v437 = vpack.c.b16 %v429, %v429
      %v438 = vpack.c.b16 %v430, %v430
      %v439 = vpack.c.b16 %v431, %v431
      %v440 = vpack.c.b16 %v432, %v432
      %v441 = vpack.c.b16 %v433, %v433
      %v442 = vpack.c.b16 %v434, %v434
      %vm451 = vcmask 519168
      %452 = vst.msk [vmem:[%s264] sm:$0xf] %vm451, %v435
      %453 = vst.msk [vmem:[%s264 + $0x4] sm:$0xf] %vm451, %v436
      %454 = vst.msk [vmem:[%s264 + $0x8] sm:$0xf] %vm451, %v437
      %455 = vst.msk [vmem:[%s264 + $0xc] sm:$0xf] %vm451, %v438
      %456 = vst.msk [vmem:[%s264 + $0x10] sm:$0xf] %vm451, %v439
      %457 = vst.msk [vmem:[%s264 + $0x14] sm:$0xf] %vm451, %v440
      %458 = vst.msk [vmem:[%s264 + $0x18] sm:$0xf] %vm451, %v441
      %459 = vst.msk [vmem:[%s264 + $0x1c] sm:$0xf] %vm451, %v442
      %s460 = smul.u32 8, %s19
      %p461 = scmp.lt.s32.totalorder %s460, 15
      %s462 = scalar_select %p461, %s460, 15
      %p463 = scmp.lt.s32.totalorder %s20, 0
      %s464 = scalar_select %p463, %s20, 0
      %s465 = sadd.s32 %s464, %s462
      %s466 = smul.addr %s465, 4
      %s467 = scalar_lea.vmem %s4, %s466
      // Predicated region
      $region37: #{fwd.9} parent=35 // pred_check
        %p468 = pneg %p151
      $region38: #{fwd.9} parent=35 // pred_check_branch
        %470 = sbr.rel (%p468) target = $region40
      $region39: #{fwd.9} parent=35 // pred_region
        %s471 = smul.u32 8, %s19
      $region40: #{fwd.9} parent=35 // pred_fallthru
        _
    $region36: #{fwd.9} parent=5 // pred_fallthru
      _
    %p472 = scmp.le.s32.totalorder 2, %s10
    // Predicated region
    $region41: #{fwd.9} parent=5 // pred_check
      %p473 = pneg %p472
    $region42: #{fwd.9} parent=5 // pred_check_branch
      %475 = sbr.rel (%p473) target = $region44
    $region43: #{fwd.9} parent=5 // pred_region
      %s476 = ssub.s32 %s10, 2
      // Predicated region
      $region45: #{fwd.9} parent=43 // pred_check
        %p477 = pneg %p157
      $region46: #{fwd.9} parent=43 // pred_check_branch
        %479 = sbr.rel (%p477) target = $region48
      $region47: #{fwd.9} parent=43 // pred_region
        %s480 = smul.u32 8, %s21
        %p481 = scmp.lt.s32.totalorder %s480, 15
        %s482 = scalar_select %p481, %s480, 15
        %p483 = scmp.lt.s32.totalorder %s22, 0
        %s484 = scalar_select %p483, %s22, 0
        %s485 = sadd.s32 %s484, %s482
        %s486 = smul.addr %s485, 4
        %s487 = scalar_lea.vmem %s4, %s486
      $region48: #{fwd.9} parent=43 // pred_fallthru
        _
    $region44: #{fwd.9} parent=5 // pred_fallthru
      _
  $region6: #{fwd.9} parent=0 // loop_footer
    %s14 = sadd.s32 1, %s10
  $region7: #{fwd.9} parent=0 // loop_footer_branch
    %9 = sbr.rel target = $region3
  $region8: #{fwd.9} parent=0 // loop_exit
    _

// kernel: fwd.8
$region0: #{fwd.8}
  #allocation0 [shape = 'u32[]', space=smem, size = 0x4, offset = 0x4, fixed_abs, tag = 'smem constant byte address 0x4 - core index']
  #allocation1 [shape = 'u32[144,128]{1,0:T(1,128)}', space=vmem, size = 0x12000, scoped, tag = 'internal scratch']
  %s0 = inlined_call_operand.vmem [shape: bf16[8,9,9,16], index: 0, kind: input, shape index: {}]
  %s1 = inlined_call_operand.vmem [shape: bf16[9,16,16], index: 1, kind: input, shape index: {}]
  %s2 = inlined_call_operand.vmem [shape: f32[1,16], index: 2, kind: input, shape index: {}]
  %s3 = inlined_call_operand.vmem [shape: f32[1,16], index: 3, kind: input, shape index: {}]
  %s4 = inlined_call_operand.vmem [shape: bf16[2,8,8,16], index: 4, kind: output, shape index: {}]
  %s5 = sld [smem:[#allocation0]]
  $region49: #{fwd.8} parent=0
    _
  %s7 = ssub.s32 1, %s5
  %s8 = scalar_select 0, %s7, %s5
  loop: start=0, step=1, limit=4
  $region2: #{fwd.8} parent=0 // loop_pre_header
    _
  $region3: #{fwd.8} parent=0 // loop_header
    %s10 = sphi 0, %s14
    %p11 = scmp.ge.s32.totalorder %s10, 4
    %s20 = sphi 0, %s22
    %s23 = sphi 0, %s20
    %s24 = sphi 0, %s23
    %s40 = sphi 0, %s24
    %s44 = sphi 0, %s44
    %s46 = sphi 0, %s44
    %s47 = sphi 0, %s46
    %s61 = sphi 0, %s47
    %s65 = sphi 0, %s65
    %s67 = sphi 0, %s65
    %s68 = sphi 0, %s67
    %s82 = sphi 0, %s68
    %s86 = sphi 0, %s86
    %s88 = sphi 0, %s86
    %s89 = sphi 0, %s88
    %s103 = sphi 0, %s89
    %s109 = sphi 0, %s111
    %s112 = sphi 0, %s109
    %s113 = sphi 0, %s112
    %s129 = sphi 0, %s113
  $region4: #{fwd.8} parent=0 // loop_header_branch
    %13 = sbr.rel (%p11) target = $region8
  $region5: #{fwd.8} parent=0 // loop_body
    %s15 = ssub.s32 %s10, 1
    %s16 = ssub.s32 %s10, 2
    %s17 = sadd.s32 %s10, 1
    %s18 = ssub.s32 %s10, %s17
    %p19 = scmp.eq.s32.totalorder %s18, 0
    %s21 = sadd.s32 %s20, 1
    %s22 = scalar_select %p19, %s20, %s21
    %p25 = pneg %p19
    %p26 = scmp.eq.s32.totalorder %s10, 1
    %p27 = por %p25, %p26
    %p28 = scmp.ne.s32.totalorder %s20, %s23
    %p29 = scmp.eq.s32.totalorder %s10, 0
    %p30 = por %p28, %p29
    %p31 = scmp.ne.s32.totalorder %s20, %s23
    %p32 = scmp.eq.s32.totalorder %s15, 1
    %p33 = por %p31, %p32
    %p34 = scmp.ne.s32.totalorder %s23, %s24
    %p35 = scmp.eq.s32.totalorder %s15, 0
    %p36 = por %p34, %p35
    %p37 = scmp.ne.s32.totalorder %s23, %s24
    %p38 = scmp.eq.s32.totalorder %s16, 1
    %p39 = por %p37, %p38
    %p41 = scmp.ne.s32.totalorder %s24, %s40
    %p42 = scmp.eq.s32.totalorder %s16, 0
    %p43 = por %p41, %p42
    %s45 = sadd.s32 %s44, 1
    %p48 = scmp.eq.s32.totalorder %s10, 1
    %p49 = scmp.ne.s32.totalorder %s44, %s46
    %p50 = scmp.eq.s32.totalorder %s10, 0
    %p51 = por %p49, %p50
    %p52 = scmp.ne.s32.totalorder %s44, %s46
    %p53 = scmp.eq.s32.totalorder %s15, 1
    %p54 = por %p52, %p53
    %p55 = scmp.ne.s32.totalorder %s46, %s47
    %p56 = scmp.eq.s32.totalorder %s15, 0
    %p57 = por %p55, %p56
    %p58 = scmp.ne.s32.totalorder %s46, %s47
    %p59 = scmp.eq.s32.totalorder %s16, 1
    %p60 = por %p58, %p59
    %p62 = scmp.ne.s32.totalorder %s47, %s61
    %p63 = scmp.eq.s32.totalorder %s16, 0
    %p64 = por %p62, %p63
    %s66 = sadd.s32 %s65, 1
    %p69 = scmp.eq.s32.totalorder %s10, 1
    %p70 = scmp.ne.s32.totalorder %s65, %s67
    %p71 = scmp.eq.s32.totalorder %s10, 0
    %p72 = por %p70, %p71
    %p73 = scmp.ne.s32.totalorder %s65, %s67
    %p74 = scmp.eq.s32.totalorder %s15, 1
    %p75 = por %p73, %p74
    %p76 = scmp.ne.s32.totalorder %s67, %s68
    %p77 = scmp.eq.s32.totalorder %s15, 0
    %p78 = por %p76, %p77
    %p79 = scmp.ne.s32.totalorder %s67, %s68
    %p80 = scmp.eq.s32.totalorder %s16, 1
    %p81 = por %p79, %p80
    %p83 = scmp.ne.s32.totalorder %s68, %s82
    %p84 = scmp.eq.s32.totalorder %s16, 0
    %p85 = por %p83, %p84
    %s87 = sadd.s32 %s86, 1
    %p90 = scmp.eq.s32.totalorder %s10, 1
    %p91 = scmp.ne.s32.totalorder %s86, %s88
    %p92 = scmp.eq.s32.totalorder %s10, 0
    %p93 = por %p91, %p92
    %p94 = scmp.ne.s32.totalorder %s86, %s88
    %p95 = scmp.eq.s32.totalorder %s15, 1
    %p96 = por %p94, %p95
    %p97 = scmp.ne.s32.totalorder %s88, %s89
    %p98 = scmp.eq.s32.totalorder %s15, 0
    %p99 = por %p97, %p98
    %p100 = scmp.ne.s32.totalorder %s88, %s89
    %p101 = scmp.eq.s32.totalorder %s16, 1
    %p102 = por %p100, %p101
    %p104 = scmp.ne.s32.totalorder %s89, %s103
    %p105 = scmp.eq.s32.totalorder %s16, 0
    %p106 = por %p104, %p105
    %s107 = ssub.s32 %s10, %s17
    %p108 = scmp.eq.s32.totalorder %s107, 0
    %s110 = sadd.s32 %s109, 1
    %s111 = scalar_select %p108, %s109, %s110
    %p114 = pneg %p108
    %p115 = scmp.eq.s32.totalorder %s10, 1
    %p116 = por %p114, %p115
    %p117 = scmp.ne.s32.totalorder %s109, %s112
    %p118 = scmp.eq.s32.totalorder %s10, 0
    %p119 = por %p117, %p118
    %p120 = scmp.ne.s32.totalorder %s109, %s112
    %p121 = scmp.eq.s32.totalorder %s15, 1
    %p122 = por %p120, %p121
    %p123 = scmp.ne.s32.totalorder %s112, %s113
    %p124 = scmp.eq.s32.totalorder %s15, 0
    %p125 = por %p123, %p124
    %p126 = scmp.ne.s32.totalorder %s112, %s113
    %p127 = scmp.eq.s32.totalorder %s16, 1
    %p128 = por %p126, %p127
    %p130 = scmp.ne.s32.totalorder %s113, %s129
    %p131 = scmp.eq.s32.totalorder %s16, 0
    %p132 = por %p130, %p131
    %p133 = scmp.le.s32.totalorder 1, %s10
    %p134 = scmp.lt.s32.totalorder %s10, 3
    %p135 = pnand %p133, %p134
    %p136 = pneg %p135
    // Predicated region
    $region9: #{fwd.8} parent=5 // pred_check
      _
    $region10: #{fwd.8} parent=5 // pred_check_branch
      %138 = sbr.rel (%p135) target = $region12
    $region11: #{fwd.8} parent=5 // pred_region
      %s139 = ssub.s32 %s10, 1
      // Predicated region
      $region13: #{fwd.8} parent=11 // pred_check
        %p140 = pneg %p57
      $region14: #{fwd.8} parent=11 // pred_check_branch
        %142 = sbr.rel (%p140) target = $region16
      $region15: #{fwd.8} parent=11 // pred_region
        _
      $region16: #{fwd.8} parent=11 // pred_fallthru
        _
      // Predicated region
      $region17: #{fwd.8} parent=11 // pred_check
        %p143 = pneg %p78
      $region18: #{fwd.8} parent=11 // pred_check_branch
        %145 = sbr.rel (%p143) target = $region20
      $region19: #{fwd.8} parent=11 // pred_region
        _
      $region20: #{fwd.8} parent=11 // pred_fallthru
        _
      // Predicated region
      $region21: #{fwd.8} parent=11 // pred_check
        %p146 = pneg %p99
      $region22: #{fwd.8} parent=11 // pred_check_branch
        %148 = sbr.rel (%p146) target = $region24
      $region23: #{fwd.8} parent=11 // pred_region
        _
      $region24: #{fwd.8} parent=11 // pred_fallthru
        _
    $region12: #{fwd.8} parent=5 // pred_fallthru
      _
    %p149 = scmp.lt.s32.totalorder %s10, 2
    // Predicated region
    $region25: #{fwd.8} parent=5 // pred_check
      %p150 = pneg %p149
    $region26: #{fwd.8} parent=5 // pred_check_branch
      %152 = sbr.rel (%p150) target = $region28
    $region27: #{fwd.8} parent=5 // pred_region
      // Predicated region
      $region29: #{fwd.8} parent=27 // pred_check
        %p153 = pneg %p30
      $region30: #{fwd.8} parent=27 // pred_check_branch
        %155 = sbr.rel (%p153) target = $region32
      $region31: #{fwd.8} parent=27 // pred_region
        %s156 = smul.u32 4, %s10
        %p157 = scmp.lt.s32.totalorder %s156, 7
        %s158 = scalar_select %p157, %s156, 7
        %s159 = smul.addr %s158, 18
        %s160 = smul.addr %s159, 4
        %s161 = scalar_lea.vmem %s0, %s160
        %s162 = smul.u32 4, %s10
      $region32: #{fwd.8} parent=27 // pred_fallthru
        _
    $region28: #{fwd.8} parent=5 // pred_fallthru
      _
    %p163 = scmp.le.s32.totalorder 1, %s10
    %p164 = scmp.lt.s32.totalorder %s10, 3
    %p165 = pnand %p163, %p164
    %p166 = pneg %p165
    // Predicated region
    $region33: #{fwd.8} parent=5 // pred_check
      _
    $region34: #{fwd.8} parent=5 // pred_check_branch
      %168 = sbr.rel (%p165) target = $region36
    $region35: #{fwd.8} parent=5 // pred_region
      %s169 = ssub.s32 %s10, 1
      %s170 = smul.u32 4, %s15
      %p171 = scmp.lt.s32.totalorder %s170, 7
      %s172 = scalar_select %p171, %s170, 7
      %s173 = smul.addr %s172, 18
      %s174 = smul.addr %s173, 4
      %s175 = scalar_lea.vmem %s0, %s174
      %p176 = pneg %p36
      %p177 = pneg %p33
      %p178 = pneg %p57
      %p179 = pneg %p54
      %p180 = pneg %p78
      %p181 = pneg %p75
      %p182 = pneg %p99
      %p183 = pneg %p96
      %p184 = pneg %p125
      %p185 = pneg %p122
      %p186 = scmp.lt.s32.totalorder %s15, 1
      %s187 = scalar_select %p186, %s15, 1
      %s188 = smul.addr %s187, 8
      %s189 = smul.addr %s188, 4
      %s190 = scalar_lea.vmem %s4, %s189
      %s191 = smul.u32 4, %s15
      %p192 = scmp.lt.s32.totalorder %s191, 7
      %s193 = scalar_select %p192, %s191, 7
      %s194 = smul.addr %s193, 18
      %s195 = smul.addr %s194, 4
      %s196 = scalar_lea.vmem %s0, %s195
      %s197 = smul.u32 4, %s15
      %p198 = scmp.lt.s32.totalorder %s15, 1
      %s199 = scalar_select %p198, %s15, 1
      %s200 = smul.addr %s199, 8
      %s201 = smul.addr %s200, 4
      %s202 = scalar_lea.vmem %s4, %s201
      %v204 = vld [vmem:[%s196] sm:$0xf]
      %v205 = vld [vmem:[%s196 + $0x8] sm:$0xf]
      %v206 = vld [vmem:[%s196 + $0x10] sm:$0xf]
      %v207 = vld [vmem:[%s196 + $0x18] sm:$0xf]
      %v208 = vld [vmem:[%s196 + $0x20] sm:$0xf]
      %v209 = vld [vmem:[%s196 + $0x28] sm:$0xf]
      %v210 = vld [vmem:[%s196 + $0x30] sm:$0xf]
      %v211 = vld [vmem:[%s196 + $0x38] sm:$0xf]
      %v212 = vld [vmem:[%s1] sm:$0xf]
      %v213 = vld [vmem:[%s1 + $0x4] sm:$0xf]
      %s214 = scalar_lea.vmem %s196, 72
      %v215 = vld [vmem:[%s214] sm:$0xf]
      %v216 = vld [vmem:[%s214 + $0x8] sm:$0xf]
      %v217 = vld [vmem:[%s214 + $0x10] sm:$0xf]
      %v218 = vld [vmem:[%s214 + $0x18] sm:$0xf]
      %v219 = vld [vmem:[%s214 + $0x20] sm:$0xf]
      %v220 = vld [vmem:[%s214 + $0x28] sm:$0xf]
      %v221 = vld [vmem:[%s214 + $0x30] sm:$0xf]
      %v222 = vld [vmem:[%s214 + $0x38] sm:$0xf]
      %s223 = scalar_lea.vmem %s1, 8
      %v224 = vld [vmem:[%s223] sm:$0xf]
      %v225 = vld [vmem:[%s223 + $0x4] sm:$0xf]
      %v234 = vunpack.c.l.b16 %v215
      %v235 = vunpack.c.l.b16 %v216
      %v236 = vunpack.c.l.b16 %v217
      %v237 = vunpack.c.l.b16 %v218
      %v238 = vunpack.c.l.b16 %v219
      %v239 = vunpack.c.l.b16 %v220
      %v240 = vunpack.c.l.b16 %v221
      %v241 = vunpack.c.l.b16 %v222
      %v242 = vpack.c.b16 %v235, %v234
      %v243 = vpack.c.b16 %v237, %v236
      %v244 = vpack.c.b16 %v239, %v238
      %v245 = vpack.c.b16 %v241, %v240
      %v248 = vunpack.c.l.b16 %v224
      %v249 = vunpack.c.l.b16 %v225
      %v250 = vpack.c.b16 %v249, %v248
      %vm252 = vcmask 130048
      %v254 = vsel %vm252, %v242, 0
      %v257 = vsel %vm252, %v243, 0
      %v260 = vsel %vm252, %v244, 0
      %v263 = vsel %vm252, %v245, 0
      %265 = vmatprep.subr.bf16.mxu0 0
      %266 = vmatpush1.bf16.msra.mxu0 0
      %267 = vmatprep.subr.bf16.mxu0 0
      %268 = vmatpush1.bf16.msra.mxu0 0
      %269 = vmatprep.subr.bf16.mxu0 0
      %270 = vmatpush1.bf16.msra.mxu0 0
      %271 = vmatprep.subr.bf16.mxu0 0
      %272 = vmatpush1.bf16.msra.mxu0 0
      %273 = vmatprep.subr.bf16.mxu0 0
      %274 = vmatpush1.bf16.msra.mxu0 0
      %275 = vmatprep.subr.bf16.mxu0 0
      %276 = vmatpush1.bf16.msra.mxu0 0
      %277 = vmatprep.subr.bf16.mxu0 0
      %278 = vmatpush1.bf16.msra.mxu0 0
      %279 = vmatprep.subr.bf16.mxu0 0
      %280 = vmatpush1.bf16.msra.mxu0 %v250
      %281 = vmatprep.subr.bf16.mxu0 0
      %282 = vmatpush2.bf16.msra.mxu0 0
      %283 = vmatprep.subr.bf16.mxu0 0
      %284 = vmatpush2.bf16.msra.mxu0 0
      %285 = vmatprep.subr.bf16.mxu0 0
      %286 = vmatpush2.bf16.msra.mxu0 0
      %287 = vmatprep.subr.bf16.mxu0 0
      %288 = vmatpush2.bf16.msra.mxu0 0
      %289 = vmatprep.subr.bf16.mxu0 0
      %290 = vmatpush2.bf16.msra.mxu0 0
      %291 = vmatprep.subr.bf16.mxu0 0
      %292 = vmatpush2.bf16.msra.mxu0 0
      %293 = vmatprep.subr.bf16.mxu0 0
      %294 = vmatpush2.bf16.msra.mxu0 0
      %295 = vmatprep.subr.bf16.mxu0 0
      %296 = vmatpush2.bf16.msra.mxu0 0
      %297 = vmatprep.mubr.bf16.mxu0 0
      %298 = vmatmul.mubr.bf16.gmra.mxu0 %v254
      %v299 = vpop.f32.mrf.mxu0
      %v300 = vadd.f32 0.0, %v299
      %v301 = vpop.f32.mrf.mxu0
      %v302 = vpop.f32.mrf.mxu0
      %v303 = vadd.f32 0.0, %v302
      %v304 = vpop.f32.mrf.mxu0
      %305 = vmatprep.mubr.bf16.mxu0 0
      %306 = vmatmul.mubr.bf16.gmra.mxu0 %v257
      %v307 = vpop.f32.mrf.mxu0
      %v308 = vadd.f32 0.0, %v307
      %v309 = vpop.f32.mrf.mxu0
      %v310 = vpop.f32.mrf.mxu0
      %v311 = vadd.f32 0.0, %v310
      %v312 = vpop.f32.mrf.mxu0
      %313 = vmatprep.mubr.bf16.mxu0 0
      %314 = vmatmul.mubr.bf16.gmra.mxu0 %v260
      %v315 = vpop.f32.mrf.mxu0
      %v316 = vadd.f32 0.0, %v315
      %v317 = vpop.f32.mrf.mxu0
      %v318 = vpop.f32.mrf.mxu0
      %v319 = vadd.f32 0.0, %v318
      %v320 = vpop.f32.mrf.mxu0
      %321 = vmatprep.mubr.bf16.mxu0 0
      %322 = vmatmul.mubr.bf16.gmra.mxu0 %v263
      %v323 = vpop.f32.mrf.mxu0
      %v324 = vadd.f32 0.0, %v323
      %v325 = vpop.f32.mrf.mxu0
      %v326 = vpop.f32.mrf.mxu0
      %v327 = vadd.f32 0.0, %v326
      %v328 = vpop.f32.mrf.mxu0
      %329 = vdwg.mxu0
      %v338 = vunpack.c.l.b16 %v204
      %v339 = vunpack.c.l.b16 %v205
      %v340 = vunpack.c.l.b16 %v206
      %v341 = vunpack.c.l.b16 %v207
      %v342 = vunpack.c.l.b16 %v208
      %v343 = vunpack.c.l.b16 %v209
      %v344 = vunpack.c.l.b16 %v210
      %v345 = vunpack.c.l.b16 %v211
      %v346 = vpack.c.b16 %v339, %v338
      %v347 = vpack.c.b16 %v341, %v340
      %v348 = vpack.c.b16 %v343, %v342
      %v349 = vpack.c.b16 %v345, %v344
      %v352 = vunpack.c.l.b16 %v212
      %v353 = vunpack.c.l.b16 %v213
      %v354 = vpack.c.b16 %v353, %v352
      %v357 = vsel %vm252, %v346, 0
      %v360 = vsel %vm252, %v347, 0
      %v363 = vsel %vm252, %v348, 0
      %v366 = vsel %vm252, %v349, 0
      %368 = vmatprep.subr.bf16.mxu0 0
      %369 = vmatpush1.bf16.msra.mxu0 0
      %370 = vmatprep.subr.bf16.mxu0 0
      %371 = vmatpush1.bf16.msra.mxu0 0
      %372 = vmatprep.subr.bf16.mxu0 0
      %373 = vmatpush1.bf16.msra.mxu0 0
      %374 = vmatprep.subr.bf16.mxu0 0
      %375 = vmatpush1.bf16.msra.mxu0 0
      %376 = vmatprep.subr.bf16.mxu0 0
      %377 = vmatpush1.bf16.msra.mxu0 0
      %378 = vmatprep.subr.bf16.mxu0 0
      %379 = vmatpush1.bf16.msra.mxu0 0
      %380 = vmatprep.subr.bf16.mxu0 0
      %381 = vmatpush1.bf16.msra.mxu0 0
      %382 = vmatprep.subr.bf16.mxu0 0
      %383 = vmatpush1.bf16.msra.mxu0 %v354
      %384 = vmatprep.subr.bf16.mxu0 0
      %385 = vmatpush2.bf16.msra.mxu0 0
      %386 = vmatprep.subr.bf16.mxu0 0
      %387 = vmatpush2.bf16.msra.mxu0 0
      %388 = vmatprep.subr.bf16.mxu0 0
      %389 = vmatpush2.bf16.msra.mxu0 0
      %390 = vmatprep.subr.bf16.mxu0 0
      %391 = vmatpush2.bf16.msra.mxu0 0
      %392 = vmatprep.subr.bf16.mxu0 0
      %393 = vmatpush2.bf16.msra.mxu0 0
      %394 = vmatprep.subr.bf16.mxu0 0
      %395 = vmatpush2.bf16.msra.mxu0 0
      %396 = vmatprep.subr.bf16.mxu0 0
      %397 = vmatpush2.bf16.msra.mxu0 0
      %398 = vmatprep.subr.bf16.mxu0 0
      %399 = vmatpush2.bf16.msra.mxu0 0
      %400 = vmatprep.mubr.bf16.mxu0 0
      %401 = vmatmul.mubr.bf16.gmra.mxu0 %v357
      %v402 = vpop.f32.mrf.mxu0
      %v403 = vadd.f32 %v300, %v402
      %v404 = vpop.f32.mrf.mxu0
      %v405 = vpop.f32.mrf.mxu0
      %v406 = vadd.f32 %v303, %v405
      %v407 = vpop.f32.mrf.mxu0
      %408 = vmatprep.mubr.bf16.mxu0 0
      %409 = vmatmul.mubr.bf16.gmra.mxu0 %v360
      %v410 = vpop.f32.mrf.mxu0
      %v411 = vadd.f32 %v308, %v410
      %v412 = vpop.f32.mrf.mxu0
      %v413 = vpop.f32.mrf.mxu0
      %v414 = vadd.f32 %v311, %v413
      %v415 = vpop.f32.mrf.mxu0
      %416 = vmatprep.mubr.bf16.mxu0 0
      %417 = vmatmul.mubr.bf16.gmra.mxu0 %v363
      %v418 = vpop.f32.mrf.mxu0
      %v419 = vadd.f32 %v316, %v418
      %v420 = vpop.f32.mrf.mxu0
      %v421 = vpop.f32.mrf.mxu0
      %v422 = vadd.f32 %v319, %v421
      %v423 = vpop.f32.mrf.mxu0
      %424 = vmatprep.mubr.bf16.mxu0 0
      %425 = vmatmul.mubr.bf16.gmra.mxu0 %v366
      %v426 = vpop.f32.mrf.mxu0
      %v427 = vadd.f32 %v324, %v426
      %v428 = vpop.f32.mrf.mxu0
      %v429 = vpop.f32.mrf.mxu0
      %v430 = vadd.f32 %v327, %v429
      %v431 = vpop.f32.mrf.mxu0
      %432 = vdwg.mxu0
      %v433 = vld [vmem:[%s196] sm:$0xf]
      %v434 = vld [vmem:[%s196 + $0x4] sm:$0x1]
      %v435 = vld [vmem:[%s196 + $0x8] sm:$0xf]
      %v436 = vld [vmem:[%s196 + $0xc] sm:$0x1]
      %v437 = vld [vmem:[%s196 + $0x10] sm:$0xf]
      %v438 = vld [vmem:[%s196 + $0x14] sm:$0x1]
      %v439 = vld [vmem:[%s196 + $0x18] sm:$0xf]
      %v440 = vld [vmem:[%s196 + $0x1c] sm:$0x1]
      %v441 = vld [vmem:[%s196 + $0x20] sm:$0xf]
      %v442 = vld [vmem:[%s196 + $0x24] sm:$0x1]
      %v443 = vld [vmem:[%s196 + $0x28] sm:$0xf]
      %v444 = vld [vmem:[%s196 + $0x2c] sm:$0x1]
      %v445 = vld [vmem:[%s196 + $0x30] sm:$0xf]
      %v446 = vld [vmem:[%s196 + $0x34] sm:$0x1]
      %v447 = vld [vmem:[%s196 + $0x38] sm:$0xf]
      %v448 = vld [vmem:[%s196 + $0x3c] sm:$0x1]
      %vm449 = vsmask.f32 3328
      %vm450 = vsmask.f32 7440
      %vm451 = vmor %vm449, %vm450
      %v453 = vshrl.u32 %v433, 16
      %v455 = vrot.slane %v453, 4
      %v456 = vshll.u32 %v433, 16
      %v458 = vrot.slane %v456, 5
      %v459 = vor.u32 %v455, %v458
      %v460 = vrot.slane %v459, 4
      %v462 = vshll.u32 %v434, 16
      %v464 = vrot.slane %v462, 5
      %v465 = vsel %vm451, %v460, %v464
      %v467 = vshrl.u32 %v435, 16
      %v469 = vrot.slane %v467, 4
      %v470 = vshll.u32 %v435, 16
      %v472 = vrot.slane %v470, 5
      %v473 = vor.u32 %v469, %v472
      %v474 = vrot.slane %v473, 4
      %v476 = vshll.u32 %v436, 16
      %v478 = vrot.slane %v476, 5
      %v479 = vsel %vm451, %v474, %v478
      %v481 = vshrl.u32 %v437, 16
      %v483 = vrot.slane %v481, 4
      %v484 = vshll.u32 %v437, 16
      %v486 = vrot.slane %v484, 5
      %v487 = vor.u32 %v483, %v486
      %v488 = vrot.slane %v487, 4
      %v490 = vshll.u32 %v438, 16
      %v492 = vrot.slane %v490, 5
      %v493 = vsel %vm451, %v488, %v492
      %v495 = vshrl.u32 %v439, 16
      %v497 = vrot.slane %v495, 4
      %v498 = vshll.u32 %v439, 16
      %v500 = vrot.slane %v498, 5
      %v501 = vor.u32 %v497, %v500
      %v502 = vrot.slane %v501, 4
      %v504 = vshll.u32 %v440, 16
      %v506 = vrot.slane %v504, 5
      %v507 = vsel %vm451, %v502, %v506
      %v509 = vshrl.u32 %v441, 16
      %v511 = vrot.slane %v509, 4
      %v512 = vshll.u32 %v441, 16
      %v514 = vrot.slane %v512, 5
      %v515 = vor.u32 %v511, %v514
      %v516 = vrot.slane %v515, 4
      %v518 = vshll.u32 %v442, 16
      %v520 = vrot.slane %v518, 5
      %v521 = vsel %vm451, %v516, %v520
      %v523 = vshrl.u32 %v443, 16
      %v525 = vrot.slane %v523, 4
      %v526 = vshll.u32 %v443, 16
      %v528 = vrot.slane %v526, 5
      %v529 = vor.u32 %v525, %v528
      %v530 = vrot.slane %v529, 4
      %v532 = vshll.u32 %v444, 16
      %v534 = vrot.slane %v532, 5
      %v535 = vsel %vm451, %v530, %v534
      %v537 = vshrl.u32 %v445, 16
      %v539 = vrot.slane %v537, 4
      %v540 = vshll.u32 %v445, 16
      %v542 = vrot.slane %v540, 5
      %v543 = vor.u32 %v539, %v542
      %v544 = vrot.slane %v543, 4
      %v546 = vshll.u32 %v446, 16
      %v548 = vrot.slane %v546, 5
      %v549 = vsel %vm451, %v544, %v548
      %v551 = vshrl.u32 %v447, 16
      %v553 = vrot.slane %v551, 4
      %v554 = vshll.u32 %v447, 16
      %v556 = vrot.slane %v554, 5
      %v557 = vor.u32 %v553, %v556
      %v558 = vrot.slane %v557, 4
      %v560 = vshll.u32 %v448, 16
      %v562 = vrot.slane %v560, 5
      %v563 = vsel %vm451, %v558, %v562
      %s564 = scalar_lea.vmem %s1, 16
      %v565 = vld [vmem:[%s564] sm:$0xf]
      %v566 = vld [vmem:[%s564 + $0x4] sm:$0xf]
      %v567 = vunpack.c.l.b16 %v465
      %v568 = vunpack.c.l.b16 %v479
      %v569 = vunpack.c.l.b16 %v493
      %v570 = vunpack.c.l.b16 %v507
      %v571 = vunpack.c.l.b16 %v521
      %v572 = vunpack.c.l.b16 %v535
      %v573 = vunpack.c.l.b16 %v549
      %v574 = vunpack.c.l.b16 %v563
      %v575 = vpack.c.b16 %v568, %v567
      %v576 = vpack.c.b16 %v570, %v569
      %v577 = vpack.c.b16 %v572, %v571
      %v578 = vpack.c.b16 %v574, %v573
      %v581 = vunpack.c.l.b16 %v565
      %v582 = vunpack.c.l.b16 %v566
      %v583 = vpack.c.b16 %v582, %v581
      %v586 = vsel %vm252, %v575, 0
      %v589 = vsel %vm252, %v576, 0
      %v592 = vsel %vm252, %v577, 0
      %v595 = vsel %vm252, %v578, 0
      %597 = vmatprep.subr.bf16.mxu0 0
      %598 = vmatpush1.bf16.msra.mxu0 0
      %599 = vmatprep.subr.bf16.mxu0 0
      %600 = vmatpush1.bf16.msra.mxu0 0
      %601 = vmatprep.subr.bf16.mxu0 0
      %602 = vmatpush1.bf16.msra.mxu0 0
      %603 = vmatprep.subr.bf16.mxu0 0
      %604 = vmatpush1.bf16.msra.mxu0 0
      %605 = vmatprep.subr.bf16.mxu0 0
      %606 = vmatpush1.bf16.msra.mxu0 0
      %607 = vmatprep.subr.bf16.mxu0 0
      %608 = vmatpush1.bf16.msra.mxu0 0
      %609 = vmatprep.subr.bf16.mxu0 0
      %610 = vmatpush1.bf16.msra.mxu0 0
      %611 = vmatprep.subr.bf16.mxu0 0
      %612 = vmatpush1.bf16.msra.mxu0 %v583
      %613 = vmatprep.subr.bf16.mxu0 0
      %614 = vmatpush2.bf16.msra.mxu0 0
      %615 = vmatprep.subr.bf16.mxu0 0
      %616 = vmatpush2.bf16.msra.mxu0 0
      %617 = vmatprep.subr.bf16.mxu0 0
      %618 = vmatpush2.bf16.msra.mxu0 0
      %619 = vmatprep.subr.bf16.mxu0 0
      %620 = vmatpush2.bf16.msra.mxu0 0
      %621 = vmatprep.subr.bf16.mxu0 0
      %622 = vmatpush2.bf16.msra.mxu0 0
      %623 = vmatprep.subr.bf16.mxu0 0
      %624 = vmatpush2.bf16.msra.mxu0 0
      %625 = vmatprep.subr.bf16.mxu0 0
      %626 = vmatpush2.bf16.msra.mxu0 0
      %627 = vmatprep.subr.bf16.mxu0 0
      %628 = vmatpush2.bf16.msra.mxu0 0
      %629 = vmatprep.mubr.bf16.mxu0 0
      %630 = vmatmul.mubr.bf16.gmra.mxu0 %v586
      %v631 = vpop.f32.mrf.mxu0
      %v632 = vadd.f32 0.0, %v631
      %v633 = vpop.f32.mrf.mxu0
      %v634 = vpop.f32.mrf.mxu0
      %v635 = vadd.f32 0.0, %v634
      %v636 = vpop.f32.mrf.mxu0
      %637 = vmatprep.mubr.bf16.mxu0 0
      %638 = vmatmul.mubr.bf16.gmra.mxu0 %v589
      %v639 = vpop.f32.mrf.mxu0
      %v640 = vadd.f32 0.0, %v639
      %v641 = vpop.f32.mrf.mxu0
      %v642 = vpop.f32.mrf.mxu0
      %v643 = vadd.f32 0.0, %v642
      %v644 = vpop.f32.mrf.mxu0
      %645 = vmatprep.mubr.bf16.mxu0 0
      %646 = vmatmul.mubr.bf16.gmra.mxu0 %v592
      %v647 = vpop.f32.mrf.mxu0
      %v648 = vadd.f32 0.0, %v647
      %v649 = vpop.f32.mrf.mxu0
      %v650 = vpop.f32.mrf.mxu0
      %v651 = vadd.f32 0.0, %v650
      %v652 = vpop.f32.mrf.mxu0
      %653 = vmatprep.mubr.bf16.mxu0 0
      %654 = vmatmul.mubr.bf16.gmra.mxu0 %v595
      %v655 = vpop.f32.mrf.mxu0
      %v656 = vadd.f32 0.0, %v655
      %v657 = vpop.f32.mrf.mxu0
      %v658 = vpop.f32.mrf.mxu0
      %v659 = vadd.f32 0.0, %v658
      %v660 = vpop.f32.mrf.mxu0
      %661 = vdwg.mxu0
      %v662 = vadd.f32 %v403, %v632
      %v663 = vadd.f32 %v406, %v635
      %v664 = vadd.f32 %v411, %v640
      %v665 = vadd.f32 %v414, %v643
      %v666 = vadd.f32 %v419, %v648
      %v667 = vadd.f32 %v422, %v651
      %v668 = vadd.f32 %v427, %v656
      %v669 = vadd.f32 %v430, %v659
      %s670 = scalar_lea.vmem %s196, 144
      %v671 = vld [vmem:[%s670] sm:$0xf]
      %v672 = vld [vmem:[%s670 + $0x8] sm:$0xf]
      %v673 = vld [vmem:[%s670 + $0x10] sm:$0xf]
      %v674 = vld [vmem:[%s670 + $0x18] sm:$0xf]
      %v675 = vld [vmem:[%s670 + $0x20] sm:$0xf]
      %v676 = vld [vmem:[%s670 + $0x28] sm:$0xf]
      %v677 = vld [vmem:[%s670 + $0x30] sm:$0xf]
      %v678 = vld [vmem:[%s670 + $0x38] sm:$0xf]
      %s679 = scalar_lea.vmem %s1, 24
      %v680 = vld [vmem:[%s679] sm:$0xf]
      %v681 = vld [vmem:[%s679 + $0x4] sm:$0xf]
      %v690 = vunpack.c.l.b16 %v671
      %v691 = vunpack.c.l.b16 %v672
      %v692 = vunpack.c.l.b16 %v673
      %v693 = vunpack.c.l.b16 %v674
      %v694 = vunpack.c.l.b16 %v675
      %v695 = vunpack.c.l.b16 %v676
      %v696 = vunpack.c.l.b16 %v677
      %v697 = vunpack.c.l.b16 %v678
      %v698 = vpack.c.b16 %v691, %v690
      %v699 = vpack.c.b16 %v693, %v692
      %v700 = vpack.c.b16 %v695, %v694
      %v701 = vpack.c.b16 %v697, %v696
      %v704 = vunpack.c.l.b16 %v680
      %v705 = vunpack.c.l.b16 %v681
      %v706 = vpack.c.b16 %v705, %v704
      %v709 = vsel %vm252, %v698, 0
      %v712 = vsel %vm252, %v699, 0
      %v715 = vsel %vm252, %v700, 0
      %v718 = vsel %vm252, %v701, 0
      %720 = vmatprep.subr.bf16.mxu0 0
      %721 = vmatpush1.bf16.msra.mxu0 0
      %722 = vmatprep.subr.bf16.mxu0 0
      %723 = vmatpush1.bf16.msra.mxu0 0
      %724 = vmatprep.subr.bf16.mxu0 0
      %725 = vmatpush1.bf16.msra.mxu0 0
      %726 = vmatprep.subr.bf16.mxu0 0
      %727 = vmatpush1.bf16.msra.mxu0 0
      %728 = vmatprep.subr.bf16.mxu0 0
      %729 = vmatpush1.bf16.msra.mxu0 0
      %730 = vmatprep.subr.bf16.mxu0 0
      %731 = vmatpush1.bf16.msra.mxu0 0
      %732 = vmatprep.subr.bf16.mxu0 0
      %733 = vmatpush1.bf16.msra.mxu0 0
      %734 = vmatprep.subr.bf16.mxu0 0
      %735 = vmatpush1.bf16.msra.mxu0 %v706
      %736 = vmatprep.subr.bf16.mxu0 0
      %737 = vmatpush2.bf16.msra.mxu0 0
      %738 = vmatprep.subr.bf16.mxu0 0
      %739 = vmatpush2.bf16.msra.mxu0 0
      %740 = vmatprep.subr.bf16.mxu0 0
      %741 = vmatpush2.bf16.msra.mxu0 0
      %742 = vmatprep.subr.bf16.mxu0 0
      %743 = vmatpush2.bf16.msra.mxu0 0
      %744 = vmatprep.subr.bf16.mxu0 0
      %745 = vmatpush2.bf16.msra.mxu0 0
      %746 = vmatprep.subr.bf16.mxu0 0
      %747 = vmatpush2.bf16.msra.mxu0 0
      %748 = vmatprep.subr.bf16.mxu0 0
      %749 = vmatpush2.bf16.msra.mxu0 0
      %750 = vmatprep.subr.bf16.mxu0 0
      %751 = vmatpush2.bf16.msra.mxu0 0
      %752 = vmatprep.mubr.bf16.mxu0 0
      %753 = vmatmul.mubr.bf16.gmra.mxu0 %v709
      %v754 = vpop.f32.mrf.mxu0
      %v755 = vadd.f32 0.0, %v754
      %v756 = vpop.f32.mrf.mxu0
      %v757 = vpop.f32.mrf.mxu0
      %v758 = vadd.f32 0.0, %v757
      %v759 = vpop.f32.mrf.mxu0
      %760 = vmatprep.mubr.bf16.mxu0 0
      %761 = vmatmul.mubr.bf16.gmra.mxu0 %v712
      %v762 = vpop.f32.mrf.mxu0
      %v763 = vadd.f32 0.0, %v762
      %v764 = vpop.f32.mrf.mxu0
      %v765 = vpop.f32.mrf.mxu0
      %v766 = vadd.f32 0.0, %v765
      %v767 = vpop.f32.mrf.mxu0
      %768 = vmatprep.mubr.bf16.mxu0 0
      %769 = vmatmul.mubr.bf16.gmra.mxu0 %v715
      %v770 = vpop.f32.mrf.mxu0
      %v771 = vadd.f32 0.0, %v770
      %v772 = vpop.f32.mrf.mxu0
      %v773 = vpop.f32.mrf.mxu0
      %v774 = vadd.f32 0.0, %v773
      %v775 = vpop.f32.mrf.mxu0
      %776 = vmatprep.mubr.bf16.mxu0 0
      %777 = vmatmul.mubr.bf16.gmra.mxu0 %v718
      %v778 = vpop.f32.mrf.mxu0
      %v779 = vadd.f32 0.0, %v778
      %v780 = vpop.f32.mrf.mxu0
      %v781 = vpop.f32.mrf.mxu0
      %v782 = vadd.f32 0.0, %v781
      %v783 = vpop.f32.mrf.mxu0
      %784 = vdwg.mxu0
      %v785 = vadd.f32 %v662, %v755
      %v786 = vadd.f32 %v663, %v758
      %v787 = vadd.f32 %v664, %v763
      %v788 = vadd.f32 %v665, %v766
      %v789 = vadd.f32 %v666, %v771
      %v790 = vadd.f32 %v667, %v774
      %v791 = vadd.f32 %v668, %v779
      %v792 = vadd.f32 %v669, %v782
      %s793 = scalar_lea.vmem %s196, 216
      %v794 = vld [vmem:[%s793] sm:$0xf]
      %v795 = vld [vmem:[%s793 + $0x8] sm:$0xf]
      %v796 = vld [vmem:[%s793 + $0x10] sm:$0xf]
      %v797 = vld [vmem:[%s793 + $0x18] sm:$0xf]
      %v798 = vld [vmem:[%s793 + $0x20] sm:$0xf]
      %v799 = vld [vmem:[%s793 + $0x28] sm:$0xf]
      %v800 = vld [vmem:[%s793 + $0x30] sm:$0xf]
      %v801 = vld [vmem:[%s793 + $0x38] sm:$0xf]
      %s802 = scalar_lea.vmem %s1, 32
      %v803 = vld [vmem:[%s802] sm:$0xf]
      %v804 = vld [vmem:[%s802 + $0x4] sm:$0xf]
      %v813 = vunpack.c.l.b16 %v794
      %v814 = vunpack.c.l.b16 %v795
      %v815 = vunpack.c.l.b16 %v796
      %v816 = vunpack.c.l.b16 %v797
      %v817 = vunpack.c.l.b16 %v798
      %v818 = vunpack.c.l.b16 %v799
      %v819 = vunpack.c.l.b16 %v800
      %v820 = vunpack.c.l.b16 %v801
      %v821 = vpack.c.b16 %v814, %v813
      %v822 = vpack.c.b16 %v816, %v815
      %v823 = vpack.c.b16 %v818, %v817
      %v824 = vpack.c.b16 %v820, %v819
      %v827 = vunpack.c.l.b16 %v803
      %v828 = vunpack.c.l.b16 %v804
      %v829 = vpack.c.b16 %v828, %v827
      %v832 = vsel %vm252, %v821, 0
      %v835 = vsel %vm252, %v822, 0
      %v838 = vsel %vm252, %v823, 0
      %v841 = vsel %vm252, %v824, 0
      %843 = vmatprep.subr.bf16.mxu0 0
      %844 = vmatpush1.bf16.msra.mxu0 0
      %845 = vmatprep.subr.bf16.mxu0 0
      %846 = vmatpush1.bf16.msra.mxu0 0
      %847 = vmatprep.subr.bf16.mxu0 0
      %848 = vmatpush1.bf16.msra.mxu0 0
      %849 = vmatprep.subr.bf16.mxu0 0
      %850 = vmatpush1.bf16.msra.mxu0 0
      %851 = vmatprep.subr.bf16.mxu0 0
      %852 = vmatpush1.bf16.msra.mxu0 0
      %853 = vmatprep.subr.bf16.mxu0 0
      %854 = vmatpush1.bf16.msra.mxu0 0
      %855 = vmatprep.subr.bf16.mxu0 0
      %856 = vmatpush1.bf16.msra.mxu0 0
      %857 = vmatprep.subr.bf16.mxu0 0
      %858 = vmatpush1.bf16.msra.mxu0 %v829
      %859 = vmatprep.subr.bf16.mxu0 0
      %860 = vmatpush2.bf16.msra.mxu0 0
      %861 = vmatprep.subr.bf16.mxu0 0
      %862 = vmatpush2.bf16.msra.mxu0 0
      %863 = vmatprep.subr.bf16.mxu0 0
      %864 = vmatpush2.bf16.msra.mxu0 0
      %865 = vmatprep.subr.bf16.mxu0 0
      %866 = vmatpush2.bf16.msra.mxu0 0
      %867 = vmatprep.subr.bf16.mxu0 0
      %868 = vmatpush2.bf16.msra.mxu0 0
      %869 = vmatprep.subr.bf16.mxu0 0
      %870 = vmatpush2.bf16.msra.mxu0 0
      %871 = vmatprep.subr.bf16.mxu0 0
      %872 = vmatpush2.bf16.msra.mxu0 0
      %873 = vmatprep.subr.bf16.mxu0 0
      %874 = vmatpush2.bf16.msra.mxu0 0
      %875 = vmatprep.mubr.bf16.mxu0 0
      %876 = vmatmul.mubr.bf16.gmra.mxu0 %v832
      %v877 = vpop.f32.mrf.mxu0
      %v878 = vadd.f32 0.0, %v877
      %v879 = vpop.f32.mrf.mxu0
      %v880 = vpop.f32.mrf.mxu0
      %v881 = vadd.f32 0.0, %v880
      %v882 = vpop.f32.mrf.mxu0
      %883 = vmatprep.mubr.bf16.mxu0 0
      %884 = vmatmul.mubr.bf16.gmra.mxu0 %v835
      %v885 = vpop.f32.mrf.mxu0
      %v886 = vadd.f32 0.0, %v885
      %v887 = vpop.f32.mrf.mxu0
      %v888 = vpop.f32.mrf.mxu0
      %v889 = vadd.f32 0.0, %v888
      %v890 = vpop.f32.mrf.mxu0
      %891 = vmatprep.mubr.bf16.mxu0 0
      %892 = vmatmul.mubr.bf16.gmra.mxu0 %v838
      %v893 = vpop.f32.mrf.mxu0
      %v894 = vadd.f32 0.0, %v893
      %v895 = vpop.f32.mrf.mxu0
      %v896 = vpop.f32.mrf.mxu0
      %v897 = vadd.f32 0.0, %v896
      %v898 = vpop.f32.mrf.mxu0
      %899 = vmatprep.mubr.bf16.mxu0 0
      %900 = vmatmul.mubr.bf16.gmra.mxu0 %v841
      %v901 = vpop.f32.mrf.mxu0
      %v902 = vadd.f32 0.0, %v901
      %v903 = vpop.f32.mrf.mxu0
      %v904 = vpop.f32.mrf.mxu0
      %v905 = vadd.f32 0.0, %v904
      %v906 = vpop.f32.mrf.mxu0
      %907 = vdwg.mxu0
      %v908 = vadd.f32 %v785, %v878
      %v909 = vadd.f32 %v786, %v881
      %v910 = vadd.f32 %v787, %v886
      %v911 = vadd.f32 %v788, %v889
      %v912 = vadd.f32 %v789, %v894
      %v913 = vadd.f32 %v790, %v897
      %v914 = vadd.f32 %v791, %v902
      %v915 = vadd.f32 %v792, %v905
      %v916 = vld [vmem:[%s670] sm:$0xf]
      %v917 = vld [vmem:[%s670 + $0x4] sm:$0x1]
      %v918 = vld [vmem:[%s670 + $0x8] sm:$0xf]
      %v919 = vld [vmem:[%s670 + $0xc] sm:$0x1]
      %v920 = vld [vmem:[%s670 + $0x10] sm:$0xf]
      %v921 = vld [vmem:[%s670 + $0x14] sm:$0x1]
      %v922 = vld [vmem:[%s670 + $0x18] sm:$0xf]
      %v923 = vld [vmem:[%s670 + $0x1c] sm:$0x1]
      %v924 = vld [vmem:[%s670 + $0x20] sm:$0xf]
      %v925 = vld [vmem:[%s670 + $0x24] sm:$0x1]
      %v926 = vld [vmem:[%s670 + $0x28] sm:$0xf]
      %v927 = vld [vmem:[%s670 + $0x2c] sm:$0x1]
      %v928 = vld [vmem:[%s670 + $0x30] sm:$0xf]
      %v929 = vld [vmem:[%s670 + $0x34] sm:$0x1]
      %v930 = vld [vmem:[%s670 + $0x38] sm:$0xf]
      %v931 = vld [vmem:[%s670 + $0x3c] sm:$0x1]
      %v933 = vshrl.u32 %v916, 16
      %v935 = vrot.slane %v933, 4
      %v936 = vshll.u32 %v916, 16
      %v938 = vrot.slane %v936, 5
      %v939 = vor.u32 %v935, %v938
      %v940 = vrot.slane %v939, 4
      %v942 = vshll.u32 %v917, 16
      %v944 = vrot.slane %v942, 5
      %v945 = vsel %vm451, %v940, %v944
      %v947 = vshrl.u32 %v918, 16
      %v949 = vrot.slane %v947, 4
      %v950 = vshll.u32 %v918, 16
      %v952 = vrot.slane %v950, 5
      %v953 = vor.u32 %v949, %v952
      %v954 = vrot.slane %v953, 4
      %v956 = vshll.u32 %v919, 16
      %v958 = vrot.slane %v956, 5
      %v959 = vsel %vm451, %v954, %v958
      %v961 = vshrl.u32 %v920, 16
      %v963 = vrot.slane %v961, 4
      %v964 = vshll.u32 %v920, 16
      %v966 = vrot.slane %v964, 5
      %v967 = vor.u32 %v963, %v966
      %v968 = vrot.slane %v967, 4
      %v970 = vshll.u32 %v921, 16
      %v972 = vrot.slane %v970, 5
      %v973 = vsel %vm451, %v968, %v972
      %v975 = vshrl.u32 %v922, 16
      %v977 = vrot.slane %v975, 4
      %v978 = vshll.u32 %v922, 16
      %v980 = vrot.slane %v978, 5
      %v981 = vor.u32 %v977, %v980
      %v982 = vrot.slane %v981, 4
      %v984 = vshll.u32 %v923, 16
      %v986 = vrot.slane %v984, 5
      %v987 = vsel %vm451, %v982, %v986
      %v989 = vshrl.u32 %v924, 16
      %v991 = vrot.slane %v989, 4
      %v992 = vshll.u32 %v924, 16
      %v994 = vrot.slane %v992, 5
      %v995 = vor.u32 %v991, %v994
      %v996 = vrot.slane %v995, 4
      %v998 = vshll.u32 %v925, 16
      %v1000 = vrot.slane %v998, 5
      %v1001 = vsel %vm451, %v996, %v1000
      %v1003 = vshrl.u32 %v926, 16
      %v1005 = vrot.slane %v1003, 4
      %v1006 = vshll.u32 %v926, 16
      %v1008 = vrot.slane %v1006, 5
      %v1009 = vor.u32 %v1005, %v1008
      %v1010 = vrot.slane %v1009, 4
      %v1012 = vshll.u32 %v927, 16
      %v1014 = vrot.slane %v1012, 5
      %v1015 = vsel %vm451, %v1010, %v1014
      %v1017 = vshrl.u32 %v928, 16
      %v1019 = vrot.slane %v1017, 4
      %v1020 = vshll.u32 %v928, 16
      %v1022 = vrot.slane %v1020, 5
      %v1023 = vor.u32 %v1019, %v1022
      %v1024 = vrot.slane %v1023, 4
      %v1026 = vshll.u32 %v929, 16
      %v1028 = vrot.slane %v1026, 5
      %v1029 = vsel %vm451, %v1024, %v1028
      %v1031 = vshrl.u32 %v930, 16
      %v1033 = vrot.slane %v1031, 4
      %v1034 = vshll.u32 %v930, 16
      %v1036 = vrot.slane %v1034, 5
      %v1037 = vor.u32 %v1033, %v1036
      %v1038 = vrot.slane %v1037, 4
      %v1040 = vshll.u32 %v931, 16
      %v1042 = vrot.slane %v1040, 5
      %v1043 = vsel %vm451, %v1038, %v1042
      %s1044 = scalar_lea.vmem %s1, 40
      %v1045 = vld [vmem:[%s1044] sm:$0xf]
      %v1046 = vld [vmem:[%s1044 + $0x4] sm:$0xf]
      %v1047 = vunpack.c.l.b16 %v945
      %v1048 = vunpack.c.l.b16 %v959
      %v1049 = vunpack.c.l.b16 %v973
      %v1050 = vunpack.c.l.b16 %v987
      %v1051 = vunpack.c.l.b16 %v1001
      %v1052 = vunpack.c.l.b16 %v1015
      %v1053 = vunpack.c.l.b16 %v1029
      %v1054 = vunpack.c.l.b16 %v1043
      %v1055 = vpack.c.b16 %v1048, %v1047
      %v1056 = vpack.c.b16 %v1050, %v1049
      %v1057 = vpack.c.b16 %v1052, %v1051
      %v1058 = vpack.c.b16 %v1054, %v1053
      %v1061 = vunpack.c.l.b16 %v1045
      %v1062 = vunpack.c.l.b16 %v1046
      %v1063 = vpack.c.b16 %v1062, %v1061
      %v1066 = vsel %vm252, %v1055, 0
      %v1069 = vsel %vm252, %v1056, 0
      %v1072 = vsel %vm252, %v1057, 0
      %v1075 = vsel %vm252, %v1058, 0
      %1077 = vmatprep.subr.bf16.mxu0 0
      %1078 = vmatpush1.bf16.msra.mxu0 0
      %1079 = vmatprep.subr.bf16.mxu0 0
      %1080 = vmatpush1.bf16.msra.mxu0 0
      %1081 = vmatprep.subr.bf16.mxu0 0
      %1082 = vmatpush1.bf16.msra.mxu0 0
      %1083 = vmatprep.subr.bf16.mxu0 0
      %1084 = vmatpush1.bf16.msra.mxu0 0
      %1085 = vmatprep.subr.bf16.mxu0 0
      %1086 = vmatpush1.bf16.msra.mxu0 0
      %1087 = vmatprep.subr.bf16.mxu0 0
      %1088 = vmatpush1.bf16.msra.mxu0 0
      %1089 = vmatprep.subr.bf16.mxu0 0
      %1090 = vmatpush1.bf16.msra.mxu0 0
      %1091 = vmatprep.subr.bf16.mxu0 0
      %1092 = vmatpush1.bf16.msra.mxu0 %v1063
      %1093 = vmatprep.subr.bf16.mxu0 0
      %1094 = vmatpush2.bf16.msra.mxu0 0
      %1095 = vmatprep.subr.bf16.mxu0 0
      %1096 = vmatpush2.bf16.msra.mxu0 0
      %1097 = vmatprep.subr.bf16.mxu0 0
      %1098 = vmatpush2.bf16.msra.mxu0 0
      %1099 = vmatprep.subr.bf16.mxu0 0
      %1100 = vmatpush2.bf16.msra.mxu0 0
      %1101 = vmatprep.subr.bf16.mxu0 0
      %1102 = vmatpush2.bf16.msra.mxu0 0
      %1103 = vmatprep.subr.bf16.mxu0 0
      %1104 = vmatpush2.bf16.msra.mxu0 0
      %1105 = vmatprep.subr.bf16.mxu0 0
      %1106 = vmatpush2.bf16.msra.mxu0 0
      %1107 = vmatprep.subr.bf16.mxu0 0
      %1108 = vmatpush2.bf16.msra.mxu0 0
      %1109 = vmatprep.mubr.bf16.mxu0 0
      %1110 = vmatmul.mubr.bf16.gmra.mxu0 %v1066
      %v1111 = vpop.f32.mrf.mxu0
      %v1112 = vadd.f32 0.0, %v1111
      %v1113 = vpop.f32.mrf.mxu0
      %v1114 = vpop.f32.mrf.mxu0
      %v1115 = vadd.f32 0.0, %v1114
      %v1116 = vpop.f32.mrf.mxu0
      %1117 = vmatprep.mubr.bf16.mxu0 0
      %1118 = vmatmul.mubr.bf16.gmra.mxu0 %v1069
      %v1119 = vpop.f32.mrf.mxu0
      %v1120 = vadd.f32 0.0, %v1119
      %v1121 = vpop.f32.mrf.mxu0
      %v1122 = vpop.f32.mrf.mxu0
      %v1123 = vadd.f32 0.0, %v1122
      %v1124 = vpop.f32.mrf.mxu0
      %1125 = vmatprep.mubr.bf16.mxu0 0
      %1126 = vmatmul.mubr.bf16.gmra.mxu0 %v1072
      %v1127 = vpop.f32.mrf.mxu0
      %v1128 = vadd.f32 0.0, %v1127
      %v1129 = vpop.f32.mrf.mxu0
      %v1130 = vpop.f32.mrf.mxu0
      %v1131 = vadd.f32 0.0, %v1130
      %v1132 = vpop.f32.mrf.mxu0
      %1133 = vmatprep.mubr.bf16.mxu0 0
      %1134 = vmatmul.mubr.bf16.gmra.mxu0 %v1075
      %v1135 = vpop.f32.mrf.mxu0
      %v1136 = vadd.f32 0.0, %v1135
      %v1137 = vpop.f32.mrf.mxu0
      %v1138 = vpop.f32.mrf.mxu0
      %v1139 = vadd.f32 0.0, %v1138
      %v1140 = vpop.f32.mrf.mxu0
      %1141 = vdwg.mxu0
      %v1142 = vadd.f32 %v908, %v1112
      %v1143 = vadd.f32 %v909, %v1115
      %v1144 = vadd.f32 %v910, %v1120
      %v1145 = vadd.f32 %v911, %v1123
      %v1146 = vadd.f32 %v912, %v1128
      %v1147 = vadd.f32 %v913, %v1131
      %v1148 = vadd.f32 %v914, %v1136
      %v1149 = vadd.f32 %v915, %v1139
      %s1150 = scalar_lea.vmem %s196, 8
      %v1151 = vld [vmem:[%s1150] sm:$0xf]
      %v1152 = vld [vmem:[%s1150 + $0x8] sm:$0xf]
      %v1153 = vld [vmem:[%s1150 + $0x10] sm:$0xf]
      %v1154 = vld [vmem:[%s1150 + $0x18] sm:$0xf]
      %v1155 = vld [vmem:[%s1150 + $0x20] sm:$0xf]
      %v1156 = vld [vmem:[%s1150 + $0x28] sm:$0xf]
      %v1157 = vld [vmem:[%s1150 + $0x30] sm:$0xf]
      %v1158 = vld [vmem:[%s1150 + $0x38] sm:$0xf]
      %s1159 = scalar_lea.vmem %s1, 48
      %v1160 = vld [vmem:[%s1159] sm:$0xf]
      %v1161 = vld [vmem:[%s1159 + $0x4] sm:$0xf]
      %v1170 = vunpack.c.l.b16 %v1151
      %v1171 = vunpack.c.l.b16 %v1152
      %v1172 = vunpack.c.l.b16 %v1153
      %v1173 = vunpack.c.l.b16 %v1154
      %v1174 = vunpack.c.l.b16 %v1155
      %v1175 = vunpack.c.l.b16 %v1156
      %v1176 = vunpack.c.l.b16 %v1157
      %v1177 = vunpack.c.l.b16 %v1158
      %v1178 = vpack.c.b16 %v1171, %v1170
      %v1179 = vpack.c.b16 %v1173, %v1172
      %v1180 = vpack.c.b16 %v1175, %v1174
      %v1181 = vpack.c.b16 %v1177, %v1176
      %v1184 = vunpack.c.l.b16 %v1160
      %v1185 = vunpack.c.l.b16 %v1161
      %v1186 = vpack.c.b16 %v1185, %v1184
      %v1189 = vsel %vm252, %v1178, 0
      %v1192 = vsel %vm252, %v1179, 0
      %v1195 = vsel %vm252, %v1180, 0
      %v1198 = vsel %vm252, %v1181, 0
      %1200 = vmatprep.subr.bf16.mxu0 0
      %1201 = vmatpush1.bf16.msra.mxu0 0
      %1202 = vmatprep.subr.bf16.mxu0 0
      %1203 = vmatpush1.bf16.msra.mxu0 0
      %1204 = vmatprep.subr.bf16.mxu0 0
      %1205 = vmatpush1.bf16.msra.mxu0 0
      %1206 = vmatprep.subr.bf16.mxu0 0
      %1207 = vmatpush1.bf16.msra.mxu0 0
      %1208 = vmatprep.subr.bf16.mxu0 0
      %1209 = vmatpush1.bf16.msra.mxu0 0
      %1210 = vmatprep.subr.bf16.mxu0 0
      %1211 = vmatpush1.bf16.msra.mxu0 0
      %1212 = vmatprep.subr.bf16.mxu0 0
      %1213 = vmatpush1.bf16.msra.mxu0 0
      %1214 = vmatprep.subr.bf16.mxu0 0
      %1215 = vmatpush1.bf16.msra.mxu0 %v1186
      %1216 = vmatprep.subr.bf16.mxu0 0
      %1217 = vmatpush2.bf16.msra.mxu0 0
      %1218 = vmatprep.subr.bf16.mxu0 0
      %1219 = vmatpush2.bf16.msra.mxu0 0
      %1220 = vmatprep.subr.bf16.mxu0 0
      %1221 = vmatpush2.bf16.msra.mxu0 0
      %1222 = vmatprep.subr.bf16.mxu0 0
      %1223 = vmatpush2.bf16.msra.mxu0 0
      %1224 = vmatprep.subr.bf16.mxu0 0
      %1225 = vmatpush2.bf16.msra.mxu0 0
      %1226 = vmatprep.subr.bf16.mxu0 0
      %1227 = vmatpush2.bf16.msra.mxu0 0
      %1228 = vmatprep.subr.bf16.mxu0 0
      %1229 = vmatpush2.bf16.msra.mxu0 0
      %1230 = vmatprep.subr.bf16.mxu0 0
      %1231 = vmatpush2.bf16.msra.mxu0 0
      %1232 = vmatprep.mubr.bf16.mxu0 0
      %1233 = vmatmul.mubr.bf16.gmra.mxu0 %v1189
      %v1234 = vpop.f32.mrf.mxu0
      %v1235 = vadd.f32 0.0, %v1234
      %v1236 = vpop.f32.mrf.mxu0
      %v1237 = vpop.f32.mrf.mxu0
      %v1238 = vadd.f32 0.0, %v1237
      %v1239 = vpop.f32.mrf.mxu0
      %1240 = vmatprep.mubr.bf16.mxu0 0
      %1241 = vmatmul.mubr.bf16.gmra.mxu0 %v1192
      %v1242 = vpop.f32.mrf.mxu0
      %v1243 = vadd.f32 0.0, %v1242
      %v1244 = vpop.f32.mrf.mxu0
      %v1245 = vpop.f32.mrf.mxu0
      %v1246 = vadd.f32 0.0, %v1245
      %v1247 = vpop.f32.mrf.mxu0
      %1248 = vmatprep.mubr.bf16.mxu0 0
      %1249 = vmatmul.mubr.bf16.gmra.mxu0 %v1195
      %v1250 = vpop.f32.mrf.mxu0
      %v1251 = vadd.f32 0.0, %v1250
      %v1252 = vpop.f32.mrf.mxu0
      %v1253 = vpop.f32.mrf.mxu0
      %v1254 = vadd.f32 0.0, %v1253
      %v1255 = vpop.f32.mrf.mxu0
      %1256 = vmatprep.mubr.bf16.mxu0 0
      %1257 = vmatmul.mubr.bf16.gmra.mxu0 %v1198
      %v1258 = vpop.f32.mrf.mxu0
      %v1259 = vadd.f32 0.0, %v1258
      %v1260 = vpop.f32.mrf.mxu0
      %v1261 = vpop.f32.mrf.mxu0
      %v1262 = vadd.f32 0.0, %v1261
      %v1263 = vpop.f32.mrf.mxu0
      %1264 = vdwg.mxu0
      %v1265 = vadd.f32 %v1142, %v1235
      %v1266 = vadd.f32 %v1143, %v1238
      %v1267 = vadd.f32 %v1144, %v1243
      %v1268 = vadd.f32 %v1145, %v1246
      %v1269 = vadd.f32 %v1146, %v1251
      %v1270 = vadd.f32 %v1147, %v1254
      %v1271 = vadd.f32 %v1148, %v1259
      %v1272 = vadd.f32 %v1149, %v1262
      %s1273 = scalar_lea.vmem %s196, 80
      %v1274 = vld [vmem:[%s1273] sm:$0xf]
      %v1275 = vld [vmem:[%s1273 + $0x8] sm:$0xf]
      %v1276 = vld [vmem:[%s1273 + $0x10] sm:$0xf]
      %v1277 = vld [vmem:[%s1273 + $0x18] sm:$0xf]
      %v1278 = vld [vmem:[%s1273 + $0x20] sm:$0xf]
      %v1279 = vld [vmem:[%s1273 + $0x28] sm:$0xf]
      %v1280 = vld [vmem:[%s1273 + $0x30] sm:$0xf]
      %v1281 = vld [vmem:[%s1273 + $0x38] sm:$0xf]
      %s1282 = scalar_lea.vmem %s1, 56
      %v1283 = vld [vmem:[%s1282] sm:$0xf]
      %v1284 = vld [vmem:[%s1282 + $0x4] sm:$0xf]
      %v1293 = vunpack.c.l.b16 %v1274
      %v1294 = vunpack.c.l.b16 %v1275
      %v1295 = vunpack.c.l.b16 %v1276
      %v1296 = vunpack.c.l.b16 %v1277
      %v1297 = vunpack.c.l.b16 %v1278
      %v1298 = vunpack.c.l.b16 %v1279
      %v1299 = vunpack.c.l.b16 %v1280
      %v1300 = vunpack.c.l.b16 %v1281
      %v1301 = vpack.c.b16 %v1294, %v1293
      %v1302 = vpack.c.b16 %v1296, %v1295
      %v1303 = vpack.c.b16 %v1298, %v1297
      %v1304 = vpack.c.b16 %v1300, %v1299
      %v1307 = vunpack.c.l.b16 %v1283
      %v1308 = vunpack.c.l.b16 %v1284
      %v1309 = vpack.c.b16 %v1308, %v1307
      %v1312 = vsel %vm252, %v1301, 0
      %v1315 = vsel %vm252, %v1302, 0
      %v1318 = vsel %vm252, %v1303, 0
      %v1321 = vsel %vm252, %v1304, 0
      %1323 = vmatprep.subr.bf16.mxu0 0
      %1324 = vmatpush1.bf16.msra.mxu0 0
      %1325 = vmatprep.subr.bf16.mxu0 0
      %1326 = vmatpush1.bf16.msra.mxu0 0
      %1327 = vmatprep.subr.bf16.mxu0 0
      %1328 = vmatpush1.bf16.msra.mxu0 0
      %1329 = vmatprep.subr.bf16.mxu0 0
      %1330 = vmatpush1.bf16.msra.mxu0 0
      %1331 = vmatprep.subr.bf16.mxu0 0
      %1332 = vmatpush1.bf16.msra.mxu0 0
      %1333 = vmatprep.subr.bf16.mxu0 0
      %1334 = vmatpush1.bf16.msra.mxu0 0
      %1335 = vmatprep.subr.bf16.mxu0 0
      %1336 = vmatpush1.bf16.msra.mxu0 0
      %1337 = vmatprep.subr.bf16.mxu0 0
      %1338 = vmatpush1.bf16.msra.mxu0 %v1309
      %1339 = vmatprep.subr.bf16.mxu0 0
      %1340 = vmatpush2.bf16.msra.mxu0 0
      %1341 = vmatprep.subr.bf16.mxu0 0
      %1342 = vmatpush2.bf16.msra.mxu0 0
      %1343 = vmatprep.subr.bf16.mxu0 0
      %1344 = vmatpush2.bf16.msra.mxu0 0
      %1345 = vmatprep.subr.bf16.mxu0 0
      %1346 = vmatpush2.bf16.msra.mxu0 0
      %1347 = vmatprep.subr.bf16.mxu0 0
      %1348 = vmatpush2.bf16.msra.mxu0 0
      %1349 = vmatprep.subr.bf16.mxu0 0
      %1350 = vmatpush2.bf16.msra.mxu0 0
      %1351 = vmatprep.subr.bf16.mxu0 0
      %1352 = vmatpush2.bf16.msra.mxu0 0
      %1353 = vmatprep.subr.bf16.mxu0 0
      %1354 = vmatpush2.bf16.msra.mxu0 0
      %1355 = vmatprep.mubr.bf16.mxu0 0
      %1356 = vmatmul.mubr.bf16.gmra.mxu0 %v1312
      %v1357 = vpop.f32.mrf.mxu0
      %v1358 = vadd.f32 0.0, %v1357
      %v1359 = vpop.f32.mrf.mxu0
      %v1360 = vpop.f32.mrf.mxu0
      %v1361 = vadd.f32 0.0, %v1360
      %v1362 = vpop.f32.mrf.mxu0
      %1363 = vmatprep.mubr.bf16.mxu0 0
      %1364 = vmatmul.mubr.bf16.gmra.mxu0 %v1315
      %v1365 = vpop.f32.mrf.mxu0
      %v1366 = vadd.f32 0.0, %v1365
      %v1367 = vpop.f32.mrf.mxu0
      %v1368 = vpop.f32.mrf.mxu0
      %v1369 = vadd.f32 0.0, %v1368
      %v1370 = vpop.f32.mrf.mxu0
      %1371 = vmatprep.mubr.bf16.mxu0 0
      %1372 = vmatmul.mubr.bf16.gmra.mxu0 %v1318
      %v1373 = vpop.f32.mrf.mxu0
      %v1374 = vadd.f32 0.0, %v1373
      %v1375 = vpop.f32.mrf.mxu0
      %v1376 = vpop.f32.mrf.mxu0
      %v1377 = vadd.f32 0.0, %v1376
      %v1378 = vpop.f32.mrf.mxu0
      %1379 = vmatprep.mubr.bf16.mxu0 0
      %1380 = vmatmul.mubr.bf16.gmra.mxu0 %v1321
      %v1381 = vpop.f32.mrf.mxu0
      %v1382 = vadd.f32 0.0, %v1381
      %v1383 = vpop.f32.mrf.mxu0
      %v1384 = vpop.f32.mrf.mxu0
      %v1385 = vadd.f32 0.0, %v1384
      %v1386 = vpop.f32.mrf.mxu0
      %1387 = vdwg.mxu0
      %v1388 = vadd.f32 %v1265, %v1358
      %v1389 = vadd.f32 %v1266, %v1361
      %v1390 = vadd.f32 %v1267, %v1366
      %v1391 = vadd.f32 %v1268, %v1369
      %v1392 = vadd.f32 %v1269, %v1374
      %v1393 = vadd.f32 %v1270, %v1377
      %v1394 = vadd.f32 %v1271, %v1382
      %v1395 = vadd.f32 %v1272, %v1385
      %v1396 = vld [vmem:[%s1150] sm:$0xf]
      %v1397 = vld [vmem:[%s1150 + $0x4] sm:$0x1]
      %v1398 = vld [vmem:[%s1150 + $0x8] sm:$0xf]
      %v1399 = vld [vmem:[%s1150 + $0xc] sm:$0x1]
      %v1400 = vld [vmem:[%s1150 + $0x10] sm:$0xf]
      %v1401 = vld [vmem:[%s1150 + $0x14] sm:$0x1]
      %v1402 = vld [vmem:[%s1150 + $0x18] sm:$0xf]
      %v1403 = vld [vmem:[%s1150 + $0x1c] sm:$0x1]
      %v1404 = vld [vmem:[%s1150 + $0x20] sm:$0xf]
      %v1405 = vld [vmem:[%s1150 + $0x24] sm:$0x1]
      %v1406 = vld [vmem:[%s1150 + $0x28] sm:$0xf]
      %v1407 = vld [vmem:[%s1150 + $0x2c] sm:$0x1]
      %v1408 = vld [vmem:[%s1150 + $0x30] sm:$0xf]
      %v1409 = vld [vmem:[%s1150 + $0x34] sm:$0x1]
      %v1410 = vld [vmem:[%s1150 + $0x38] sm:$0xf]
      %v1411 = vld [vmem:[%s1150 + $0x3c] sm:$0x1]
      %v1413 = vshrl.u32 %v1396, 16
      %v1415 = vrot.slane %v1413, 4
      %v1416 = vshll.u32 %v1396, 16
      %v1418 = vrot.slane %v1416, 5
      %v1419 = vor.u32 %v1415, %v1418
      %v1420 = vrot.slane %v1419, 4
      %v1422 = vshll.u32 %v1397, 16
      %v1424 = vrot.slane %v1422, 5
      %v1425 = vsel %vm451, %v1420, %v1424
      %v1427 = vshrl.u32 %v1398, 16
      %v1429 = vrot.slane %v1427, 4
      %v1430 = vshll.u32 %v1398, 16
      %v1432 = vrot.slane %v1430, 5
      %v1433 = vor.u32 %v1429, %v1432
      %v1434 = vrot.slane %v1433, 4
      %v1436 = vshll.u32 %v1399, 16
      %v1438 = vrot.slane %v1436, 5
      %v1439 = vsel %vm451, %v1434, %v1438
      %v1441 = vshrl.u32 %v1400, 16
      %v1443 = vrot.slane %v1441, 4
      %v1444 = vshll.u32 %v1400, 16
      %v1446 = vrot.slane %v1444, 5
      %v1447 = vor.u32 %v1443, %v1446
      %v1448 = vrot.slane %v1447, 4
      %v1450 = vshll.u32 %v1401, 16
      %v1452 = vrot.slane %v1450, 5
      %v1453 = vsel %vm451, %v1448, %v1452
      %v1455 = vshrl.u32 %v1402, 16
      %v1457 = vrot.slane %v1455, 4
      %v1458 = vshll.u32 %v1402, 16
      %v1460 = vrot.slane %v1458, 5
      %v1461 = vor.u32 %v1457, %v1460
      %v1462 = vrot.slane %v1461, 4
      %v1464 = vshll.u32 %v1403, 16
      %v1466 = vrot.slane %v1464, 5
      %v1467 = vsel %vm451, %v1462, %v1466
      %v1469 = vshrl.u32 %v1404, 16
      %v1471 = vrot.slane %v1469, 4
      %v1472 = vshll.u32 %v1404, 16
      %v1474 = vrot.slane %v1472, 5
      %v1475 = vor.u32 %v1471, %v1474
      %v1476 = vrot.slane %v1475, 4
      %v1478 = vshll.u32 %v1405, 16
      %v1480 = vrot.slane %v1478, 5
      %v1481 = vsel %vm451, %v1476, %v1480
      %v1483 = vshrl.u32 %v1406, 16
      %v1485 = vrot.slane %v1483, 4
      %v1486 = vshll.u32 %v1406, 16
      %v1488 = vrot.slane %v1486, 5
      %v1489 = vor.u32 %v1485, %v1488
      %v1490 = vrot.slane %v1489, 4
      %v1492 = vshll.u32 %v1407, 16
      %v1494 = vrot.slane %v1492, 5
      %v1495 = vsel %vm451, %v1490, %v1494
      %v1497 = vshrl.u32 %v1408, 16
      %v1499 = vrot.slane %v1497, 4
      %v1500 = vshll.u32 %v1408, 16
      %v1502 = vrot.slane %v1500, 5
      %v1503 = vor.u32 %v1499, %v1502
      %v1504 = vrot.slane %v1503, 4
      %v1506 = vshll.u32 %v1409, 16
      %v1508 = vrot.slane %v1506, 5
      %v1509 = vsel %vm451, %v1504, %v1508
      %v1511 = vshrl.u32 %v1410, 16
      %v1513 = vrot.slane %v1511, 4
      %v1514 = vshll.u32 %v1410, 16
      %v1516 = vrot.slane %v1514, 5
      %v1517 = vor.u32 %v1513, %v1516
      %v1518 = vrot.slane %v1517, 4
      %v1520 = vshll.u32 %v1411, 16
      %v1522 = vrot.slane %v1520, 5
      %v1523 = vsel %vm451, %v1518, %v1522
      %s1524 = scalar_lea.vmem %s1, 64
      %v1525 = vld [vmem:[%s1524] sm:$0xf]
      %v1526 = vld [vmem:[%s1524 + $0x4] sm:$0xf]
      %v1527 = vunpack.c.l.b16 %v1425
      %v1528 = vunpack.c.l.b16 %v1439
      %v1529 = vunpack.c.l.b16 %v1453
      %v1530 = vunpack.c.l.b16 %v1467
      %v1531 = vunpack.c.l.b16 %v1481
      %v1532 = vunpack.c.l.b16 %v1495
      %v1533 = vunpack.c.l.b16 %v1509
      %v1534 = vunpack.c.l.b16 %v1523
      %v1535 = vpack.c.b16 %v1528, %v1527
      %v1536 = vpack.c.b16 %v1530, %v1529
      %v1537 = vpack.c.b16 %v1532, %v1531
      %v1538 = vpack.c.b16 %v1534, %v1533
      %v1541 = vunpack.c.l.b16 %v1525
      %v1542 = vunpack.c.l.b16 %v1526
      %v1543 = vpack.c.b16 %v1542, %v1541
      %v1546 = vsel %vm252, %v1535, 0
      %v1549 = vsel %vm252, %v1536, 0
      %v1552 = vsel %vm252, %v1537, 0
      %v1555 = vsel %vm252, %v1538, 0
      %1557 = vmatprep.subr.bf16.mxu0 0
      %1558 = vmatpush1.bf16.msra.mxu0 0
      %1559 = vmatprep.subr.bf16.mxu0 0
      %1560 = vmatpush1.bf16.msra.mxu0 0
      %1561 = vmatprep.subr.bf16.mxu0 0
      %1562 = vmatpush1.bf16.msra.mxu0 0
      %1563 = vmatprep.subr.bf16.mxu0 0
      %1564 = vmatpush1.bf16.msra.mxu0 0
      %1565 = vmatprep.subr.bf16.mxu0 0
      %1566 = vmatpush1.bf16.msra.mxu0 0
      %1567 = vmatprep.subr.bf16.mxu0 0
      %1568 = vmatpush1.bf16.msra.mxu0 0
      %1569 = vmatprep.subr.bf16.mxu0 0
      %1570 = vmatpush1.bf16.msra.mxu0 0
      %1571 = vmatprep.subr.bf16.mxu0 0
      %1572 = vmatpush1.bf16.msra.mxu0 %v1543
      %1573 = vmatprep.subr.bf16.mxu0 0
      %1574 = vmatpush2.bf16.msra.mxu0 0
      %1575 = vmatprep.subr.bf16.mxu0 0
      %1576 = vmatpush2.bf16.msra.mxu0 0
      %1577 = vmatprep.subr.bf16.mxu0 0
      %1578 = vmatpush2.bf16.msra.mxu0 0
      %1579 = vmatprep.subr.bf16.mxu0 0
      %1580 = vmatpush2.bf16.msra.mxu0 0
      %1581 = vmatprep.subr.bf16.mxu0 0
      %1582 = vmatpush2.bf16.msra.mxu0 0
      %1583 = vmatprep.subr.bf16.mxu0 0
      %1584 = vmatpush2.bf16.msra.mxu0 0
      %1585 = vmatprep.subr.bf16.mxu0 0
      %1586 = vmatpush2.bf16.msra.mxu0 0
      %1587 = vmatprep.subr.bf16.mxu0 0
      %1588 = vmatpush2.bf16.msra.mxu0 0
      %1589 = vmatprep.mubr.bf16.mxu0 0
      %1590 = vmatmul.mubr.bf16.gmra.mxu0 %v1546
      %v1591 = vpop.f32.mrf.mxu0
      %v1592 = vadd.f32 0.0, %v1591
      %v1593 = vpop.f32.mrf.mxu0
      %v1594 = vpop.f32.mrf.mxu0
      %v1595 = vadd.f32 0.0, %v1594
      %v1596 = vpop.f32.mrf.mxu0
      %1597 = vmatprep.mubr.bf16.mxu0 0
      %1598 = vmatmul.mubr.bf16.gmra.mxu0 %v1549
      %v1599 = vpop.f32.mrf.mxu0
      %v1600 = vadd.f32 0.0, %v1599
      %v1601 = vpop.f32.mrf.mxu0
      %v1602 = vpop.f32.mrf.mxu0
      %v1603 = vadd.f32 0.0, %v1602
      %v1604 = vpop.f32.mrf.mxu0
      %1605 = vmatprep.mubr.bf16.mxu0 0
      %1606 = vmatmul.mubr.bf16.gmra.mxu0 %v1552
      %v1607 = vpop.f32.mrf.mxu0
      %v1608 = vadd.f32 0.0, %v1607
      %v1609 = vpop.f32.mrf.mxu0
      %v1610 = vpop.f32.mrf.mxu0
      %v1611 = vadd.f32 0.0, %v1610
      %v1612 = vpop.f32.mrf.mxu0
      %1613 = vmatprep.mubr.bf16.mxu0 0
      %1614 = vmatmul.mubr.bf16.gmra.mxu0 %v1555
      %v1615 = vpop.f32.mrf.mxu0
      %v1616 = vadd.f32 0.0, %v1615
      %v1617 = vpop.f32.mrf.mxu0
      %v1618 = vpop.f32.mrf.mxu0
      %v1619 = vadd.f32 0.0, %v1618
      %v1620 = vpop.f32.mrf.mxu0
      %1621 = vdwg.mxu0
      %v1622 = vadd.f32 %v1388, %v1592
      %v1623 = vadd.f32 %v1389, %v1595
      %v1624 = vadd.f32 %v1390, %v1600
      %v1625 = vadd.f32 %v1391, %v1603
      %v1626 = vadd.f32 %v1392, %v1608
      %v1627 = vadd.f32 %v1393, %v1611
      %v1628 = vadd.f32 %v1394, %v1616
      %v1629 = vadd.f32 %v1395, %v1619
      %v1630 = vld [vmem:[%s2] sm:$0x1]
      %v1632 = vlaneseq
      %v1633 = vshrl.u32 %v1632, 7
      %v1634 = vsub.s32 0, %v1633
      %v1635 = vrot.slane %v1630, %v1634
      %v1637 = vmul.f32 %v1622, %v1635
      %v1638 = vmul.f32 %v1623, %v1635
      %v1639 = vmul.f32 %v1624, %v1635
      %v1640 = vmul.f32 %v1625, %v1635
      %v1641 = vmul.f32 %v1626, %v1635
      %v1642 = vmul.f32 %v1627, %v1635
      %v1643 = vmul.f32 %v1628, %v1635
      %v1644 = vmul.f32 %v1629, %v1635
      %v1645 = vld [vmem:[%s3] sm:$0x1]
      %v1647 = vlaneseq
      %v1648 = vshrl.u32 %v1647, 7
      %v1649 = vsub.s32 0, %v1648
      %v1650 = vrot.slane %v1645, %v1649
      %v1652 = vadd.f32 %v1637, %v1650
      %v1653 = vadd.f32 %v1638, %v1650
      %v1654 = vadd.f32 %v1639, %v1650
      %v1655 = vadd.f32 %v1640, %v1650
      %v1656 = vadd.f32 %v1641, %v1650
      %v1657 = vadd.f32 %v1642, %v1650
      %v1658 = vadd.f32 %v1643, %v1650
      %v1659 = vadd.f32 %v1644, %v1650
      %v1660 = vmax.f32 %v1652, 0.0
      %v1661 = vmax.f32 %v1653, 0.0
      %v1662 = vmax.f32 %v1654, 0.0
      %v1663 = vmax.f32 %v1655, 0.0
      %v1664 = vmax.f32 %v1656, 0.0
      %v1665 = vmax.f32 %v1657, 0.0
      %v1666 = vmax.f32 %v1658, 0.0
      %v1667 = vmax.f32 %v1659, 0.0
      %v1668 = vpack.c.bf16 %v1660, %v1660
      %v1669 = vpack.c.bf16 %v1661, %v1661
      %v1670 = vpack.c.bf16 %v1662, %v1662
      %v1671 = vpack.c.bf16 %v1663, %v1663
      %v1672 = vpack.c.bf16 %v1664, %v1664
      %v1673 = vpack.c.bf16 %v1665, %v1665
      %v1674 = vpack.c.bf16 %v1666, %v1666
      %v1675 = vpack.c.bf16 %v1667, %v1667
      %vm1676 = vcmask 125952
      %1677 = vst.msk [vmem:[%s202] sm:$0xf] %vm1676, %v1668
      %1678 = vst.msk [vmem:[%s202 + $0x4] sm:$0xf] %vm1676, %v1669
      %1679 = vst.msk [vmem:[%s202 + $0x8] sm:$0xf] %vm1676, %v1670
      %1680 = vst.msk [vmem:[%s202 + $0xc] sm:$0xf] %vm1676, %v1671
      %1681 = vst.msk [vmem:[%s202 + $0x10] sm:$0xf] %vm1676, %v1672
      %1682 = vst.msk [vmem:[%s202 + $0x14] sm:$0xf] %vm1676, %v1673
      %1683 = vst.msk [vmem:[%s202 + $0x18] sm:$0xf] %vm1676, %v1674
      %1684 = vst.msk [vmem:[%s202 + $0x1c] sm:$0xf] %vm1676, %v1675
      %p1685 = scmp.lt.s32.totalorder %s15, 1
      %s1686 = scalar_select %p1685, %s15, 1
      %s1687 = smul.addr %s1686, 8
      %s1688 = smul.addr %s1687, 4
      %s1689 = scalar_lea.vmem %s4, %s1688
      // Predicated region
      $region37: #{fwd.8} parent=35 // pred_check
        %p1690 = pneg %p122
      $region38: #{fwd.8} parent=35 // pred_check_branch
        %1692 = sbr.rel (%p1690) target = $region40
      $region39: #{fwd.8} parent=35 // pred_region
        _
      $region40: #{fwd.8} parent=35 // pred_fallthru
        _
    $region36: #{fwd.8} parent=5 // pred_fallthru
      _
    %p1693 = scmp.le.s32.totalorder 2, %s10
    // Predicated region
    $region41: #{fwd.8} parent=5 // pred_check
      %p1694 = pneg %p1693
    $region42: #{fwd.8} parent=5 // pred_check_branch
      %1696 = sbr.rel (%p1694) target = $region44
    $region43: #{fwd.8} parent=5 // pred_region
      %s1697 = ssub.s32 %s10, 2
      // Predicated region
      $region45: #{fwd.8} parent=43 // pred_check
        %p1698 = pneg %p128
      $region46: #{fwd.8} parent=43 // pred_check_branch
        %1700 = sbr.rel (%p1698) target = $region48
      $region47: #{fwd.8} parent=43 // pred_region
        %p1701 = scmp.lt.s32.totalorder %s16, 1
        %s1702 = scalar_select %p1701, %s16, 1
        %s1703 = smul.addr %s1702, 8
        %s1704 = smul.addr %s1703, 4
        %s1705 = scalar_lea.vmem %s4, %s1704
      $region48: #{fwd.8} parent=43 // pred_fallthru
        _
    $region44: #{fwd.8} parent=5 // pred_fallthru
      _
  $region6: #{fwd.8} parent=0 // loop_footer
    %s14 = sadd.s32 1, %s10
  $region7: #{fwd.8} parent=0 // loop_footer_branch
    %9 = sbr.rel target = $region3
  $region8: #{fwd.8} parent=0 // loop_exit
    _

// kernel: fwd.10
$region0: #{fwd.10}
  #allocation0 [shape = 'u32[]', space=smem, size = 0x4, offset = 0x4, fixed_abs, tag = 'smem constant byte address 0x4 - core index']
  #allocation1 [shape = 'u32[144,128]{1,0:T(1,128)}', space=vmem, size = 0x12000, scoped, tag = 'internal scratch']
  %s0 = inlined_call_operand.vmem [shape: bf16[128,16], index: 0, kind: input, shape index: {}]
  %s1 = inlined_call_operand.vmem [shape: bf16[16,64], index: 1, kind: input, shape index: {}]
  %s2 = inlined_call_operand.vmem [shape: f32[1,64], index: 2, kind: input, shape index: {}]
  %s3 = inlined_call_operand.vmem [shape: f32[1,64], index: 3, kind: input, shape index: {}]
  %s4 = inlined_call_operand.vmem [shape: bf16[128,64], index: 4, kind: input, shape index: {}]
  %s5 = inlined_call_operand.vmem [shape: bf16[128,64], index: 5, kind: output, shape index: {}]
  %s6 = sld [smem:[#allocation0]]
  $region53: #{fwd.10} parent=0
    _
  %s8 = ssub.s32 1, %s6
  %s9 = scalar_select 0, %s8, %s6
  loop: start=0, step=1, limit=4
  $region2: #{fwd.10} parent=0 // loop_pre_header
    _
  $region3: #{fwd.10} parent=0 // loop_header
    %s11 = sphi 0, %s15
    %p12 = scmp.ge.s32.totalorder %s11, 4
    %s18 = sphi 0, %s30
    %s19 = sphi 0, %s26
    %s20 = sphi 0, %s18
    %s21 = sphi 0, %s19
    %s22 = sphi 0, %s20
    %s23 = sphi 0, %s21
    %s33 = sphi 0, %s35
    %s36 = sphi 0, %s33
    %s37 = sphi 0, %s36
    %s53 = sphi 0, %s37
    %s59 = sphi 0, %s61
    %s62 = sphi 0, %s59
    %s63 = sphi 0, %s62
    %s79 = sphi 0, %s63
    %s85 = sphi 0, %s87
    %s88 = sphi 0, %s85
    %s89 = sphi 0, %s88
    %s105 = sphi 0, %s89
    %s111 = sphi 0, %s113
    %s114 = sphi 0, %s111
    %s115 = sphi 0, %s114
    %s131 = sphi 0, %s115
    %s139 = sphi 0, %s141
    %s142 = sphi 0, %s139
    %s143 = sphi 0, %s142
    %s159 = sphi 0, %s143
    %s167 = sphi 0, %s169
    %s170 = sphi 0, %s167
    %s171 = sphi 0, %s170
    %s187 = sphi 0, %s171
  $region4: #{fwd.10} parent=0 // loop_header_branch
    %14 = sbr.rel (%p12) target = $region8
  $region5: #{fwd.10} parent=0 // loop_body
    %s16 = ssub.s32 %s11, 1
    %s17 = ssub.s32 %s11, 2
    %s24 = sadd.s32 1, %s19
    %p25 = scmp.ge.s32.totalorder %s24, 1
    %s26 = scalar_select %p25, 0, %s24
    %s27 = sadd.s32 1, %s18
    %s28 = scalar_select %p25, %s27, %s18
    %p29 = scmp.ge.s32.totalorder %s28, 2
    %s30 = scalar_select %p29, 0, %s28
    %s31 = ssub.s32 %s18, %s30
    %p32 = scmp.eq.s32.totalorder %s31, 0
    %s34 = sadd.s32 %s33, 1
    %s35 = scalar_select %p32, %s33, %s34
    %p38 = pneg %p32
    %p39 = scmp.eq.s32.totalorder %s11, 1
    %p40 = por %p38, %p39
    %p41 = scmp.ne.s32.totalorder %s33, %s36
    %p42 = scmp.eq.s32.totalorder %s11, 0
    %p43 = por %p41, %p42
    %p44 = scmp.ne.s32.totalorder %s33, %s36
    %p45 = scmp.eq.s32.totalorder %s16, 1
    %p46 = por %p44, %p45
    %p47 = scmp.ne.s32.totalorder %s36, %s37
    %p48 = scmp.eq.s32.totalorder %s16, 0
    %p49 = por %p47, %p48
    %p50 = scmp.ne.s32.totalorder %s36, %s37
    %p51 = scmp.eq.s32.totalorder %s17, 1
    %p52 = por %p50, %p51
    %p54 = scmp.ne.s32.totalorder %s37, %s53
    %p55 = scmp.eq.s32.totalorder %s17, 0
    %p56 = por %p54, %p55
    %s57 = ssub.s32 %s19, %s26
    %p58 = scmp.eq.s32.totalorder %s57, 0
    %s60 = sadd.s32 %s59, 1
    %s61 = scalar_select %p58, %s59, %s60
    %p64 = pneg %p58
    %p65 = scmp.eq.s32.totalorder %s11, 1
    %p66 = por %p64, %p65
    %p67 = scmp.ne.s32.totalorder %s59, %s62
    %p68 = scmp.eq.s32.totalorder %s11, 0
    %p69 = por %p67, %p68
    %p70 = scmp.ne.s32.totalorder %s59, %s62
    %p71 = scmp.eq.s32.totalorder %s16, 1
    %p72 = por %p70, %p71
    %p73 = scmp.ne.s32.totalorder %s62, %s63
    %p74 = scmp.eq.s32.totalorder %s16, 0
    %p75 = por %p73, %p74
    %p76 = scmp.ne.s32.totalorder %s62, %s63
    %p77 = scmp.eq.s32.totalorder %s17, 1
    %p78 = por %p76, %p77
    %p80 = scmp.ne.s32.totalorder %s63, %s79
    %p81 = scmp.eq.s32.totalorder %s17, 0
    %p82 = por %p80, %p81
    %s83 = ssub.s32 %s19, %s26
    %p84 = scmp.eq.s32.totalorder %s83, 0
    %s86 = sadd.s32 %s85, 1
    %s87 = scalar_select %p84, %s85, %s86
    %p90 = pneg %p84
    %p91 = scmp.eq.s32.totalorder %s11, 1
    %p92 = por %p90, %p91
    %p93 = scmp.ne.s32.totalorder %s85, %s88
    %p94 = scmp.eq.s32.totalorder %s11, 0
    %p95 = por %p93, %p94
    %p96 = scmp.ne.s32.totalorder %s85, %s88
    %p97 = scmp.eq.s32.totalorder %s16, 1
    %p98 = por %p96, %p97
    %p99 = scmp.ne.s32.totalorder %s88, %s89
    %p100 = scmp.eq.s32.totalorder %s16, 0
    %p101 = por %p99, %p100
    %p102 = scmp.ne.s32.totalorder %s88, %s89
    %p103 = scmp.eq.s32.totalorder %s17, 1
    %p104 = por %p102, %p103
    %p106 = scmp.ne.s32.totalorder %s89, %s105
    %p107 = scmp.eq.s32.totalorder %s17, 0
    %p108 = por %p106, %p107
    %s109 = ssub.s32 %s19, %s26
    %p110 = scmp.eq.s32.totalorder %s109, 0
    %s112 = sadd.s32 %s111, 1
    %s113 = scalar_select %p110, %s111, %s112
    %p116 = pneg %p110
    %p117 = scmp.eq.s32.totalorder %s11, 1
    %p118 = por %p116, %p117
    %p119 = scmp.ne.s32.totalorder %s111, %s114
    %p120 = scmp.eq.s32.totalorder %s11, 0
    %p121 = por %p119, %p120
    %p122 = scmp.ne.s32.totalorder %s111, %s114
    %p123 = scmp.eq.s32.totalorder %s16, 1
    %p124 = por %p122, %p123
    %p125 = scmp.ne.s32.totalorder %s114, %s115
    %p126 = scmp.eq.s32.totalorder %s16, 0
    %p127 = por %p125, %p126
    %p128 = scmp.ne.s32.totalorder %s114, %s115
    %p129 = scmp.eq.s32.totalorder %s17, 1
    %p130 = por %p128, %p129
    %p132 = scmp.ne.s32.totalorder %s115, %s131
    %p133 = scmp.eq.s32.totalorder %s17, 0
    %p134 = por %p132, %p133
    %s135 = ssub.s32 %s18, %s30
    %s136 = ssub.s32 %s19, %s26
    %s137 = sor.u32 %s135, %s136
    %p138 = scmp.eq.s32.totalorder %s137, 0
    %s140 = sadd.s32 %s139, 1
    %s141 = scalar_select %p138, %s139, %s140
    %p144 = pneg %p138
    %p145 = scmp.eq.s32.totalorder %s11, 1
    %p146 = por %p144, %p145
    %p147 = scmp.ne.s32.totalorder %s139, %s142
    %p148 = scmp.eq.s32.totalorder %s11, 0
    %p149 = por %p147, %p148
    %p150 = scmp.ne.s32.totalorder %s139, %s142
    %p151 = scmp.eq.s32.totalorder %s16, 1
    %p152 = por %p150, %p151
    %p153 = scmp.ne.s32.totalorder %s142, %s143
    %p154 = scmp.eq.s32.totalorder %s16, 0
    %p155 = por %p153, %p154
    %p156 = scmp.ne.s32.totalorder %s142, %s143
    %p157 = scmp.eq.s32.totalorder %s17, 1
    %p158 = por %p156, %p157
    %p160 = scmp.ne.s32.totalorder %s143, %s159
    %p161 = scmp.eq.s32.totalorder %s17, 0
    %p162 = por %p160, %p161
    %s163 = ssub.s32 %s18, %s30
    %s164 = ssub.s32 %s19, %s26
    %s165 = sor.u32 %s163, %s164
    %p166 = scmp.eq.s32.totalorder %s165, 0
    %s168 = sadd.s32 %s167, 1
    %s169 = scalar_select %p166, %s167, %s168
    %p172 = pneg %p166
    %p173 = scmp.eq.s32.totalorder %s11, 1
    %p174 = por %p172, %p173
    %p175 = scmp.ne.s32.totalorder %s167, %s170
    %p176 = scmp.eq.s32.totalorder %s11, 0
    %p177 = por %p175, %p176
    %p178 = scmp.ne.s32.totalorder %s167, %s170
    %p179 = scmp.eq.s32.totalorder %s16, 1
    %p180 = por %p178, %p179
    %p181 = scmp.ne.s32.totalorder %s170, %s171
    %p182 = scmp.eq.s32.totalorder %s16, 0
    %p183 = por %p181, %p182
    %p184 = scmp.ne.s32.totalorder %s170, %s171
    %p185 = scmp.eq.s32.totalorder %s17, 1
    %p186 = por %p184, %p185
    %p188 = scmp.ne.s32.totalorder %s171, %s187
    %p189 = scmp.eq.s32.totalorder %s17, 0
    %p190 = por %p188, %p189
    %p191 = scmp.le.s32.totalorder 1, %s11
    %p192 = scmp.lt.s32.totalorder %s11, 3
    %p193 = pnand %p191, %p192
    %p194 = pneg %p193
    // Predicated region
    $region9: #{fwd.10} parent=5 // pred_check
      _
    $region10: #{fwd.10} parent=5 // pred_check_branch
      %196 = sbr.rel (%p193) target = $region12
    $region11: #{fwd.10} parent=5 // pred_region
      %s197 = ssub.s32 %s11, 1
      // Predicated region
      $region13: #{fwd.10} parent=11 // pred_check
        %p198 = pneg %p75
      $region14: #{fwd.10} parent=11 // pred_check_branch
        %200 = sbr.rel (%p198) target = $region16
      $region15: #{fwd.10} parent=11 // pred_region
        %p201 = scmp.lt.s32.totalorder %s21, 0
        %s202 = scalar_select %p201, %s21, 0
        %s203 = smul.addr %s202, 4
        %s204 = scalar_lea.vmem %s1, %s203
      $region16: #{fwd.10} parent=11 // pred_fallthru
        _
      // Predicated region
      $region17: #{fwd.10} parent=11 // pred_check
        %p205 = pneg %p101
      $region18: #{fwd.10} parent=11 // pred_check_branch
        %207 = sbr.rel (%p205) target = $region20
      $region19: #{fwd.10} parent=11 // pred_region
        %p208 = scmp.lt.s32.totalorder %s21, 0
        %s209 = scalar_select %p208, %s21, 0
        %s210 = scalar_lea.vmem %s2, %s209
      $region20: #{fwd.10} parent=11 // pred_fallthru
        _
      // Predicated region
      $region21: #{fwd.10} parent=11 // pred_check
        %p211 = pneg %p127
      $region22: #{fwd.10} parent=11 // pred_check_branch
        %213 = sbr.rel (%p211) target = $region24
      $region23: #{fwd.10} parent=11 // pred_region
        %p214 = scmp.lt.s32.totalorder %s21, 0
        %s215 = scalar_select %p214, %s21, 0
        %s216 = scalar_lea.vmem %s3, %s215
      $region24: #{fwd.10} parent=11 // pred_fallthru
        _
    $region12: #{fwd.10} parent=5 // pred_fallthru
      _
    %p217 = scmp.lt.s32.totalorder %s11, 2
    // Predicated region
    $region25: #{fwd.10} parent=5 // pred_check
      %p218 = pneg %p217
    $region26: #{fwd.10} parent=5 // pred_check_branch
      %220 = sbr.rel (%p218) target = $region28
    $region27: #{fwd.10} parent=5 // pred_region
      // Predicated region
      $region29: #{fwd.10} parent=27 // pred_check
        %p221 = pneg %p43
      $region30: #{fwd.10} parent=27 // pred_check_branch
        %223 = sbr.rel (%p221) target = $region32
      $region31: #{fwd.10} parent=27 // pred_region
        %s224 = smul.u32 8, %s18
        %p225 = scmp.lt.s32.totalorder %s224, 15
        %s226 = scalar_select %p225, %s224, 15
        %s227 = smul.addr %s226, 4
        %s228 = scalar_lea.vmem %s0, %s227
        %s229 = smul.u32 8, %s18
      $region32: #{fwd.10} parent=27 // pred_fallthru
        _
      // Predicated region
      $region33: #{fwd.10} parent=27 // pred_check
        %p230 = pneg %p149
      $region34: #{fwd.10} parent=27 // pred_check_branch
        %232 = sbr.rel (%p230) target = $region36
      $region35: #{fwd.10} parent=27 // pred_region
        %s233 = smul.u32 8, %s18
        %p234 = scmp.lt.s32.totalorder %s233, 15
        %s235 = scalar_select %p234, %s233, 15
        %p236 = scmp.lt.s32.totalorder %s19, 0
        %s237 = scalar_select %p236, %s19, 0
        %s238 = sadd.s32 %s237, %s235
        %s239 = smul.addr %s238, 4
        %s240 = scalar_lea.vmem %s4, %s239
        %s241 = smul.u32 8, %s18
      $region36: #{fwd.10} parent=27 // pred_fallthru
        _
    $region28: #{fwd.10} parent=5 // pred_fallthru
      _
    %p242 = scmp.le.s32.totalorder 1, %s11
    %p243 = scmp.lt.s32.totalorder %s11, 3
    %p244 = pnand %p242, %p243
    %p245 = pneg %p244
    // Predicated region
    $region37: #{fwd.10} parent=5 // pred_check
      _
    $region38: #{fwd.10} parent=5 // pred_check_branch
      %247 = sbr.rel (%p244) target = $region40
    $region39: #{fwd.10} parent=5 // pred_region
      %s248 = ssub.s32 %s11, 1
      %s249 = smul.u32 8, %s20
      %p250 = scmp.lt.s32.totalorder %s249, 15
      %s251 = scalar_select %p250, %s249, 15
      %s252 = smul.addr %s251, 4
      %s253 = scalar_lea.vmem %s0, %s252
      %p254 = pneg %p49
      %p255 = pneg %p46
      %p256 = scmp.lt.s32.totalorder %s21, 0
      %s257 = scalar_select %p256, %s21, 0
      %s258 = smul.addr %s257, 4
      %s259 = scalar_lea.vmem %s1, %s258
      %p260 = pneg %p75
      %p261 = pneg %p72
      %p262 = scmp.lt.s32.totalorder %s21, 0
      %s263 = scalar_select %p262, %s21, 0
      %s264 = scalar_lea.vmem %s2, %s263
      %p265 = pneg %p101
      %p266 = pneg %p98
      %p267 = scmp.lt.s32.totalorder %s21, 0
      %s268 = scalar_select %p267, %s21, 0
      %s269 = scalar_lea.vmem %s3, %s268
      %p270 = pneg %p127
      %p271 = pneg %p124
      %s272 = smul.u32 8, %s20
      %p273 = scmp.lt.s32.totalorder %s272, 15
      %s274 = scalar_select %p273, %s272, 15
      %p275 = scmp.lt.s32.totalorder %s21, 0
      %s276 = scalar_select %p275, %s21, 0
      %s277 = sadd.s32 %s276, %s274
      %s278 = smul.addr %s277, 4
      %s279 = scalar_lea.vmem %s4, %s278
      %p280 = pneg %p155
      %p281 = pneg %p152
      %p282 = pneg %p183
      %p283 = pneg %p180
      %s284 = smul.u32 8, %s20
      %p285 = scmp.lt.s32.totalorder %s284, 15
      %s286 = scalar_select %p285, %s284, 15
      %p287 = scmp.lt.s32.totalorder %s21, 0
      %s288 = scalar_select %p287, %s21, 0
      %s289 = sadd.s32 %s288, %s286
      %s290 = smul.addr %s289, 4
      %s291 = scalar_lea.vmem %s5, %s290
      %s292 = smul.u32 8, %s20
      %p293 = scmp.lt.s32.totalorder %s292, 15
      %s294 = scalar_select %p293, %s292, 15
      %s295 = smul.addr %s294, 4
      %s296 = scalar_lea.vmem %s0, %s295
      %s297 = smul.u32 8, %s20
      %p298 = scmp.lt.s32.totalorder %s21, 0
      %s299 = scalar_select %p298, %s21, 0
      %s300 = smul.addr %s299, 4
      %s301 = scalar_lea.vmem %s1, %s300
      %p302 = scmp.lt.s32.totalorder %s21, 0
      %s303 = scalar_select %p302, %s21, 0
      %s304 = scalar_lea.vmem %s2, %s303
      %p305 = scmp.lt.s32.totalorder %s21, 0
      %s306 = scalar_select %p305, %s21, 0
      %s307 = scalar_lea.vmem %s3, %s306
      %s308 = smul.u32 8, %s20
      %p309 = scmp.lt.s32.totalorder %s308, 15
      %s310 = scalar_select %p309, %s308, 15
      %p311 = scmp.lt.s32.totalorder %s21, 0
      %s312 = scalar_select %p311, %s21, 0
      %s313 = sadd.s32 %s312, %s310
      %s314 = smul.addr %s313, 4
      %s315 = scalar_lea.vmem %s4, %s314
      %s316 = smul.u32 8, %s20
      %s317 = smul.u32 8, %s20
      %p318 = scmp.lt.s32.totalorder %s317, 15
      %s319 = scalar_select %p318, %s317, 15
      %p320 = scmp.lt.s32.totalorder %s21, 0
      %s321 = scalar_select %p320, %s21, 0
      %s322 = sadd.s32 %s321, %s319
      %s323 = smul.addr %s322, 4
      %s324 = scalar_lea.vmem %s5, %s323
      %s325 = smul.u32 8, %s20
      %v327 = vld [vmem:[%s296] sm:$0xf]
      %v328 = vld [vmem:[%s296 + $0x4] sm:$0xf]
      %v329 = vld [vmem:[%s296 + $0x8] sm:$0xf]
      %v330 = vld [vmem:[%s296 + $0xc] sm:$0xf]
      %v331 = vld [vmem:[%s296 + $0x10] sm:$0xf]
      %v332 = vld [vmem:[%s296 + $0x14] sm:$0xf]
      %v333 = vld [vmem:[%s296 + $0x18] sm:$0xf]
      %v334 = vld [vmem:[%s296 + $0x1c] sm:$0xf]
      %v335 = vld [vmem:[%s301] sm:$0xf]
      %v336 = vld [vmem:[%s301 + $0x4] sm:$0xf]
      %v345 = vunpack.c.l.b16 %v327
      %v346 = vunpack.c.l.b16 %v328
      %v347 = vunpack.c.l.b16 %v329
      %v348 = vunpack.c.l.b16 %v330
      %v349 = vunpack.c.l.b16 %v331
      %v350 = vunpack.c.l.b16 %v332
      %v351 = vunpack.c.l.b16 %v333
      %v352 = vunpack.c.l.b16 %v334
      %v353 = vpack.c.b16 %v346, %v345
      %v354 = vpack.c.b16 %v348, %v347
      %v355 = vpack.c.b16 %v350, %v349
      %v356 = vpack.c.b16 %v352, %v351
      %v359 = vunpack.c.l.b16 %v335
      %v360 = vunpack.c.l.b16 %v336
      %v361 = vpack.c.b16 %v360, %v359
      %vm363 = vcmask 130048
      %v365 = vsel %vm363, %v353, 0
      %v368 = vsel %vm363, %v354, 0
      %v371 = vsel %vm363, %v355, 0
      %v374 = vsel %vm363, %v356, 0
      %376 = vmatprep.subr.bf16.mxu0 0
      %377 = vmatpush1.bf16.msra.mxu0 0
      %378 = vmatprep.subr.bf16.mxu0 0
      %379 = vmatpush1.bf16.msra.mxu0 0
      %380 = vmatprep.subr.bf16.mxu0 0
      %381 = vmatpush1.bf16.msra.mxu0 0
      %382 = vmatprep.subr.bf16.mxu0 0
      %383 = vmatpush1.bf16.msra.mxu0 0
      %384 = vmatprep.subr.bf16.mxu0 0
      %385 = vmatpush1.bf16.msra.mxu0 0
      %386 = vmatprep.subr.bf16.mxu0 0
      %387 = vmatpush1.bf16.msra.mxu0 0
      %388 = vmatprep.subr.bf16.mxu0 0
      %389 = vmatpush1.bf16.msra.mxu0 0
      %390 = vmatprep.subr.bf16.mxu0 0
      %391 = vmatpush1.bf16.msra.mxu0 %v361
      %392 = vmatprep.subr.bf16.mxu0 0
      %393 = vmatpush2.bf16.msra.mxu0 0
      %394 = vmatprep.subr.bf16.mxu0 0
      %395 = vmatpush2.bf16.msra.mxu0 0
      %396 = vmatprep.subr.bf16.mxu0 0
      %397 = vmatpush2.bf16.msra.mxu0 0
      %398 = vmatprep.subr.bf16.mxu0 0
      %399 = vmatpush2.bf16.msra.mxu0 0
      %400 = vmatprep.subr.bf16.mxu0 0
      %401 = vmatpush2.bf16.msra.mxu0 0
      %402 = vmatprep.subr.bf16.mxu0 0
      %403 = vmatpush2.bf16.msra.mxu0 0
      %404 = vmatprep.subr.bf16.mxu0 0
      %405 = vmatpush2.bf16.msra.mxu0 0
      %406 = vmatprep.subr.bf16.mxu0 0
      %407 = vmatpush2.bf16.msra.mxu0 0
      %408 = vmatprep.mubr.bf16.mxu0 0
      %409 = vmatmul.mubr.bf16.gmra.mxu0 %v365
      %v410 = vpop.f32.mrf.mxu0
      %v411 = vadd.f32 0.0, %v410
      %v412 = vpop.f32.mrf.mxu0
      %v413 = vpop.f32.mrf.mxu0
      %v414 = vadd.f32 0.0, %v413
      %v415 = vpop.f32.mrf.mxu0
      %416 = vmatprep.mubr.bf16.mxu0 0
      %417 = vmatmul.mubr.bf16.gmra.mxu0 %v368
      %v418 = vpop.f32.mrf.mxu0
      %v419 = vadd.f32 0.0, %v418
      %v420 = vpop.f32.mrf.mxu0
      %v421 = vpop.f32.mrf.mxu0
      %v422 = vadd.f32 0.0, %v421
      %v423 = vpop.f32.mrf.mxu0
      %424 = vmatprep.mubr.bf16.mxu0 0
      %425 = vmatmul.mubr.bf16.gmra.mxu0 %v371
      %v426 = vpop.f32.mrf.mxu0
      %v427 = vadd.f32 0.0, %v426
      %v428 = vpop.f32.mrf.mxu0
      %v429 = vpop.f32.mrf.mxu0
      %v430 = vadd.f32 0.0, %v429
      %v431 = vpop.f32.mrf.mxu0
      %432 = vmatprep.mubr.bf16.mxu0 0
      %433 = vmatmul.mubr.bf16.gmra.mxu0 %v374
      %v434 = vpop.f32.mrf.mxu0
      %v435 = vadd.f32 0.0, %v434
      %v436 = vpop.f32.mrf.mxu0
      %v437 = vpop.f32.mrf.mxu0
      %v438 = vadd.f32 0.0, %v437
      %v439 = vpop.f32.mrf.mxu0
      %440 = vdwg.mxu0
      %v441 = vld [vmem:[%s304] sm:$0x1]
      %v443 = vlaneseq
      %v444 = vshrl.u32 %v443, 7
      %v445 = vsub.s32 0, %v444
      %v446 = vrot.slane %v441, %v445
      %v448 = vmul.f32 %v411, %v446
      %v449 = vmul.f32 %v414, %v446
      %v450 = vmul.f32 %v419, %v446
      %v451 = vmul.f32 %v422, %v446
      %v452 = vmul.f32 %v427, %v446
      %v453 = vmul.f32 %v430, %v446
      %v454 = vmul.f32 %v435, %v446
      %v455 = vmul.f32 %v438, %v446
      %v456 = vld [vmem:[%s307] sm:$0x1]
      %v458 = vlaneseq
      %v459 = vshrl.u32 %v458, 7
      %v460 = vsub.s32 0, %v459
      %v461 = vrot.slane %v456, %v460
      %v463 = vadd.f32 %v448, %v461
      %v464 = vadd.f32 %v449, %v461
      %v465 = vadd.f32 %v450, %v461
      %v466 = vadd.f32 %v451, %v461
      %v467 = vadd.f32 %v452, %v461
      %v468 = vadd.f32 %v453, %v461
      %v469 = vadd.f32 %v454, %v461
      %v470 = vadd.f32 %v455, %v461
      %v471 = vld [vmem:[%s315] sm:$0xf]
      %v472 = vld [vmem:[%s315 + $0x4] sm:$0xf]
      %v473 = vld [vmem:[%s315 + $0x8] sm:$0xf]
      %v474 = vld [vmem:[%s315 + $0xc] sm:$0xf]
      %v475 = vld [vmem:[%s315 + $0x10] sm:$0xf]
      %v476 = vld [vmem:[%s315 + $0x14] sm:$0xf]
      %v477 = vld [vmem:[%s315 + $0x18] sm:$0xf]
      %v478 = vld [vmem:[%s315 + $0x1c] sm:$0xf]
      %v479 = vunpack.c.l.bf16 %v471
      %v480 = vunpack.c.l.bf16 %v472
      %v481 = vunpack.c.l.bf16 %v473
      %v482 = vunpack.c.l.bf16 %v474
      %v483 = vunpack.c.l.bf16 %v475
      %v484 = vunpack.c.l.bf16 %v476
      %v485 = vunpack.c.l.bf16 %v477
      %v486 = vunpack.c.l.bf16 %v478
      %v487 = vadd.f32 %v463, %v479
      %v488 = vadd.f32 %v464, %v480
      %v489 = vadd.f32 %v465, %v481
      %v490 = vadd.f32 %v466, %v482
      %v491 = vadd.f32 %v467, %v483
      %v492 = vadd.f32 %v468, %v484
      %v493 = vadd.f32 %v469, %v485
      %v494 = vadd.f32 %v470, %v486
      %v495 = vmax.f32 %v487, 0.0
      %v496 = vmax.f32 %v488, 0.0
      %v497 = vmax.f32 %v489, 0.0
      %v498 = vmax.f32 %v490, 0.0
      %v499 = vmax.f32 %v491, 0.0
      %v500 = vmax.f32 %v492, 0.0
      %v501 = vmax.f32 %v493, 0.0
      %v502 = vmax.f32 %v494, 0.0
      %v503 = vpack.c.bf16 %v496, %v495
      %v504 = vpack.c.bf16 %v498, %v497
      %v505 = vpack.c.bf16 %v500, %v499
      %v506 = vpack.c.bf16 %v502, %v501
      %v511 = vunpack.c.l.b16 %v503
      %v512 = vunpack.c.h.b16 %v503
      %v513 = vunpack.c.l.b16 %v504
      %v514 = vunpack.c.h.b16 %v504
      %v515 = vunpack.c.l.b16 %v505
      %v516 = vunpack.c.h.b16 %v505
      %v517 = vunpack.c.l.b16 %v506
      %v518 = vunpack.c.h.b16 %v506
      %v519 = vpack.c.b16 %v511, %v511
      %v520 = vpack.c.b16 %v512, %v512
      %v521 = vpack.c.b16 %v513, %v513
      %v522 = vpack.c.b16 %v514, %v514
      %v523 = vpack.c.b16 %v515, %v515
      %v524 = vpack.c.b16 %v516, %v516
      %v525 = vpack.c.b16 %v517, %v517
      %v526 = vpack.c.b16 %v518, %v518
      %vm535 = vcmask 519168
      %536 = vst.msk [vmem:[%s324] sm:$0xf] %vm535, %v519
      %537 = vst.msk [vmem:[%s324 + $0x4] sm:$0xf] %vm535, %v520
      %538 = vst.msk [vmem:[%s324 + $0x8] sm:$0xf] %vm535, %v521
      %539 = vst.msk [vmem:[%s324 + $0xc] sm:$0xf] %vm535, %v522
      %540 = vst.msk [vmem:[%s324 + $0x10] sm:$0xf] %vm535, %v523
      %541 = vst.msk [vmem:[%s324 + $0x14] sm:$0xf] %vm535, %v524
      %542 = vst.msk [vmem:[%s324 + $0x18] sm:$0xf] %vm535, %v525
      %543 = vst.msk [vmem:[%s324 + $0x1c] sm:$0xf] %vm535, %v526
      %s544 = smul.u32 8, %s20
      %p545 = scmp.lt.s32.totalorder %s544, 15
      %s546 = scalar_select %p545, %s544, 15
      %p547 = scmp.lt.s32.totalorder %s21, 0
      %s548 = scalar_select %p547, %s21, 0
      %s549 = sadd.s32 %s548, %s546
      %s550 = smul.addr %s549, 4
      %s551 = scalar_lea.vmem %s5, %s550
      // Predicated region
      $region41: #{fwd.10} parent=39 // pred_check
        %p552 = pneg %p180
      $region42: #{fwd.10} parent=39 // pred_check_branch
        %554 = sbr.rel (%p552) target = $region44
      $region43: #{fwd.10} parent=39 // pred_region
        %s555 = smul.u32 8, %s20
      $region44: #{fwd.10} parent=39 // pred_fallthru
        _
    $region40: #{fwd.10} parent=5 // pred_fallthru
      _
    %p556 = scmp.le.s32.totalorder 2, %s11
    // Predicated region
    $region45: #{fwd.10} parent=5 // pred_check
      %p557 = pneg %p556
    $region46: #{fwd.10} parent=5 // pred_check_branch
      %559 = sbr.rel (%p557) target = $region48
    $region47: #{fwd.10} parent=5 // pred_region
      %s560 = ssub.s32 %s11, 2
      // Predicated region
      $region49: #{fwd.10} parent=47 // pred_check
        %p561 = pneg %p186
      $region50: #{fwd.10} parent=47 // pred_check_branch
        %563 = sbr.rel (%p561) target = $region52
      $region51: #{fwd.10} parent=47 // pred_region
        %s564 = smul.u32 8, %s22
        %p565 = scmp.lt.s32.totalorder %s564, 15
        %s566 = scalar_select %p565, %s564, 15
        %p567 = scmp.lt.s32.totalorder %s23, 0
        %s568 = scalar_select %p567, %s23, 0
        %s569 = sadd.s32 %s568, %s566
        %s570 = smul.addr %s569, 4
        %s571 = scalar_lea.vmem %s5, %s570
      $region52: #{fwd.10} parent=47 // pred_fallthru
        _
    $region48: #{fwd.10} parent=5 // pred_fallthru
      _
  $region6: #{fwd.10} parent=0 // loop_footer
    %s15 = sadd.s32 1, %s11
  $region7: #{fwd.10} parent=0 // loop_footer_branch
    %10 = sbr.rel target = $region3
  $region8: #{fwd.10} parent=0 // loop_exit
    _

// kernel: fwd.11
$region0: #{fwd.11}
  #allocation0 [shape = 'u32[]', space=smem, size = 0x4, offset = 0x4, fixed_abs, tag = 'smem constant byte address 0x4 - core index']
  #allocation1 [shape = 'u32[144,128]{1,0:T(1,128)}', space=vmem, size = 0x12000, scoped, tag = 'internal scratch']
  %s0 = inlined_call_operand.vmem [shape: bf16[128,64], index: 0, kind: input, shape index: {}]
  %s1 = inlined_call_operand.vmem [shape: bf16[64,16], index: 1, kind: input, shape index: {}]
  %s2 = inlined_call_operand.vmem [shape: f32[1,16], index: 2, kind: input, shape index: {}]
  %s3 = inlined_call_operand.vmem [shape: f32[1,16], index: 3, kind: input, shape index: {}]
  %s4 = inlined_call_operand.vmem [shape: bf16[128,16], index: 4, kind: output, shape index: {}]
  %s5 = sld [smem:[#allocation0]]
  $region49: #{fwd.11} parent=0
    _
  %s7 = ssub.s32 1, %s5
  %s8 = scalar_select 0, %s7, %s5
  loop: start=0, step=1, limit=4
  $region2: #{fwd.11} parent=0 // loop_pre_header
    _
  $region3: #{fwd.11} parent=0 // loop_header
    %s10 = sphi 0, %s14
    %p11 = scmp.ge.s32.totalorder %s10, 4
    %s17 = sphi 0, %s29
    %s18 = sphi 0, %s25
    %s19 = sphi 0, %s17
    %s20 = sphi 0, %s18
    %s21 = sphi 0, %s19
    %s22 = sphi 0, %s20
    %s32 = sphi 0, %s34
    %s35 = sphi 0, %s32
    %s36 = sphi 0, %s35
    %s52 = sphi 0, %s36
    %s58 = sphi 0, %s60
    %s61 = sphi 0, %s58
    %s62 = sphi 0, %s61
    %s78 = sphi 0, %s62
    %s84 = sphi 0, %s86
    %s87 = sphi 0, %s84
    %s88 = sphi 0, %s87
    %s104 = sphi 0, %s88
    %s110 = sphi 0, %s112
    %s113 = sphi 0, %s110
    %s114 = sphi 0, %s113
    %s130 = sphi 0, %s114
    %s138 = sphi 0, %s140
    %s141 = sphi 0, %s138
    %s142 = sphi 0, %s141
    %s158 = sphi 0, %s142
  $region4: #{fwd.11} parent=0 // loop_header_branch
    %13 = sbr.rel (%p11) target = $region8
  $region5: #{fwd.11} parent=0 // loop_body
    %s15 = ssub.s32 %s10, 1
    %s16 = ssub.s32 %s10, 2
    %s23 = sadd.s32 1, %s18
    %p24 = scmp.ge.s32.totalorder %s23, 1
    %s25 = scalar_select %p24, 0, %s23
    %s26 = sadd.s32 1, %s17
    %s27 = scalar_select %p24, %s26, %s17
    %p28 = scmp.ge.s32.totalorder %s27, 2
    %s29 = scalar_select %p28, 0, %s27
    %s30 = ssub.s32 %s17, %s29
    %p31 = scmp.eq.s32.totalorder %s30, 0
    %s33 = sadd.s32 %s32, 1
    %s34 = scalar_select %p31, %s32, %s33
    %p37 = pneg %p31
    %p38 = scmp.eq.s32.totalorder %s10, 1
    %p39 = por %p37, %p38
    %p40 = scmp.ne.s32.totalorder %s32, %s35
    %p41 = scmp.eq.s32.totalorder %s10, 0
    %p42 = por %p40, %p41
    %p43 = scmp.ne.s32.totalorder %s32, %s35
    %p44 = scmp.eq.s32.totalorder %s15, 1
    %p45 = por %p43, %p44
    %p46 = scmp.ne.s32.totalorder %s35, %s36
    %p47 = scmp.eq.s32.totalorder %s15, 0
    %p48 = por %p46, %p47
    %p49 = scmp.ne.s32.totalorder %s35, %s36
    %p50 = scmp.eq.s32.totalorder %s16, 1
    %p51 = por %p49, %p50
    %p53 = scmp.ne.s32.totalorder %s36, %s52
    %p54 = scmp.eq.s32.totalorder %s16, 0
    %p55 = por %p53, %p54
    %s56 = ssub.s32 %s18, %s25
    %p57 = scmp.eq.s32.totalorder %s56, 0
    %s59 = sadd.s32 %s58, 1
    %s60 = scalar_select %p57, %s58, %s59
    %p63 = pneg %p57
    %p64 = scmp.eq.s32.totalorder %s10, 1
    %p65 = por %p63, %p64
    %p66 = scmp.ne.s32.totalorder %s58, %s61
    %p67 = scmp.eq.s32.totalorder %s10, 0
    %p68 = por %p66, %p67
    %p69 = scmp.ne.s32.totalorder %s58, %s61
    %p70 = scmp.eq.s32.totalorder %s15, 1
    %p71 = por %p69, %p70
    %p72 = scmp.ne.s32.totalorder %s61, %s62
    %p73 = scmp.eq.s32.totalorder %s15, 0
    %p74 = por %p72, %p73
    %p75 = scmp.ne.s32.totalorder %s61, %s62
    %p76 = scmp.eq.s32.totalorder %s16, 1
    %p77 = por %p75, %p76
    %p79 = scmp.ne.s32.totalorder %s62, %s78
    %p80 = scmp.eq.s32.totalorder %s16, 0
    %p81 = por %p79, %p80
    %s82 = ssub.s32 %s18, %s25
    %p83 = scmp.eq.s32.totalorder %s82, 0
    %s85 = sadd.s32 %s84, 1
    %s86 = scalar_select %p83, %s84, %s85
    %p89 = pneg %p83
    %p90 = scmp.eq.s32.totalorder %s10, 1
    %p91 = por %p89, %p90
    %p92 = scmp.ne.s32.totalorder %s84, %s87
    %p93 = scmp.eq.s32.totalorder %s10, 0
    %p94 = por %p92, %p93
    %p95 = scmp.ne.s32.totalorder %s84, %s87
    %p96 = scmp.eq.s32.totalorder %s15, 1
    %p97 = por %p95, %p96
    %p98 = scmp.ne.s32.totalorder %s87, %s88
    %p99 = scmp.eq.s32.totalorder %s15, 0
    %p100 = por %p98, %p99
    %p101 = scmp.ne.s32.totalorder %s87, %s88
    %p102 = scmp.eq.s32.totalorder %s16, 1
    %p103 = por %p101, %p102
    %p105 = scmp.ne.s32.totalorder %s88, %s104
    %p106 = scmp.eq.s32.totalorder %s16, 0
    %p107 = por %p105, %p106
    %s108 = ssub.s32 %s18, %s25
    %p109 = scmp.eq.s32.totalorder %s108, 0
    %s111 = sadd.s32 %s110, 1
    %s112 = scalar_select %p109, %s110, %s111
    %p115 = pneg %p109
    %p116 = scmp.eq.s32.totalorder %s10, 1
    %p117 = por %p115, %p116
    %p118 = scmp.ne.s32.totalorder %s110, %s113
    %p119 = scmp.eq.s32.totalorder %s10, 0
    %p120 = por %p118, %p119
    %p121 = scmp.ne.s32.totalorder %s110, %s113
    %p122 = scmp.eq.s32.totalorder %s15, 1
    %p123 = por %p121, %p122
    %p124 = scmp.ne.s32.totalorder %s113, %s114
    %p125 = scmp.eq.s32.totalorder %s15, 0
    %p126 = por %p124, %p125
    %p127 = scmp.ne.s32.totalorder %s113, %s114
    %p128 = scmp.eq.s32.totalorder %s16, 1
    %p129 = por %p127, %p128
    %p131 = scmp.ne.s32.totalorder %s114, %s130
    %p132 = scmp.eq.s32.totalorder %s16, 0
    %p133 = por %p131, %p132
    %s134 = ssub.s32 %s17, %s29
    %s135 = ssub.s32 %s18, %s25
    %s136 = sor.u32 %s134, %s135
    %p137 = scmp.eq.s32.totalorder %s136, 0
    %s139 = sadd.s32 %s138, 1
    %s140 = scalar_select %p137, %s138, %s139
    %p143 = pneg %p137
    %p144 = scmp.eq.s32.totalorder %s10, 1
    %p145 = por %p143, %p144
    %p146 = scmp.ne.s32.totalorder %s138, %s141
    %p147 = scmp.eq.s32.totalorder %s10, 0
    %p148 = por %p146, %p147
    %p149 = scmp.ne.s32.totalorder %s138, %s141
    %p150 = scmp.eq.s32.totalorder %s15, 1
    %p151 = por %p149, %p150
    %p152 = scmp.ne.s32.totalorder %s141, %s142
    %p153 = scmp.eq.s32.totalorder %s15, 0
    %p154 = por %p152, %p153
    %p155 = scmp.ne.s32.totalorder %s141, %s142
    %p156 = scmp.eq.s32.totalorder %s16, 1
    %p157 = por %p155, %p156
    %p159 = scmp.ne.s32.totalorder %s142, %s158
    %p160 = scmp.eq.s32.totalorder %s16, 0
    %p161 = por %p159, %p160
    %p162 = scmp.le.s32.totalorder 1, %s10
    %p163 = scmp.lt.s32.totalorder %s10, 3
    %p164 = pnand %p162, %p163
    %p165 = pneg %p164
    // Predicated region
    $region9: #{fwd.11} parent=5 // pred_check
      _
    $region10: #{fwd.11} parent=5 // pred_check_branch
      %167 = sbr.rel (%p164) target = $region12
    $region11: #{fwd.11} parent=5 // pred_region
      %s168 = ssub.s32 %s10, 1
      // Predicated region
      $region13: #{fwd.11} parent=11 // pred_check
        %p169 = pneg %p74
      $region14: #{fwd.11} parent=11 // pred_check_branch
        %171 = sbr.rel (%p169) target = $region16
      $region15: #{fwd.11} parent=11 // pred_region
        %p172 = scmp.lt.s32.totalorder %s20, 0
        %s173 = scalar_select %p172, %s20, 0
        %s174 = smul.addr %s173, 4
        %s175 = scalar_lea.vmem %s1, %s174
      $region16: #{fwd.11} parent=11 // pred_fallthru
        _
      // Predicated region
      $region17: #{fwd.11} parent=11 // pred_check
        %p176 = pneg %p100
      $region18: #{fwd.11} parent=11 // pred_check_branch
        %178 = sbr.rel (%p176) target = $region20
      $region19: #{fwd.11} parent=11 // pred_region
        %p179 = scmp.lt.s32.totalorder %s20, 0
        %s180 = scalar_select %p179, %s20, 0
        %s181 = scalar_lea.vmem %s2, %s180
      $region20: #{fwd.11} parent=11 // pred_fallthru
        _
      // Predicated region
      $region21: #{fwd.11} parent=11 // pred_check
        %p182 = pneg %p126
      $region22: #{fwd.11} parent=11 // pred_check_branch
        %184 = sbr.rel (%p182) target = $region24
      $region23: #{fwd.11} parent=11 // pred_region
        %p185 = scmp.lt.s32.totalorder %s20, 0
        %s186 = scalar_select %p185, %s20, 0
        %s187 = scalar_lea.vmem %s3, %s186
      $region24: #{fwd.11} parent=11 // pred_fallthru
        _
    $region12: #{fwd.11} parent=5 // pred_fallthru
      _
    %p188 = scmp.lt.s32.totalorder %s10, 2
    // Predicated region
    $region25: #{fwd.11} parent=5 // pred_check
      %p189 = pneg %p188
    $region26: #{fwd.11} parent=5 // pred_check_branch
      %191 = sbr.rel (%p189) target = $region28
    $region27: #{fwd.11} parent=5 // pred_region
      // Predicated region
      $region29: #{fwd.11} parent=27 // pred_check
        %p192 = pneg %p42
      $region30: #{fwd.11} parent=27 // pred_check_branch
        %194 = sbr.rel (%p192) target = $region32
      $region31: #{fwd.11} parent=27 // pred_region
        %s195 = smul.u32 8, %s17
        %p196 = scmp.lt.s32.totalorder %s195, 15
        %s197 = scalar_select %p196, %s195, 15
        %s198 = smul.addr %s197, 4
        %s199 = scalar_lea.vmem %s0, %s198
        %s200 = smul.u32 8, %s17
      $region32: #{fwd.11} parent=27 // pred_fallthru
        _
    $region28: #{fwd.11} parent=5 // pred_fallthru
      _
    %p201 = scmp.le.s32.totalorder 1, %s10
    %p202 = scmp.lt.s32.totalorder %s10, 3
    %p203 = pnand %p201, %p202
    %p204 = pneg %p203
    // Predicated region
    $region33: #{fwd.11} parent=5 // pred_check
      _
    $region34: #{fwd.11} parent=5 // pred_check_branch
      %206 = sbr.rel (%p203) target = $region36
    $region35: #{fwd.11} parent=5 // pred_region
      %s207 = ssub.s32 %s10, 1
      %s208 = smul.u32 8, %s19
      %p209 = scmp.lt.s32.totalorder %s208, 15
      %s210 = scalar_select %p209, %s208, 15
      %s211 = smul.addr %s210, 4
      %s212 = scalar_lea.vmem %s0, %s211
      %p213 = pneg %p48
      %p214 = pneg %p45
      %p215 = scmp.lt.s32.totalorder %s20, 0
      %s216 = scalar_select %p215, %s20, 0
      %s217 = smul.addr %s216, 4
      %s218 = scalar_lea.vmem %s1, %s217
      %p219 = pneg %p74
      %p220 = pneg %p71
      %p221 = scmp.lt.s32.totalorder %s20, 0
      %s222 = scalar_select %p221, %s20, 0
      %s223 = scalar_lea.vmem %s2, %s222
      %p224 = pneg %p100
      %p225 = pneg %p97
      %p226 = scmp.lt.s32.totalorder %s20, 0
      %s227 = scalar_select %p226, %s20, 0
      %s228 = scalar_lea.vmem %s3, %s227
      %p229 = pneg %p126
      %p230 = pneg %p123
      %p231 = pneg %p154
      %p232 = pneg %p151
      %s233 = smul.u32 8, %s19
      %p234 = scmp.lt.s32.totalorder %s233, 15
      %s235 = scalar_select %p234, %s233, 15
      %p236 = scmp.lt.s32.totalorder %s20, 0
      %s237 = scalar_select %p236, %s20, 0
      %s238 = sadd.s32 %s237, %s235
      %s239 = smul.addr %s238, 4
      %s240 = scalar_lea.vmem %s4, %s239
      %s241 = smul.u32 8, %s19
      %p242 = scmp.lt.s32.totalorder %s241, 15
      %s243 = scalar_select %p242, %s241, 15
      %s244 = smul.addr %s243, 4
      %s245 = scalar_lea.vmem %s0, %s244
      %s246 = smul.u32 8, %s19
      %p247 = scmp.lt.s32.totalorder %s20, 0
      %s248 = scalar_select %p247, %s20, 0
      %s249 = smul.addr %s248, 4
      %s250 = scalar_lea.vmem %s1, %s249
      %p251 = scmp.lt.s32.totalorder %s20, 0
      %s252 = scalar_select %p251, %s20, 0
      %s253 = scalar_lea.vmem %s2, %s252
      %p254 = scmp.lt.s32.totalorder %s20, 0
      %s255 = scalar_select %p254, %s20, 0
      %s256 = scalar_lea.vmem %s3, %s255
      %s257 = smul.u32 8, %s19
      %p258 = scmp.lt.s32.totalorder %s257, 15
      %s259 = scalar_select %p258, %s257, 15
      %p260 = scmp.lt.s32.totalorder %s20, 0
      %s261 = scalar_select %p260, %s20, 0
      %s262 = sadd.s32 %s261, %s259
      %s263 = smul.addr %s262, 4
      %s264 = scalar_lea.vmem %s4, %s263
      %s265 = smul.u32 8, %s19
      %v267 = vld [vmem:[%s245] sm:$0xf]
      %v268 = vld [vmem:[%s245 + $0x4] sm:$0xf]
      %v269 = vld [vmem:[%s245 + $0x8] sm:$0xf]
      %v270 = vld [vmem:[%s245 + $0xc] sm:$0xf]
      %v271 = vld [vmem:[%s245 + $0x10] sm:$0xf]
      %v272 = vld [vmem:[%s245 + $0x14] sm:$0xf]
      %v273 = vld [vmem:[%s245 + $0x18] sm:$0xf]
      %v274 = vld [vmem:[%s245 + $0x1c] sm:$0xf]
      %v275 = vld [vmem:[%s250] sm:$0xf]
      %v276 = vld [vmem:[%s250 + $0x4] sm:$0xf]
      %v277 = vld [vmem:[%s250 + $0x8] sm:$0xf]
      %v278 = vld [vmem:[%s250 + $0xc] sm:$0xf]
      %v279 = vld [vmem:[%s250 + $0x10] sm:$0xf]
      %v280 = vld [vmem:[%s250 + $0x14] sm:$0xf]
      %v281 = vld [vmem:[%s250 + $0x18] sm:$0xf]
      %v282 = vld [vmem:[%s250 + $0x1c] sm:$0xf]
      %v291 = vunpack.c.l.b16 %v267
      %v292 = vunpack.c.l.b16 %v268
      %v293 = vunpack.c.l.b16 %v269
      %v294 = vunpack.c.l.b16 %v270
      %v295 = vunpack.c.l.b16 %v271
      %v296 = vunpack.c.l.b16 %v272
      %v297 = vunpack.c.l.b16 %v273
      %v298 = vunpack.c.l.b16 %v274
      %v299 = vpack.c.b16 %v292, %v291
      %v300 = vpack.c.b16 %v294, %v293
      %v301 = vpack.c.b16 %v296, %v295
      %v302 = vpack.c.b16 %v298, %v297
      %v311 = vunpack.c.l.b16 %v275
      %v312 = vunpack.c.l.b16 %v276
      %v313 = vunpack.c.l.b16 %v277
      %v314 = vunpack.c.l.b16 %v278
      %v315 = vunpack.c.l.b16 %v279
      %v316 = vunpack.c.l.b16 %v280
      %v317 = vunpack.c.l.b16 %v281
      %v318 = vunpack.c.l.b16 %v282
      %v319 = vpack.c.b16 %v312, %v311
      %v320 = vpack.c.b16 %v314, %v313
      %v321 = vpack.c.b16 %v316, %v315
      %v322 = vpack.c.b16 %v318, %v317
      %vm327 = vcmask 523264
      %v329 = vsel %vm327, %v299, 0
      %v332 = vsel %vm327, %v300, 0
      %v335 = vsel %vm327, %v301, 0
      %v338 = vsel %vm327, %v302, 0
      %340 = vmatprep.subr.bf16.mxu0 0
      %341 = vmatpush1.bf16.msra.mxu0 0
      %342 = vmatprep.subr.bf16.mxu0 0
      %343 = vmatpush1.bf16.msra.mxu0 0
      %344 = vmatprep.subr.bf16.mxu0 0
      %345 = vmatpush1.bf16.msra.mxu0 0
      %346 = vmatprep.subr.bf16.mxu0 0
      %347 = vmatpush1.bf16.msra.mxu0 0
      %348 = vmatprep.subr.bf16.mxu0 0
      %349 = vmatpush1.bf16.msra.mxu0 %v322
      %350 = vmatprep.subr.bf16.mxu0 0
      %351 = vmatpush1.bf16.msra.mxu0 %v321
      %352 = vmatprep.subr.bf16.mxu0 0
      %353 = vmatpush1.bf16.msra.mxu0 %v320
      %354 = vmatprep.subr.bf16.mxu0 0
      %355 = vmatpush1.bf16.msra.mxu0 %v319
      %356 = vmatprep.subr.bf16.mxu0 0
      %357 = vmatpush2.bf16.msra.mxu0 0
      %358 = vmatprep.subr.bf16.mxu0 0
      %359 = vmatpush2.bf16.msra.mxu0 0
      %360 = vmatprep.subr.bf16.mxu0 0
      %361 = vmatpush2.bf16.msra.mxu0 0
      %362 = vmatprep.subr.bf16.mxu0 0
      %363 = vmatpush2.bf16.msra.mxu0 0
      %364 = vmatprep.subr.bf16.mxu0 0
      %365 = vmatpush2.bf16.msra.mxu0 0
      %366 = vmatprep.subr.bf16.mxu0 0
      %367 = vmatpush2.bf16.msra.mxu0 0
      %368 = vmatprep.subr.bf16.mxu0 0
      %369 = vmatpush2.bf16.msra.mxu0 0
      %370 = vmatprep.subr.bf16.mxu0 0
      %371 = vmatpush2.bf16.msra.mxu0 0
      %372 = vmatprep.mubr.bf16.mxu0 0
      %373 = vmatmul.mubr.bf16.gmra.mxu0 %v329
      %v374 = vpop.f32.mrf.mxu0
      %v375 = vadd.f32 0.0, %v374
      %v376 = vpop.f32.mrf.mxu0
      %v377 = vpop.f32.mrf.mxu0
      %v378 = vadd.f32 0.0, %v377
      %v379 = vpop.f32.mrf.mxu0
      %380 = vmatprep.mubr.bf16.mxu0 0
      %381 = vmatmul.mubr.bf16.gmra.mxu0 %v332
      %v382 = vpop.f32.mrf.mxu0
      %v383 = vadd.f32 0.0, %v382
      %v384 = vpop.f32.mrf.mxu0
      %v385 = vpop.f32.mrf.mxu0
      %v386 = vadd.f32 0.0, %v385
      %v387 = vpop.f32.mrf.mxu0
      %388 = vmatprep.mubr.bf16.mxu0 0
      %389 = vmatmul.mubr.bf16.gmra.mxu0 %v335
      %v390 = vpop.f32.mrf.mxu0
      %v391 = vadd.f32 0.0, %v390
      %v392 = vpop.f32.mrf.mxu0
      %v393 = vpop.f32.mrf.mxu0
      %v394 = vadd.f32 0.0, %v393
      %v395 = vpop.f32.mrf.mxu0
      %396 = vmatprep.mubr.bf16.mxu0 0
      %397 = vmatmul.mubr.bf16.gmra.mxu0 %v338
      %v398 = vpop.f32.mrf.mxu0
      %v399 = vadd.f32 0.0, %v398
      %v400 = vpop.f32.mrf.mxu0
      %v401 = vpop.f32.mrf.mxu0
      %v402 = vadd.f32 0.0, %v401
      %v403 = vpop.f32.mrf.mxu0
      %404 = vdwg.mxu0
      %v405 = vld [vmem:[%s253] sm:$0x1]
      %v407 = vlaneseq
      %v408 = vshrl.u32 %v407, 7
      %v409 = vsub.s32 0, %v408
      %v410 = vrot.slane %v405, %v409
      %v412 = vmul.f32 %v375, %v410
      %v413 = vmul.f32 %v378, %v410
      %v414 = vmul.f32 %v383, %v410
      %v415 = vmul.f32 %v386, %v410
      %v416 = vmul.f32 %v391, %v410
      %v417 = vmul.f32 %v394, %v410
      %v418 = vmul.f32 %v399, %v410
      %v419 = vmul.f32 %v402, %v410
      %v420 = vld [vmem:[%s256] sm:$0x1]
      %v422 = vlaneseq
      %v423 = vshrl.u32 %v422, 7
      %v424 = vsub.s32 0, %v423
      %v425 = vrot.slane %v420, %v424
      %v427 = vadd.f32 %v412, %v425
      %v428 = vadd.f32 %v413, %v425
      %v429 = vadd.f32 %v414, %v425
      %v430 = vadd.f32 %v415, %v425
      %v431 = vadd.f32 %v416, %v425
      %v432 = vadd.f32 %v417, %v425
      %v433 = vadd.f32 %v418, %v425
      %v434 = vadd.f32 %v419, %v425
      %v435 = vmax.f32 %v427, 0.0
      %v436 = vmax.f32 %v428, 0.0
      %v437 = vmax.f32 %v429, 0.0
      %v438 = vmax.f32 %v430, 0.0
      %v439 = vmax.f32 %v431, 0.0
      %v440 = vmax.f32 %v432, 0.0
      %v441 = vmax.f32 %v433, 0.0
      %v442 = vmax.f32 %v434, 0.0
      %v443 = vpack.c.bf16 %v436, %v435
      %v444 = vpack.c.bf16 %v438, %v437
      %v445 = vpack.c.bf16 %v440, %v439
      %v446 = vpack.c.bf16 %v442, %v441
      %v451 = vunpack.c.l.b16 %v443
      %v452 = vunpack.c.h.b16 %v443
      %v453 = vunpack.c.l.b16 %v444
      %v454 = vunpack.c.h.b16 %v444
      %v455 = vunpack.c.l.b16 %v445
      %v456 = vunpack.c.h.b16 %v445
      %v457 = vunpack.c.l.b16 %v446
      %v458 = vunpack.c.h.b16 %v446
      %v459 = vpack.c.b16 %v451, %v451
      %v460 = vpack.c.b16 %v452, %v452
      %v461 = vpack.c.b16 %v453, %v453
      %v462 = vpack.c.b16 %v454, %v454
      %v463 = vpack.c.b16 %v455, %v455
      %v464 = vpack.c.b16 %v456, %v456
      %v465 = vpack.c.b16 %v457, %v457
      %v466 = vpack.c.b16 %v458, %v458
      %vm475 = vcmask 125952
      %476 = vst.msk [vmem:[%s264] sm:$0xf] %vm475, %v459
      %477 = vst.msk [vmem:[%s264 + $0x4] sm:$0xf] %vm475, %v460
      %478 = vst.msk [vmem:[%s264 + $0x8] sm:$0xf] %vm475, %v461
      %479 = vst.msk [vmem:[%s264 + $0xc] sm:$0xf] %vm475, %v462
      %480 = vst.msk [vmem:[%s264 + $0x10] sm:$0xf] %vm475, %v463
      %481 = vst.msk [vmem:[%s264 + $0x14] sm:$0xf] %vm475, %v464
      %482 = vst.msk [vmem:[%s264 + $0x18] sm:$0xf] %vm475, %v465
      %483 = vst.msk [vmem:[%s264 + $0x1c] sm:$0xf] %vm475, %v466
      %s484 = smul.u32 8, %s19
      %p485 = scmp.lt.s32.totalorder %s484, 15
      %s486 = scalar_select %p485, %s484, 15
      %p487 = scmp.lt.s32.totalorder %s20, 0
      %s488 = scalar_select %p487, %s20, 0
      %s489 = sadd.s32 %s488, %s486
      %s490 = smul.addr %s489, 4
      %s491 = scalar_lea.vmem %s4, %s490
      // Predicated region
      $region37: #{fwd.11} parent=35 // pred_check
        %p492 = pneg %p151
      $region38: #{fwd.11} parent=35 // pred_check_branch
        %494 = sbr.rel (%p492) target = $region40
      $region39: #{fwd.11} parent=35 // pred_region
        %s495 = smul.u32 8, %s19
      $region40: #{fwd.11} parent=35 // pred_fallthru
        _
    $region36: #{fwd.11} parent=5 // pred_fallthru
      _
    %p496 = scmp.le.s32.totalorder 2, %s10
    // Predicated region
    $region41: #{fwd.11} parent=5 // pred_check
      %p497 = pneg %p496
    $region42: #{fwd.11} parent=5 // pred_check_branch
      %499 = sbr.rel (%p497) target = $region44
    $region43: #{fwd.11} parent=5 // pred_region
      %s500 = ssub.s32 %s10, 2
      // Predicated region
      $region45: #{fwd.11} parent=43 // pred_check
        %p501 = pneg %p157
      $region46: #{fwd.11} parent=43 // pred_check_branch
        %503 = sbr.rel (%p501) target = $region48
      $region47: #{fwd.11} parent=43 // pred_region
        %s504 = smul.u32 8, %s21
        %p505 = scmp.lt.s32.totalorder %s504, 15
        %s506 = scalar_select %p505, %s504, 15
        %p507 = scmp.lt.s32.totalorder %s22, 0
        %s508 = scalar_select %p507, %s22, 0
        %s509 = sadd.s32 %s508, %s506
        %s510 = smul.addr %s509, 4
        %s511 = scalar_lea.vmem %s4, %s510
      $region48: #{fwd.11} parent=43 // pred_fallthru
        _
    $region44: #{fwd.11} parent=5 // pred_fallthru
      _
  $region6: #{fwd.11} parent=0 // loop_footer
    %s14 = sadd.s32 1, %s10
  $region7: #{fwd.11} parent=0 // loop_footer_branch
    %9 = sbr.rel target = $region3
  $region8: #{fwd.11} parent=0 // loop_exit
    _

// kernel: fwd.12
$region0: #{fwd.12}
  #allocation0 [shape = 'u32[]', space=smem, size = 0x4, offset = 0x4, fixed_abs, tag = 'smem constant byte address 0x4 - core index']
  #allocation1 [shape = 'u32[144,128]{1,0:T(1,128)}', space=vmem, size = 0x12000, scoped, tag = 'internal scratch']
  %s0 = inlined_call_operand.vmem [shape: bf16[2,12,12,16], index: 0, kind: input, shape index: {}]
  %s1 = inlined_call_operand.vmem [shape: bf16[9,16,16], index: 1, kind: input, shape index: {}]
  %s2 = inlined_call_operand.vmem [shape: f32[1,16], index: 2, kind: input, shape index: {}]
  %s3 = inlined_call_operand.vmem [shape: f32[1,16], index: 3, kind: input, shape index: {}]
  %s4 = inlined_call_operand.vmem [shape: bf16[2,8,8,16], index: 4, kind: output, shape index: {}]
  %s5 = sld [smem:[#allocation0]]
  $region49: #{fwd.12} parent=0
    _
  %s7 = ssub.s32 1, %s5
  %s8 = scalar_select 0, %s7, %s5
  loop: start=0, step=1, limit=4
  $region2: #{fwd.12} parent=0 // loop_pre_header
    _
  $region3: #{fwd.12} parent=0 // loop_header
    %s10 = sphi 0, %s14
    %p11 = scmp.ge.s32.totalorder %s10, 4
    %s20 = sphi 0, %s22
    %s23 = sphi 0, %s20
    %s24 = sphi 0, %s23
    %s40 = sphi 0, %s24
    %s44 = sphi 0, %s44
    %s46 = sphi 0, %s44
    %s47 = sphi 0, %s46
    %s61 = sphi 0, %s47
    %s65 = sphi 0, %s65
    %s67 = sphi 0, %s65
    %s68 = sphi 0, %s67
    %s82 = sphi 0, %s68
    %s86 = sphi 0, %s86
    %s88 = sphi 0, %s86
    %s89 = sphi 0, %s88
    %s103 = sphi 0, %s89
    %s109 = sphi 0, %s111
    %s112 = sphi 0, %s109
    %s113 = sphi 0, %s112
    %s129 = sphi 0, %s113
  $region4: #{fwd.12} parent=0 // loop_header_branch
    %13 = sbr.rel (%p11) target = $region8
  $region5: #{fwd.12} parent=0 // loop_body
    %s15 = ssub.s32 %s10, 1
    %s16 = ssub.s32 %s10, 2
    %s17 = sadd.s32 %s10, 1
    %s18 = ssub.s32 %s10, %s17
    %p19 = scmp.eq.s32.totalorder %s18, 0
    %s21 = sadd.s32 %s20, 1
    %s22 = scalar_select %p19, %s20, %s21
    %p25 = pneg %p19
    %p26 = scmp.eq.s32.totalorder %s10, 1
    %p27 = por %p25, %p26
    %p28 = scmp.ne.s32.totalorder %s20, %s23
    %p29 = scmp.eq.s32.totalorder %s10, 0
    %p30 = por %p28, %p29
    %p31 = scmp.ne.s32.totalorder %s20, %s23
    %p32 = scmp.eq.s32.totalorder %s15, 1
    %p33 = por %p31, %p32
    %p34 = scmp.ne.s32.totalorder %s23, %s24
    %p35 = scmp.eq.s32.totalorder %s15, 0
    %p36 = por %p34, %p35
    %p37 = scmp.ne.s32.totalorder %s23, %s24
    %p38 = scmp.eq.s32.totalorder %s16, 1
    %p39 = por %p37, %p38
    %p41 = scmp.ne.s32.totalorder %s24, %s40
    %p42 = scmp.eq.s32.totalorder %s16, 0
    %p43 = por %p41, %p42
    %s45 = sadd.s32 %s44, 1
    %p48 = scmp.eq.s32.totalorder %s10, 1
    %p49 = scmp.ne.s32.totalorder %s44, %s46
    %p50 = scmp.eq.s32.totalorder %s10, 0
    %p51 = por %p49, %p50
    %p52 = scmp.ne.s32.totalorder %s44, %s46
    %p53 = scmp.eq.s32.totalorder %s15, 1
    %p54 = por %p52, %p53
    %p55 = scmp.ne.s32.totalorder %s46, %s47
    %p56 = scmp.eq.s32.totalorder %s15, 0
    %p57 = por %p55, %p56
    %p58 = scmp.ne.s32.totalorder %s46, %s47
    %p59 = scmp.eq.s32.totalorder %s16, 1
    %p60 = por %p58, %p59
    %p62 = scmp.ne.s32.totalorder %s47, %s61
    %p63 = scmp.eq.s32.totalorder %s16, 0
    %p64 = por %p62, %p63
    %s66 = sadd.s32 %s65, 1
    %p69 = scmp.eq.s32.totalorder %s10, 1
    %p70 = scmp.ne.s32.totalorder %s65, %s67
    %p71 = scmp.eq.s32.totalorder %s10, 0
    %p72 = por %p70, %p71
    %p73 = scmp.ne.s32.totalorder %s65, %s67
    %p74 = scmp.eq.s32.totalorder %s15, 1
    %p75 = por %p73, %p74
    %p76 = scmp.ne.s32.totalorder %s67, %s68
    %p77 = scmp.eq.s32.totalorder %s15, 0
    %p78 = por %p76, %p77
    %p79 = scmp.ne.s32.totalorder %s67, %s68
    %p80 = scmp.eq.s32.totalorder %s16, 1
    %p81 = por %p79, %p80
    %p83 = scmp.ne.s32.totalorder %s68, %s82
    %p84 = scmp.eq.s32.totalorder %s16, 0
    %p85 = por %p83, %p84
    %s87 = sadd.s32 %s86, 1
    %p90 = scmp.eq.s32.totalorder %s10, 1
    %p91 = scmp.ne.s32.totalorder %s86, %s88
    %p92 = scmp.eq.s32.totalorder %s10, 0
    %p93 = por %p91, %p92
    %p94 = scmp.ne.s32.totalorder %s86, %s88
    %p95 = scmp.eq.s32.totalorder %s15, 1
    %p96 = por %p94, %p95
    %p97 = scmp.ne.s32.totalorder %s88, %s89
    %p98 = scmp.eq.s32.totalorder %s15, 0
    %p99 = por %p97, %p98
    %p100 = scmp.ne.s32.totalorder %s88, %s89
    %p101 = scmp.eq.s32.totalorder %s16, 1
    %p102 = por %p100, %p101
    %p104 = scmp.ne.s32.totalorder %s89, %s103
    %p105 = scmp.eq.s32.totalorder %s16, 0
    %p106 = por %p104, %p105
    %s107 = ssub.s32 %s10, %s17
    %p108 = scmp.eq.s32.totalorder %s107, 0
    %s110 = sadd.s32 %s109, 1
    %s111 = scalar_select %p108, %s109, %s110
    %p114 = pneg %p108
    %p115 = scmp.eq.s32.totalorder %s10, 1
    %p116 = por %p114, %p115
    %p117 = scmp.ne.s32.totalorder %s109, %s112
    %p118 = scmp.eq.s32.totalorder %s10, 0
    %p119 = por %p117, %p118
    %p120 = scmp.ne.s32.totalorder %s109, %s112
    %p121 = scmp.eq.s32.totalorder %s15, 1
    %p122 = por %p120, %p121
    %p123 = scmp.ne.s32.totalorder %s112, %s113
    %p124 = scmp.eq.s32.totalorder %s15, 0
    %p125 = por %p123, %p124
    %p126 = scmp.ne.s32.totalorder %s112, %s113
    %p127 = scmp.eq.s32.totalorder %s16, 1
    %p128 = por %p126, %p127
    %p130 = scmp.ne.s32.totalorder %s113, %s129
    %p131 = scmp.eq.s32.totalorder %s16, 0
    %p132 = por %p130, %p131
    %p133 = scmp.le.s32.totalorder 1, %s10
    %p134 = scmp.lt.s32.totalorder %s10, 3
    %p135 = pnand %p133, %p134
    %p136 = pneg %p135
    // Predicated region
    $region9: #{fwd.12} parent=5 // pred_check
      _
    $region10: #{fwd.12} parent=5 // pred_check_branch
      %138 = sbr.rel (%p135) target = $region12
    $region11: #{fwd.12} parent=5 // pred_region
      %s139 = ssub.s32 %s10, 1
      // Predicated region
      $region13: #{fwd.12} parent=11 // pred_check
        %p140 = pneg %p57
      $region14: #{fwd.12} parent=11 // pred_check_branch
        %142 = sbr.rel (%p140) target = $region16
      $region15: #{fwd.12} parent=11 // pred_region
        _
      $region16: #{fwd.12} parent=11 // pred_fallthru
        _
      // Predicated region
      $region17: #{fwd.12} parent=11 // pred_check
        %p143 = pneg %p78
      $region18: #{fwd.12} parent=11 // pred_check_branch
        %145 = sbr.rel (%p143) target = $region20
      $region19: #{fwd.12} parent=11 // pred_region
        _
      $region20: #{fwd.12} parent=11 // pred_fallthru
        _
      // Predicated region
      $region21: #{fwd.12} parent=11 // pred_check
        %p146 = pneg %p99
      $region22: #{fwd.12} parent=11 // pred_check_branch
        %148 = sbr.rel (%p146) target = $region24
      $region23: #{fwd.12} parent=11 // pred_region
        _
      $region24: #{fwd.12} parent=11 // pred_fallthru
        _
    $region12: #{fwd.12} parent=5 // pred_fallthru
      _
    %p149 = scmp.lt.s32.totalorder %s10, 2
    // Predicated region
    $region25: #{fwd.12} parent=5 // pred_check
      %p150 = pneg %p149
    $region26: #{fwd.12} parent=5 // pred_check_branch
      %152 = sbr.rel (%p150) target = $region28
    $region27: #{fwd.12} parent=5 // pred_region
      // Predicated region
      $region29: #{fwd.12} parent=27 // pred_check
        %p153 = pneg %p30
      $region30: #{fwd.12} parent=27 // pred_check_branch
        %155 = sbr.rel (%p153) target = $region32
      $region31: #{fwd.12} parent=27 // pred_region
        %p156 = scmp.lt.s32.totalorder %s10, 1
        %s157 = scalar_select %p156, %s10, 1
        %s158 = smul.addr %s157, 24
        %s159 = smul.addr %s158, 4
        %s160 = scalar_lea.vmem %s0, %s159
      $region32: #{fwd.12} parent=27 // pred_fallthru
        _
    $region28: #{fwd.12} parent=5 // pred_fallthru
      _
    %p161 = scmp.le.s32.totalorder 1, %s10
    %p162 = scmp.lt.s32.totalorder %s10, 3
    %p163 = pnand %p161, %p162
    %p164 = pneg %p163
    // Predicated region
    $region33: #{fwd.12} parent=5 // pred_check
      _
    $region34: #{fwd.12} parent=5 // pred_check_branch
      %166 = sbr.rel (%p163) target = $region36
    $region35: #{fwd.12} parent=5 // pred_region
      %s167 = ssub.s32 %s10, 1
      %p168 = scmp.lt.s32.totalorder %s15, 1
      %s169 = scalar_select %p168, %s15, 1
      %s170 = smul.addr %s169, 24
      %s171 = smul.addr %s170, 4
      %s172 = scalar_lea.vmem %s0, %s171
      %p173 = pneg %p36
      %p174 = pneg %p33
      %p175 = pneg %p57
      %p176 = pneg %p54
      %p177 = pneg %p78
      %p178 = pneg %p75
      %p179 = pneg %p99
      %p180 = pneg %p96
      %p181 = pneg %p125
      %p182 = pneg %p122
      %p183 = scmp.lt.s32.totalorder %s15, 1
      %s184 = scalar_select %p183, %s15, 1
      %s185 = smul.addr %s184, 8
      %s186 = smul.addr %s185, 4
      %s187 = scalar_lea.vmem %s4, %s186
      %p188 = scmp.lt.s32.totalorder %s15, 1
      %s189 = scalar_select %p188, %s15, 1
      %s190 = smul.addr %s189, 24
      %s191 = smul.addr %s190, 4
      %s192 = scalar_lea.vmem %s0, %s191
      %p193 = scmp.lt.s32.totalorder %s15, 1
      %s194 = scalar_select %p193, %s15, 1
      %s195 = smul.addr %s194, 8
      %s196 = smul.addr %s195, 4
      %s197 = scalar_lea.vmem %s4, %s196
      %v199 = vld [vmem:[%s192] sm:$0xf]
      %v200 = vld [vmem:[%s192 + $0x8] sm:$0xf]
      %v201 = vld [vmem:[%s192 + $0x10] sm:$0xf]
      %v202 = vld [vmem:[%s192 + $0x18] sm:$0xf]
      %v203 = vld [vmem:[%s192 + $0x20] sm:$0xf]
      %v204 = vld [vmem:[%s192 + $0x28] sm:$0xf]
      %v205 = vld [vmem:[%s192 + $0x30] sm:$0xf]
      %v206 = vld [vmem:[%s192 + $0x38] sm:$0xf]
      %v207 = vld [vmem:[%s1] sm:$0xf]
      %v208 = vld [vmem:[%s1 + $0x4] sm:$0xf]
      %v209 = vld [vmem:[%s192] sm:$0xe]
      %v210 = vld [vmem:[%s192 + $0x4] sm:$0x1]
      %v211 = vld [vmem:[%s192 + $0x8] sm:$0xe]
      %v212 = vld [vmem:[%s192 + $0xc] sm:$0x1]
      %v213 = vld [vmem:[%s192 + $0x10] sm:$0xe]
      %v214 = vld [vmem:[%s192 + $0x14] sm:$0x1]
      %v215 = vld [vmem:[%s192 + $0x18] sm:$0xe]
      %v216 = vld [vmem:[%s192 + $0x1c] sm:$0x1]
      %v217 = vld [vmem:[%s192 + $0x20] sm:$0xe]
      %v218 = vld [vmem:[%s192 + $0x24] sm:$0x1]
      %v219 = vld [vmem:[%s192 + $0x28] sm:$0xe]
      %v220 = vld [vmem:[%s192 + $0x2c] sm:$0x1]
      %v221 = vld [vmem:[%s192 + $0x30] sm:$0xe]
      %v222 = vld [vmem:[%s192 + $0x34] sm:$0x1]
      %v223 = vld [vmem:[%s192 + $0x38] sm:$0xe]
      %v224 = vld [vmem:[%s192 + $0x3c] sm:$0x1]
      %vm241 = vcmask 1042432
      %vm242 = vcmask 1046532
      %vm243 = vmor %vm241, %vm242
      %v244 = vrot.slane %v209, 5
      %v245 = vrot.slane %v244, 4
      %v246 = vrot.slane %v210, 5
      %v247 = vsel %vm243, %v245, %v246
      %v248 = vrot.slane %v211, 5
      %v249 = vrot.slane %v248, 4
      %v250 = vrot.slane %v212, 5
      %v251 = vsel %vm243, %v249, %v250
      %v252 = vrot.slane %v213, 5
      %v253 = vrot.slane %v252, 4
      %v254 = vrot.slane %v214, 5
      %v255 = vsel %vm243, %v253, %v254
      %v256 = vrot.slane %v215, 5
      %v257 = vrot.slane %v256, 4
      %v258 = vrot.slane %v216, 5
      %v259 = vsel %vm243, %v257, %v258
      %v260 = vrot.slane %v217, 5
      %v261 = vrot.slane %v260, 4
      %v262 = vrot.slane %v218, 5
      %v263 = vsel %vm243, %v261, %v262
      %v264 = vrot.slane %v219, 5
      %v265 = vrot.slane %v264, 4
      %v266 = vrot.slane %v220, 5
      %v267 = vsel %vm243, %v265, %v266
      %v268 = vrot.slane %v221, 5
      %v269 = vrot.slane %v268, 4
      %v270 = vrot.slane %v222, 5
      %v271 = vsel %vm243, %v269, %v270
      %v272 = vrot.slane %v223, 5
      %v273 = vrot.slane %v272, 4
      %v274 = vrot.slane %v224, 5
      %v275 = vsel %vm243, %v273, %v274
      %s276 = scalar_lea.vmem %s1, 8
      %v277 = vld [vmem:[%s276] sm:$0xf]
      %v278 = vld [vmem:[%s276 + $0x4] sm:$0xf]
      %v279 = vunpack.c.l.b16 %v247
      %v280 = vunpack.c.l.b16 %v251
      %v281 = vunpack.c.l.b16 %v255
      %v282 = vunpack.c.l.b16 %v259
      %v283 = vunpack.c.l.b16 %v263
      %v284 = vunpack.c.l.b16 %v267
      %v285 = vunpack.c.l.b16 %v271
      %v286 = vunpack.c.l.b16 %v275
      %v287 = vpack.c.b16 %v280, %v279
      %v288 = vpack.c.b16 %v282, %v281
      %v289 = vpack.c.b16 %v284, %v283
      %v290 = vpack.c.b16 %v286, %v285
      %v293 = vunpack.c.l.b16 %v277
      %v294 = vunpack.c.l.b16 %v278
      %v295 = vpack.c.b16 %v294, %v293
      %vm297 = vcmask 130048
      %v299 = vsel %vm297, %v287, 0
      %v302 = vsel %vm297, %v288, 0
      %v305 = vsel %vm297, %v289, 0
      %v308 = vsel %vm297, %v290, 0
      %310 = vmatprep.subr.bf16.mxu0 0
      %311 = vmatpush1.bf16.msra.mxu0 0
      %312 = vmatprep.subr.bf16.mxu0 0
      %313 = vmatpush1.bf16.msra.mxu0 0
      %314 = vmatprep.subr.bf16.mxu0 0
      %315 = vmatpush1.bf16.msra.mxu0 0
      %316 = vmatprep.subr.bf16.mxu0 0
      %317 = vmatpush1.bf16.msra.mxu0 0
      %318 = vmatprep.subr.bf16.mxu0 0
      %319 = vmatpush1.bf16.msra.mxu0 0
      %320 = vmatprep.subr.bf16.mxu0 0
      %321 = vmatpush1.bf16.msra.mxu0 0
      %322 = vmatprep.subr.bf16.mxu0 0
      %323 = vmatpush1.bf16.msra.mxu0 0
      %324 = vmatprep.subr.bf16.mxu0 0
      %325 = vmatpush1.bf16.msra.mxu0 %v295
      %326 = vmatprep.subr.bf16.mxu0 0
      %327 = vmatpush2.bf16.msra.mxu0 0
      %328 = vmatprep.subr.bf16.mxu0 0
      %329 = vmatpush2.bf16.msra.mxu0 0
      %330 = vmatprep.subr.bf16.mxu0 0
      %331 = vmatpush2.bf16.msra.mxu0 0
      %332 = vmatprep.subr.bf16.mxu0 0
      %333 = vmatpush2.bf16.msra.mxu0 0
      %334 = vmatprep.subr.bf16.mxu0 0
      %335 = vmatpush2.bf16.msra.mxu0 0
      %336 = vmatprep.subr.bf16.mxu0 0
      %337 = vmatpush2.bf16.msra.mxu0 0
      %338 = vmatprep.subr.bf16.mxu0 0
      %339 = vmatpush2.bf16.msra.mxu0 0
      %340 = vmatprep.subr.bf16.mxu0 0
      %341 = vmatpush2.bf16.msra.mxu0 0
      %342 = vmatprep.mubr.bf16.mxu0 0
      %343 = vmatmul.mubr.bf16.gmra.mxu0 %v299
      %v344 = vpop.f32.mrf.mxu0
      %v345 = vadd.f32 0.0, %v344
      %v346 = vpop.f32.mrf.mxu0
      %v347 = vpop.f32.mrf.mxu0
      %v348 = vadd.f32 0.0, %v347
      %v349 = vpop.f32.mrf.mxu0
      %350 = vmatprep.mubr.bf16.mxu0 0
      %351 = vmatmul.mubr.bf16.gmra.mxu0 %v302
      %v352 = vpop.f32.mrf.mxu0
      %v353 = vadd.f32 0.0, %v352
      %v354 = vpop.f32.mrf.mxu0
      %v355 = vpop.f32.mrf.mxu0
      %v356 = vadd.f32 0.0, %v355
      %v357 = vpop.f32.mrf.mxu0
      %358 = vmatprep.mubr.bf16.mxu0 0
      %359 = vmatmul.mubr.bf16.gmra.mxu0 %v305
      %v360 = vpop.f32.mrf.mxu0
      %v361 = vadd.f32 0.0, %v360
      %v362 = vpop.f32.mrf.mxu0
      %v363 = vpop.f32.mrf.mxu0
      %v364 = vadd.f32 0.0, %v363
      %v365 = vpop.f32.mrf.mxu0
      %366 = vmatprep.mubr.bf16.mxu0 0
      %367 = vmatmul.mubr.bf16.gmra.mxu0 %v308
      %v368 = vpop.f32.mrf.mxu0
      %v369 = vadd.f32 0.0, %v368
      %v370 = vpop.f32.mrf.mxu0
      %v371 = vpop.f32.mrf.mxu0
      %v372 = vadd.f32 0.0, %v371
      %v373 = vpop.f32.mrf.mxu0
      %374 = vdwg.mxu0
      %v383 = vunpack.c.l.b16 %v199
      %v384 = vunpack.c.l.b16 %v200
      %v385 = vunpack.c.l.b16 %v201
      %v386 = vunpack.c.l.b16 %v202
      %v387 = vunpack.c.l.b16 %v203
      %v388 = vunpack.c.l.b16 %v204
      %v389 = vunpack.c.l.b16 %v205
      %v390 = vunpack.c.l.b16 %v206
      %v391 = vpack.c.b16 %v384, %v383
      %v392 = vpack.c.b16 %v386, %v385
      %v393 = vpack.c.b16 %v388, %v387
      %v394 = vpack.c.b16 %v390, %v389
      %v397 = vunpack.c.l.b16 %v207
      %v398 = vunpack.c.l.b16 %v208
      %v399 = vpack.c.b16 %v398, %v397
      %v402 = vsel %vm297, %v391, 0
      %v405 = vsel %vm297, %v392, 0
      %v408 = vsel %vm297, %v393, 0
      %v411 = vsel %vm297, %v394, 0
      %413 = vmatprep.subr.bf16.mxu0 0
      %414 = vmatpush1.bf16.msra.mxu0 0
      %415 = vmatprep.subr.bf16.mxu0 0
      %416 = vmatpush1.bf16.msra.mxu0 0
      %417 = vmatprep.subr.bf16.mxu0 0
      %418 = vmatpush1.bf16.msra.mxu0 0
      %419 = vmatprep.subr.bf16.mxu0 0
      %420 = vmatpush1.bf16.msra.mxu0 0
      %421 = vmatprep.subr.bf16.mxu0 0
      %422 = vmatpush1.bf16.msra.mxu0 0
      %423 = vmatprep.subr.bf16.mxu0 0
      %424 = vmatpush1.bf16.msra.mxu0 0
      %425 = vmatprep.subr.bf16.mxu0 0
      %426 = vmatpush1.bf16.msra.mxu0 0
      %427 = vmatprep.subr.bf16.mxu0 0
      %428 = vmatpush1.bf16.msra.mxu0 %v399
      %429 = vmatprep.subr.bf16.mxu0 0
      %430 = vmatpush2.bf16.msra.mxu0 0
      %431 = vmatprep.subr.bf16.mxu0 0
      %432 = vmatpush2.bf16.msra.mxu0 0
      %433 = vmatprep.subr.bf16.mxu0 0
      %434 = vmatpush2.bf16.msra.mxu0 0
      %435 = vmatprep.subr.bf16.mxu0 0
      %436 = vmatpush2.bf16.msra.mxu0 0
      %437 = vmatprep.subr.bf16.mxu0 0
      %438 = vmatpush2.bf16.msra.mxu0 0
      %439 = vmatprep.subr.bf16.mxu0 0
      %440 = vmatpush2.bf16.msra.mxu0 0
      %441 = vmatprep.subr.bf16.mxu0 0
      %442 = vmatpush2.bf16.msra.mxu0 0
      %443 = vmatprep.subr.bf16.mxu0 0
      %444 = vmatpush2.bf16.msra.mxu0 0
      %445 = vmatprep.mubr.bf16.mxu0 0
      %446 = vmatmul.mubr.bf16.gmra.mxu0 %v402
      %v447 = vpop.f32.mrf.mxu0
      %v448 = vadd.f32 %v345, %v447
      %v449 = vpop.f32.mrf.mxu0
      %v450 = vpop.f32.mrf.mxu0
      %v451 = vadd.f32 %v348, %v450
      %v452 = vpop.f32.mrf.mxu0
      %453 = vmatprep.mubr.bf16.mxu0 0
      %454 = vmatmul.mubr.bf16.gmra.mxu0 %v405
      %v455 = vpop.f32.mrf.mxu0
      %v456 = vadd.f32 %v353, %v455
      %v457 = vpop.f32.mrf.mxu0
      %v458 = vpop.f32.mrf.mxu0
      %v459 = vadd.f32 %v356, %v458
      %v460 = vpop.f32.mrf.mxu0
      %461 = vmatprep.mubr.bf16.mxu0 0
      %462 = vmatmul.mubr.bf16.gmra.mxu0 %v408
      %v463 = vpop.f32.mrf.mxu0
      %v464 = vadd.f32 %v361, %v463
      %v465 = vpop.f32.mrf.mxu0
      %v466 = vpop.f32.mrf.mxu0
      %v467 = vadd.f32 %v364, %v466
      %v468 = vpop.f32.mrf.mxu0
      %469 = vmatprep.mubr.bf16.mxu0 0
      %470 = vmatmul.mubr.bf16.gmra.mxu0 %v411
      %v471 = vpop.f32.mrf.mxu0
      %v472 = vadd.f32 %v369, %v471
      %v473 = vpop.f32.mrf.mxu0
      %v474 = vpop.f32.mrf.mxu0
      %v475 = vadd.f32 %v372, %v474
      %v476 = vpop.f32.mrf.mxu0
      %477 = vdwg.mxu0
      %v478 = vld [vmem:[%s192] sm:$0xc]
      %v479 = vld [vmem:[%s192 + $0x4] sm:$0x3]
      %v480 = vld [vmem:[%s192 + $0x8] sm:$0xc]
      %v481 = vld [vmem:[%s192 + $0xc] sm:$0x3]
      %v482 = vld [vmem:[%s192 + $0x10] sm:$0xc]
      %v483 = vld [vmem:[%s192 + $0x14] sm:$0x3]
      %v484 = vld [vmem:[%s192 + $0x18] sm:$0xc]
      %v485 = vld [vmem:[%s192 + $0x1c] sm:$0x3]
      %v486 = vld [vmem:[%s192 + $0x20] sm:$0xc]
      %v487 = vld [vmem:[%s192 + $0x24] sm:$0x3]
      %v488 = vld [vmem:[%s192 + $0x28] sm:$0xc]
      %v489 = vld [vmem:[%s192 + $0x2c] sm:$0x3]
      %v490 = vld [vmem:[%s192 + $0x30] sm:$0xc]
      %v491 = vld [vmem:[%s192 + $0x34] sm:$0x3]
      %v492 = vld [vmem:[%s192 + $0x38] sm:$0xc]
      %v493 = vld [vmem:[%s192 + $0x3c] sm:$0x3]
      %vm510 = vcmask 1041408
      %vm511 = vcmask 1045508
      %vm512 = vmor %vm510, %vm511
      %v513 = vrot.slane %v478, 6
      %v514 = vrot.slane %v513, 4
      %v515 = vrot.slane %v479, 6
      %v516 = vsel %vm512, %v514, %v515
      %v517 = vrot.slane %v480, 6
      %v518 = vrot.slane %v517, 4
      %v519 = vrot.slane %v481, 6
      %v520 = vsel %vm512, %v518, %v519
      %v521 = vrot.slane %v482, 6
      %v522 = vrot.slane %v521, 4
      %v523 = vrot.slane %v483, 6
      %v524 = vsel %vm512, %v522, %v523
      %v525 = vrot.slane %v484, 6
      %v526 = vrot.slane %v525, 4
      %v527 = vrot.slane %v485, 6
      %v528 = vsel %vm512, %v526, %v527
      %v529 = vrot.slane %v486, 6
      %v530 = vrot.slane %v529, 4
      %v531 = vrot.slane %v487, 6
      %v532 = vsel %vm512, %v530, %v531
      %v533 = vrot.slane %v488, 6
      %v534 = vrot.slane %v533, 4
      %v535 = vrot.slane %v489, 6
      %v536 = vsel %vm512, %v534, %v535
      %v537 = vrot.slane %v490, 6
      %v538 = vrot.slane %v537, 4
      %v539 = vrot.slane %v491, 6
      %v540 = vsel %vm512, %v538, %v539
      %v541 = vrot.slane %v492, 6
      %v542 = vrot.slane %v541, 4
      %v543 = vrot.slane %v493, 6
      %v544 = vsel %vm512, %v542, %v543
      %s545 = scalar_lea.vmem %s1, 16
      %v546 = vld [vmem:[%s545] sm:$0xf]
      %v547 = vld [vmem:[%s545 + $0x4] sm:$0xf]
      %v548 = vunpack.c.l.b16 %v516
      %v549 = vunpack.c.l.b16 %v520
      %v550 = vunpack.c.l.b16 %v524
      %v551 = vunpack.c.l.b16 %v528
      %v552 = vunpack.c.l.b16 %v532
      %v553 = vunpack.c.l.b16 %v536
      %v554 = vunpack.c.l.b16 %v540
      %v555 = vunpack.c.l.b16 %v544
      %v556 = vpack.c.b16 %v549, %v548
      %v557 = vpack.c.b16 %v551, %v550
      %v558 = vpack.c.b16 %v553, %v552
      %v559 = vpack.c.b16 %v555, %v554
      %v562 = vunpack.c.l.b16 %v546
      %v563 = vunpack.c.l.b16 %v547
      %v564 = vpack.c.b16 %v563, %v562
      %v567 = vsel %vm297, %v556, 0
      %v570 = vsel %vm297, %v557, 0
      %v573 = vsel %vm297, %v558, 0
      %v576 = vsel %vm297, %v559, 0
      %578 = vmatprep.subr.bf16.mxu0 0
      %579 = vmatpush1.bf16.msra.mxu0 0
      %580 = vmatprep.subr.bf16.mxu0 0
      %581 = vmatpush1.bf16.msra.mxu0 0
      %582 = vmatprep.subr.bf16.mxu0 0
      %583 = vmatpush1.bf16.msra.mxu0 0
      %584 = vmatprep.subr.bf16.mxu0 0
      %585 = vmatpush1.bf16.msra.mxu0 0
      %586 = vmatprep.subr.bf16.mxu0 0
      %587 = vmatpush1.bf16.msra.mxu0 0
      %588 = vmatprep.subr.bf16.mxu0 0
      %589 = vmatpush1.bf16.msra.mxu0 0
      %590 = vmatprep.subr.bf16.mxu0 0
      %591 = vmatpush1.bf16.msra.mxu0 0
      %592 = vmatprep.subr.bf16.mxu0 0
      %593 = vmatpush1.bf16.msra.mxu0 %v564
      %594 = vmatprep.subr.bf16.mxu0 0
      %595 = vmatpush2.bf16.msra.mxu0 0
      %596 = vmatprep.subr.bf16.mxu0 0
      %597 = vmatpush2.bf16.msra.mxu0 0
      %598 = vmatprep.subr.bf16.mxu0 0
      %599 = vmatpush2.bf16.msra.mxu0 0
      %600 = vmatprep.subr.bf16.mxu0 0
      %601 = vmatpush2.bf16.msra.mxu0 0
      %602 = vmatprep.subr.bf16.mxu0 0
      %603 = vmatpush2.bf16.msra.mxu0 0
      %604 = vmatprep.subr.bf16.mxu0 0
      %605 = vmatpush2.bf16.msra.mxu0 0
      %606 = vmatprep.subr.bf16.mxu0 0
      %607 = vmatpush2.bf16.msra.mxu0 0
      %608 = vmatprep.subr.bf16.mxu0 0
      %609 = vmatpush2.bf16.msra.mxu0 0
      %610 = vmatprep.mubr.bf16.mxu0 0
      %611 = vmatmul.mubr.bf16.gmra.mxu0 %v567
      %v612 = vpop.f32.mrf.mxu0
      %v613 = vadd.f32 0.0, %v612
      %v614 = vpop.f32.mrf.mxu0
      %v615 = vpop.f32.mrf.mxu0
      %v616 = vadd.f32 0.0, %v615
      %v617 = vpop.f32.mrf.mxu0
      %618 = vmatprep.mubr.bf16.mxu0 0
      %619 = vmatmul.mubr.bf16.gmra.mxu0 %v570
      %v620 = vpop.f32.mrf.mxu0
      %v621 = vadd.f32 0.0, %v620
      %v622 = vpop.f32.mrf.mxu0
      %v623 = vpop.f32.mrf.mxu0
      %v624 = vadd.f32 0.0, %v623
      %v625 = vpop.f32.mrf.mxu0
      %626 = vmatprep.mubr.bf16.mxu0 0
      %627 = vmatmul.mubr.bf16.gmra.mxu0 %v573
      %v628 = vpop.f32.mrf.mxu0
      %v629 = vadd.f32 0.0, %v628
      %v630 = vpop.f32.mrf.mxu0
      %v631 = vpop.f32.mrf.mxu0
      %v632 = vadd.f32 0.0, %v631
      %v633 = vpop.f32.mrf.mxu0
      %634 = vmatprep.mubr.bf16.mxu0 0
      %635 = vmatmul.mubr.bf16.gmra.mxu0 %v576
      %v636 = vpop.f32.mrf.mxu0
      %v637 = vadd.f32 0.0, %v636
      %v638 = vpop.f32.mrf.mxu0
      %v639 = vpop.f32.mrf.mxu0
      %v640 = vadd.f32 0.0, %v639
      %v641 = vpop.f32.mrf.mxu0
      %642 = vdwg.mxu0
      %v643 = vadd.f32 %v448, %v613
      %v644 = vadd.f32 %v451, %v616
      %v645 = vadd.f32 %v456, %v621
      %v646 = vadd.f32 %v459, %v624
      %v647 = vadd.f32 %v464, %v629
      %v648 = vadd.f32 %v467, %v632
      %v649 = vadd.f32 %v472, %v637
      %v650 = vadd.f32 %v475, %v640
      %s651 = scalar_lea.vmem %s192, 16
      %v652 = vld [vmem:[%s651] sm:$0xf]
      %v653 = vld [vmem:[%s651 + $0x8] sm:$0xf]
      %v654 = vld [vmem:[%s651 + $0x10] sm:$0xf]
      %v655 = vld [vmem:[%s651 + $0x18] sm:$0xf]
      %v656 = vld [vmem:[%s651 + $0x20] sm:$0xf]
      %v657 = vld [vmem:[%s651 + $0x28] sm:$0xf]
      %v658 = vld [vmem:[%s651 + $0x30] sm:$0xf]
      %v659 = vld [vmem:[%s651 + $0x38] sm:$0xf]
      %s660 = scalar_lea.vmem %s1, 24
      %v661 = vld [vmem:[%s660] sm:$0xf]
      %v662 = vld [vmem:[%s660 + $0x4] sm:$0xf]
      %v671 = vunpack.c.l.b16 %v652
      %v672 = vunpack.c.l.b16 %v653
      %v673 = vunpack.c.l.b16 %v654
      %v674 = vunpack.c.l.b16 %v655
      %v675 = vunpack.c.l.b16 %v656
      %v676 = vunpack.c.l.b16 %v657
      %v677 = vunpack.c.l.b16 %v658
      %v678 = vunpack.c.l.b16 %v659
      %v679 = vpack.c.b16 %v672, %v671
      %v680 = vpack.c.b16 %v674, %v673
      %v681 = vpack.c.b16 %v676, %v675
      %v682 = vpack.c.b16 %v678, %v677
      %v685 = vunpack.c.l.b16 %v661
      %v686 = vunpack.c.l.b16 %v662
      %v687 = vpack.c.b16 %v686, %v685
      %v690 = vsel %vm297, %v679, 0
      %v693 = vsel %vm297, %v680, 0
      %v696 = vsel %vm297, %v681, 0
      %v699 = vsel %vm297, %v682, 0
      %701 = vmatprep.subr.bf16.mxu0 0
      %702 = vmatpush1.bf16.msra.mxu0 0
      %703 = vmatprep.subr.bf16.mxu0 0
      %704 = vmatpush1.bf16.msra.mxu0 0
      %705 = vmatprep.subr.bf16.mxu0 0
      %706 = vmatpush1.bf16.msra.mxu0 0
      %707 = vmatprep.subr.bf16.mxu0 0
      %708 = vmatpush1.bf16.msra.mxu0 0
      %709 = vmatprep.subr.bf16.mxu0 0
      %710 = vmatpush1.bf16.msra.mxu0 0
      %711 = vmatprep.subr.bf16.mxu0 0
      %712 = vmatpush1.bf16.msra.mxu0 0
      %713 = vmatprep.subr.bf16.mxu0 0
      %714 = vmatpush1.bf16.msra.mxu0 0
      %715 = vmatprep.subr.bf16.mxu0 0
      %716 = vmatpush1.bf16.msra.mxu0 %v687
      %717 = vmatprep.subr.bf16.mxu0 0
      %718 = vmatpush2.bf16.msra.mxu0 0
      %719 = vmatprep.subr.bf16.mxu0 0
      %720 = vmatpush2.bf16.msra.mxu0 0
      %721 = vmatprep.subr.bf16.mxu0 0
      %722 = vmatpush2.bf16.msra.mxu0 0
      %723 = vmatprep.subr.bf16.mxu0 0
      %724 = vmatpush2.bf16.msra.mxu0 0
      %725 = vmatprep.subr.bf16.mxu0 0
      %726 = vmatpush2.bf16.msra.mxu0 0
      %727 = vmatprep.subr.bf16.mxu0 0
      %728 = vmatpush2.bf16.msra.mxu0 0
      %729 = vmatprep.subr.bf16.mxu0 0
      %730 = vmatpush2.bf16.msra.mxu0 0
      %731 = vmatprep.subr.bf16.mxu0 0
      %732 = vmatpush2.bf16.msra.mxu0 0
      %733 = vmatprep.mubr.bf16.mxu0 0
      %734 = vmatmul.mubr.bf16.gmra.mxu0 %v690
      %v735 = vpop.f32.mrf.mxu0
      %v736 = vadd.f32 0.0, %v735
      %v737 = vpop.f32.mrf.mxu0
      %v738 = vpop.f32.mrf.mxu0
      %v739 = vadd.f32 0.0, %v738
      %v740 = vpop.f32.mrf.mxu0
      %741 = vmatprep.mubr.bf16.mxu0 0
      %742 = vmatmul.mubr.bf16.gmra.mxu0 %v693
      %v743 = vpop.f32.mrf.mxu0
      %v744 = vadd.f32 0.0, %v743
      %v745 = vpop.f32.mrf.mxu0
      %v746 = vpop.f32.mrf.mxu0
      %v747 = vadd.f32 0.0, %v746
      %v748 = vpop.f32.mrf.mxu0
      %749 = vmatprep.mubr.bf16.mxu0 0
      %750 = vmatmul.mubr.bf16.gmra.mxu0 %v696
      %v751 = vpop.f32.mrf.mxu0
      %v752 = vadd.f32 0.0, %v751
      %v753 = vpop.f32.mrf.mxu0
      %v754 = vpop.f32.mrf.mxu0
      %v755 = vadd.f32 0.0, %v754
      %v756 = vpop.f32.mrf.mxu0
      %757 = vmatprep.mubr.bf16.mxu0 0
      %758 = vmatmul.mubr.bf16.gmra.mxu0 %v699
      %v759 = vpop.f32.mrf.mxu0
      %v760 = vadd.f32 0.0, %v759
      %v761 = vpop.f32.mrf.mxu0
      %v762 = vpop.f32.mrf.mxu0
      %v763 = vadd.f32 0.0, %v762
      %v764 = vpop.f32.mrf.mxu0
      %765 = vdwg.mxu0
      %v766 = vadd.f32 %v643, %v736
      %v767 = vadd.f32 %v644, %v739
      %v768 = vadd.f32 %v645, %v744
      %v769 = vadd.f32 %v646, %v747
      %v770 = vadd.f32 %v647, %v752
      %v771 = vadd.f32 %v648, %v755
      %v772 = vadd.f32 %v649, %v760
      %v773 = vadd.f32 %v650, %v763
      %v774 = vld [vmem:[%s651] sm:$0xe]
      %v775 = vld [vmem:[%s651 + $0x4] sm:$0x1]
      %v776 = vld [vmem:[%s651 + $0x8] sm:$0xe]
      %v777 = vld [vmem:[%s651 + $0xc] sm:$0x1]
      %v778 = vld [vmem:[%s651 + $0x10] sm:$0xe]
      %v779 = vld [vmem:[%s651 + $0x14] sm:$0x1]
      %v780 = vld [vmem:[%s651 + $0x18] sm:$0xe]
      %v781 = vld [vmem:[%s651 + $0x1c] sm:$0x1]
      %v782 = vld [vmem:[%s651 + $0x20] sm:$0xe]
      %v783 = vld [vmem:[%s651 + $0x24] sm:$0x1]
      %v784 = vld [vmem:[%s651 + $0x28] sm:$0xe]
      %v785 = vld [vmem:[%s651 + $0x2c] sm:$0x1]
      %v786 = vld [vmem:[%s651 + $0x30] sm:$0xe]
      %v787 = vld [vmem:[%s651 + $0x34] sm:$0x1]
      %v788 = vld [vmem:[%s651 + $0x38] sm:$0xe]
      %v789 = vld [vmem:[%s651 + $0x3c] sm:$0x1]
      %v806 = vrot.slane %v774, 5
      %v807 = vrot.slane %v806, 4
      %v808 = vrot.slane %v775, 5
      %v809 = vsel %vm243, %v807, %v808
      %v810 = vrot.slane %v776, 5
      %v811 = vrot.slane %v810, 4
      %v812 = vrot.slane %v777, 5
      %v813 = vsel %vm243, %v811, %v812
      %v814 = vrot.slane %v778, 5
      %v815 = vrot.slane %v814, 4
      %v816 = vrot.slane %v779, 5
      %v817 = vsel %vm243, %v815, %v816
      %v818 = vrot.slane %v780, 5
      %v819 = vrot.slane %v818, 4
      %v820 = vrot.slane %v781, 5
      %v821 = vsel %vm243, %v819, %v820
      %v822 = vrot.slane %v782, 5
      %v823 = vrot.slane %v822, 4
      %v824 = vrot.slane %v783, 5
      %v825 = vsel %vm243, %v823, %v824
      %v826 = vrot.slane %v784, 5
      %v827 = vrot.slane %v826, 4
      %v828 = vrot.slane %v785, 5
      %v829 = vsel %vm243, %v827, %v828
      %v830 = vrot.slane %v786, 5
      %v831 = vrot.slane %v830, 4
      %v832 = vrot.slane %v787, 5
      %v833 = vsel %vm243, %v831, %v832
      %v834 = vrot.slane %v788, 5
      %v835 = vrot.slane %v834, 4
      %v836 = vrot.slane %v789, 5
      %v837 = vsel %vm243, %v835, %v836
      %s838 = scalar_lea.vmem %s1, 32
      %v839 = vld [vmem:[%s838] sm:$0xf]
      %v840 = vld [vmem:[%s838 + $0x4] sm:$0xf]
      %v841 = vunpack.c.l.b16 %v809
      %v842 = vunpack.c.l.b16 %v813
      %v843 = vunpack.c.l.b16 %v817
      %v844 = vunpack.c.l.b16 %v821
      %v845 = vunpack.c.l.b16 %v825
      %v846 = vunpack.c.l.b16 %v829
      %v847 = vunpack.c.l.b16 %v833
      %v848 = vunpack.c.l.b16 %v837
      %v849 = vpack.c.b16 %v842, %v841
      %v850 = vpack.c.b16 %v844, %v843
      %v851 = vpack.c.b16 %v846, %v845
      %v852 = vpack.c.b16 %v848, %v847
      %v855 = vunpack.c.l.b16 %v839
      %v856 = vunpack.c.l.b16 %v840
      %v857 = vpack.c.b16 %v856, %v855
      %v860 = vsel %vm297, %v849, 0
      %v863 = vsel %vm297, %v850, 0
      %v866 = vsel %vm297, %v851, 0
      %v869 = vsel %vm297, %v852, 0
      %871 = vmatprep.subr.bf16.mxu0 0
      %872 = vmatpush1.bf16.msra.mxu0 0
      %873 = vmatprep.subr.bf16.mxu0 0
      %874 = vmatpush1.bf16.msra.mxu0 0
      %875 = vmatprep.subr.bf16.mxu0 0
      %876 = vmatpush1.bf16.msra.mxu0 0
      %877 = vmatprep.subr.bf16.mxu0 0
      %878 = vmatpush1.bf16.msra.mxu0 0
      %879 = vmatprep.subr.bf16.mxu0 0
      %880 = vmatpush1.bf16.msra.mxu0 0
      %881 = vmatprep.subr.bf16.mxu0 0
      %882 = vmatpush1.bf16.msra.mxu0 0
      %883 = vmatprep.subr.bf16.mxu0 0
      %884 = vmatpush1.bf16.msra.mxu0 0
      %885 = vmatprep.subr.bf16.mxu0 0
      %886 = vmatpush1.bf16.msra.mxu0 %v857
      %887 = vmatprep.subr.bf16.mxu0 0
      %888 = vmatpush2.bf16.msra.mxu0 0
      %889 = vmatprep.subr.bf16.mxu0 0
      %890 = vmatpush2.bf16.msra.mxu0 0
      %891 = vmatprep.subr.bf16.mxu0 0
      %892 = vmatpush2.bf16.msra.mxu0 0
      %893 = vmatprep.subr.bf16.mxu0 0
      %894 = vmatpush2.bf16.msra.mxu0 0
      %895 = vmatprep.subr.bf16.mxu0 0
      %896 = vmatpush2.bf16.msra.mxu0 0
      %897 = vmatprep.subr.bf16.mxu0 0
      %898 = vmatpush2.bf16.msra.mxu0 0
      %899 = vmatprep.subr.bf16.mxu0 0
      %900 = vmatpush2.bf16.msra.mxu0 0
      %901 = vmatprep.subr.bf16.mxu0 0
      %902 = vmatpush2.bf16.msra.mxu0 0
      %903 = vmatprep.mubr.bf16.mxu0 0
      %904 = vmatmul.mubr.bf16.gmra.mxu0 %v860
      %v905 = vpop.f32.mrf.mxu0
      %v906 = vadd.f32 0.0, %v905
      %v907 = vpop.f32.mrf.mxu0
      %v908 = vpop.f32.mrf.mxu0
      %v909 = vadd.f32 0.0, %v908
      %v910 = vpop.f32.mrf.mxu0
      %911 = vmatprep.mubr.bf16.mxu0 0
      %912 = vmatmul.mubr.bf16.gmra.mxu0 %v863
      %v913 = vpop.f32.mrf.mxu0
      %v914 = vadd.f32 0.0, %v913
      %v915 = vpop.f32.mrf.mxu0
      %v916 = vpop.f32.mrf.mxu0
      %v917 = vadd.f32 0.0, %v916
      %v918 = vpop.f32.mrf.mxu0
      %919 = vmatprep.mubr.bf16.mxu0 0
      %920 = vmatmul.mubr.bf16.gmra.mxu0 %v866
      %v921 = vpop.f32.mrf.mxu0
      %v922 = vadd.f32 0.0, %v921
      %v923 = vpop.f32.mrf.mxu0
      %v924 = vpop.f32.mrf.mxu0
      %v925 = vadd.f32 0.0, %v924
      %v926 = vpop.f32.mrf.mxu0
      %927 = vmatprep.mubr.bf16.mxu0 0
      %928 = vmatmul.mubr.bf16.gmra.mxu0 %v869
      %v929 = vpop.f32.mrf.mxu0
      %v930 = vadd.f32 0.0, %v929
      %v931 = vpop.f32.mrf.mxu0
      %v932 = vpop.f32.mrf.mxu0
      %v933 = vadd.f32 0.0, %v932
      %v934 = vpop.f32.mrf.mxu0
      %935 = vdwg.mxu0
      %v936 = vadd.f32 %v766, %v906
      %v937 = vadd.f32 %v767, %v909
      %v938 = vadd.f32 %v768, %v914
      %v939 = vadd.f32 %v769, %v917
      %v940 = vadd.f32 %v770, %v922
      %v941 = vadd.f32 %v771, %v925
      %v942 = vadd.f32 %v772, %v930
      %v943 = vadd.f32 %v773, %v933
      %v944 = vld [vmem:[%s651] sm:$0xc]
      %v945 = vld [vmem:[%s651 + $0x4] sm:$0x3]
      %v946 = vld [vmem:[%s651 + $0x8] sm:$0xc]
      %v947 = vld [vmem:[%s651 + $0xc] sm:$0x3]
      %v948 = vld [vmem:[%s651 + $0x10] sm:$0xc]
      %v949 = vld [vmem:[%s651 + $0x14] sm:$0x3]
      %v950 = vld [vmem:[%s651 + $0x18] sm:$0xc]
      %v951 = vld [vmem:[%s651 + $0x1c] sm:$0x3]
      %v952 = vld [vmem:[%s651 + $0x20] sm:$0xc]
      %v953 = vld [vmem:[%s651 + $0x24] sm:$0x3]
      %v954 = vld [vmem:[%s651 + $0x28] sm:$0xc]
      %v955 = vld [vmem:[%s651 + $0x2c] sm:$0x3]
      %v956 = vld [vmem:[%s651 + $0x30] sm:$0xc]
      %v957 = vld [vmem:[%s651 + $0x34] sm:$0x3]
      %v958 = vld [vmem:[%s651 + $0x38] sm:$0xc]
      %v959 = vld [vmem:[%s651 + $0x3c] sm:$0x3]
      %v976 = vrot.slane %v944, 6
      %v977 = vrot.slane %v976, 4
      %v978 = vrot.slane %v945, 6
      %v979 = vsel %vm512, %v977, %v978
      %v980 = vrot.slane %v946, 6
      %v981 = vrot.slane %v980, 4
      %v982 = vrot.slane %v947, 6
      %v983 = vsel %vm512, %v981, %v982
      %v984 = vrot.slane %v948, 6
      %v985 = vrot.slane %v984, 4
      %v986 = vrot.slane %v949, 6
      %v987 = vsel %vm512, %v985, %v986
      %v988 = vrot.slane %v950, 6
      %v989 = vrot.slane %v988, 4
      %v990 = vrot.slane %v951, 6
      %v991 = vsel %vm512, %v989, %v990
      %v992 = vrot.slane %v952, 6
      %v993 = vrot.slane %v992, 4
      %v994 = vrot.slane %v953, 6
      %v995 = vsel %vm512, %v993, %v994
      %v996 = vrot.slane %v954, 6
      %v997 = vrot.slane %v996, 4
      %v998 = vrot.slane %v955, 6
      %v999 = vsel %vm512, %v997, %v998
      %v1000 = vrot.slane %v956, 6
      %v1001 = vrot.slane %v1000, 4
      %v1002 = vrot.slane %v957, 6
      %v1003 = vsel %vm512, %v1001, %v1002
      %v1004 = vrot.slane %v958, 6
      %v1005 = vrot.slane %v1004, 4
      %v1006 = vrot.slane %v959, 6
      %v1007 = vsel %vm512, %v1005, %v1006
      %s1008 = scalar_lea.vmem %s1, 40
      %v1009 = vld [vmem:[%s1008] sm:$0xf]
      %v1010 = vld [vmem:[%s1008 + $0x4] sm:$0xf]
      %v1011 = vunpack.c.l.b16 %v979
      %v1012 = vunpack.c.l.b16 %v983
      %v1013 = vunpack.c.l.b16 %v987
      %v1014 = vunpack.c.l.b16 %v991
      %v1015 = vunpack.c.l.b16 %v995
      %v1016 = vunpack.c.l.b16 %v999
      %v1017 = vunpack.c.l.b16 %v1003
      %v1018 = vunpack.c.l.b16 %v1007
      %v1019 = vpack.c.b16 %v1012, %v1011
      %v1020 = vpack.c.b16 %v1014, %v1013
      %v1021 = vpack.c.b16 %v1016, %v1015
      %v1022 = vpack.c.b16 %v1018, %v1017
      %v1025 = vunpack.c.l.b16 %v1009
      %v1026 = vunpack.c.l.b16 %v1010
      %v1027 = vpack.c.b16 %v1026, %v1025
      %v1030 = vsel %vm297, %v1019, 0
      %v1033 = vsel %vm297, %v1020, 0
      %v1036 = vsel %vm297, %v1021, 0
      %v1039 = vsel %vm297, %v1022, 0
      %1041 = vmatprep.subr.bf16.mxu0 0
      %1042 = vmatpush1.bf16.msra.mxu0 0
      %1043 = vmatprep.subr.bf16.mxu0 0
      %1044 = vmatpush1.bf16.msra.mxu0 0
      %1045 = vmatprep.subr.bf16.mxu0 0
      %1046 = vmatpush1.bf16.msra.mxu0 0
      %1047 = vmatprep.subr.bf16.mxu0 0
      %1048 = vmatpush1.bf16.msra.mxu0 0
      %1049 = vmatprep.subr.bf16.mxu0 0
      %1050 = vmatpush1.bf16.msra.mxu0 0
      %1051 = vmatprep.subr.bf16.mxu0 0
      %1052 = vmatpush1.bf16.msra.mxu0 0
      %1053 = vmatprep.subr.bf16.mxu0 0
      %1054 = vmatpush1.bf16.msra.mxu0 0
      %1055 = vmatprep.subr.bf16.mxu0 0
      %1056 = vmatpush1.bf16.msra.mxu0 %v1027
      %1057 = vmatprep.subr.bf16.mxu0 0
      %1058 = vmatpush2.bf16.msra.mxu0 0
      %1059 = vmatprep.subr.bf16.mxu0 0
      %1060 = vmatpush2.bf16.msra.mxu0 0
      %1061 = vmatprep.subr.bf16.mxu0 0
      %1062 = vmatpush2.bf16.msra.mxu0 0
      %1063 = vmatprep.subr.bf16.mxu0 0
      %1064 = vmatpush2.bf16.msra.mxu0 0
      %1065 = vmatprep.subr.bf16.mxu0 0
      %1066 = vmatpush2.bf16.msra.mxu0 0
      %1067 = vmatprep.subr.bf16.mxu0 0
      %1068 = vmatpush2.bf16.msra.mxu0 0
      %1069 = vmatprep.subr.bf16.mxu0 0
      %1070 = vmatpush2.bf16.msra.mxu0 0
      %1071 = vmatprep.subr.bf16.mxu0 0
      %1072 = vmatpush2.bf16.msra.mxu0 0
      %1073 = vmatprep.mubr.bf16.mxu0 0
      %1074 = vmatmul.mubr.bf16.gmra.mxu0 %v1030
      %v1075 = vpop.f32.mrf.mxu0
      %v1076 = vadd.f32 0.0, %v1075
      %v1077 = vpop.f32.mrf.mxu0
      %v1078 = vpop.f32.mrf.mxu0
      %v1079 = vadd.f32 0.0, %v1078
      %v1080 = vpop.f32.mrf.mxu0
      %1081 = vmatprep.mubr.bf16.mxu0 0
      %1082 = vmatmul.mubr.bf16.gmra.mxu0 %v1033
      %v1083 = vpop.f32.mrf.mxu0
      %v1084 = vadd.f32 0.0, %v1083
      %v1085 = vpop.f32.mrf.mxu0
      %v1086 = vpop.f32.mrf.mxu0
      %v1087 = vadd.f32 0.0, %v1086
      %v1088 = vpop.f32.mrf.mxu0
      %1089 = vmatprep.mubr.bf16.mxu0 0
      %1090 = vmatmul.mubr.bf16.gmra.mxu0 %v1036
      %v1091 = vpop.f32.mrf.mxu0
      %v1092 = vadd.f32 0.0, %v1091
      %v1093 = vpop.f32.mrf.mxu0
      %v1094 = vpop.f32.mrf.mxu0
      %v1095 = vadd.f32 0.0, %v1094
      %v1096 = vpop.f32.mrf.mxu0
      %1097 = vmatprep.mubr.bf16.mxu0 0
      %1098 = vmatmul.mubr.bf16.gmra.mxu0 %v1039
      %v1099 = vpop.f32.mrf.mxu0
      %v1100 = vadd.f32 0.0, %v1099
      %v1101 = vpop.f32.mrf.mxu0
      %v1102 = vpop.f32.mrf.mxu0
      %v1103 = vadd.f32 0.0, %v1102
      %v1104 = vpop.f32.mrf.mxu0
      %1105 = vdwg.mxu0
      %v1106 = vadd.f32 %v936, %v1076
      %v1107 = vadd.f32 %v937, %v1079
      %v1108 = vadd.f32 %v938, %v1084
      %v1109 = vadd.f32 %v939, %v1087
      %v1110 = vadd.f32 %v940, %v1092
      %v1111 = vadd.f32 %v941, %v1095
      %v1112 = vadd.f32 %v942, %v1100
      %v1113 = vadd.f32 %v943, %v1103
      %s1114 = scalar_lea.vmem %s192, 32
      %v1115 = vld [vmem:[%s1114] sm:$0xf]
      %v1116 = vld [vmem:[%s1114 + $0x8] sm:$0xf]
      %v1117 = vld [vmem:[%s1114 + $0x10] sm:$0xf]
      %v1118 = vld [vmem:[%s1114 + $0x18] sm:$0xf]
      %v1119 = vld [vmem:[%s1114 + $0x20] sm:$0xf]
      %v1120 = vld [vmem:[%s1114 + $0x28] sm:$0xf]
      %v1121 = vld [vmem:[%s1114 + $0x30] sm:$0xf]
      %v1122 = vld [vmem:[%s1114 + $0x38] sm:$0xf]
      %s1123 = scalar_lea.vmem %s1, 48
      %v1124 = vld [vmem:[%s1123] sm:$0xf]
      %v1125 = vld [vmem:[%s1123 + $0x4] sm:$0xf]
      %v1134 = vunpack.c.l.b16 %v1115
      %v1135 = vunpack.c.l.b16 %v1116
      %v1136 = vunpack.c.l.b16 %v1117
      %v1137 = vunpack.c.l.b16 %v1118
      %v1138 = vunpack.c.l.b16 %v1119
      %v1139 = vunpack.c.l.b16 %v1120
      %v1140 = vunpack.c.l.b16 %v1121
      %v1141 = vunpack.c.l.b16 %v1122
      %v1142 = vpack.c.b16 %v1135, %v1134
      %v1143 = vpack.c.b16 %v1137, %v1136
      %v1144 = vpack.c.b16 %v1139, %v1138
      %v1145 = vpack.c.b16 %v1141, %v1140
      %v1148 = vunpack.c.l.b16 %v1124
      %v1149 = vunpack.c.l.b16 %v1125
      %v1150 = vpack.c.b16 %v1149, %v1148
      %v1153 = vsel %vm297, %v1142, 0
      %v1156 = vsel %vm297, %v1143, 0
      %v1159 = vsel %vm297, %v1144, 0
      %v1162 = vsel %vm297, %v1145, 0
      %1164 = vmatprep.subr.bf16.mxu0 0
      %1165 = vmatpush1.bf16.msra.mxu0 0
      %1166 = vmatprep.subr.bf16.mxu0 0
      %1167 = vmatpush1.bf16.msra.mxu0 0
      %1168 = vmatprep.subr.bf16.mxu0 0
      %1169 = vmatpush1.bf16.msra.mxu0 0
      %1170 = vmatprep.subr.bf16.mxu0 0
      %1171 = vmatpush1.bf16.msra.mxu0 0
      %1172 = vmatprep.subr.bf16.mxu0 0
      %1173 = vmatpush1.bf16.msra.mxu0 0
      %1174 = vmatprep.subr.bf16.mxu0 0
      %1175 = vmatpush1.bf16.msra.mxu0 0
      %1176 = vmatprep.subr.bf16.mxu0 0
      %1177 = vmatpush1.bf16.msra.mxu0 0
      %1178 = vmatprep.subr.bf16.mxu0 0
      %1179 = vmatpush1.bf16.msra.mxu0 %v1150
      %1180 = vmatprep.subr.bf16.mxu0 0
      %1181 = vmatpush2.bf16.msra.mxu0 0
      %1182 = vmatprep.subr.bf16.mxu0 0
      %1183 = vmatpush2.bf16.msra.mxu0 0
      %1184 = vmatprep.subr.bf16.mxu0 0
      %1185 = vmatpush2.bf16.msra.mxu0 0
      %1186 = vmatprep.subr.bf16.mxu0 0
      %1187 = vmatpush2.bf16.msra.mxu0 0
      %1188 = vmatprep.subr.bf16.mxu0 0
      %1189 = vmatpush2.bf16.msra.mxu0 0
      %1190 = vmatprep.subr.bf16.mxu0 0
      %1191 = vmatpush2.bf16.msra.mxu0 0
      %1192 = vmatprep.subr.bf16.mxu0 0
      %1193 = vmatpush2.bf16.msra.mxu0 0
      %1194 = vmatprep.subr.bf16.mxu0 0
      %1195 = vmatpush2.bf16.msra.mxu0 0
      %1196 = vmatprep.mubr.bf16.mxu0 0
      %1197 = vmatmul.mubr.bf16.gmra.mxu0 %v1153
      %v1198 = vpop.f32.mrf.mxu0
      %v1199 = vadd.f32 0.0, %v1198
      %v1200 = vpop.f32.mrf.mxu0
      %v1201 = vpop.f32.mrf.mxu0
      %v1202 = vadd.f32 0.0, %v1201
      %v1203 = vpop.f32.mrf.mxu0
      %1204 = vmatprep.mubr.bf16.mxu0 0
      %1205 = vmatmul.mubr.bf16.gmra.mxu0 %v1156
      %v1206 = vpop.f32.mrf.mxu0
      %v1207 = vadd.f32 0.0, %v1206
      %v1208 = vpop.f32.mrf.mxu0
      %v1209 = vpop.f32.mrf.mxu0
      %v1210 = vadd.f32 0.0, %v1209
      %v1211 = vpop.f32.mrf.mxu0
      %1212 = vmatprep.mubr.bf16.mxu0 0
      %1213 = vmatmul.mubr.bf16.gmra.mxu0 %v1159
      %v1214 = vpop.f32.mrf.mxu0
      %v1215 = vadd.f32 0.0, %v1214
      %v1216 = vpop.f32.mrf.mxu0
      %v1217 = vpop.f32.mrf.mxu0
      %v1218 = vadd.f32 0.0, %v1217
      %v1219 = vpop.f32.mrf.mxu0
      %1220 = vmatprep.mubr.bf16.mxu0 0
      %1221 = vmatmul.mubr.bf16.gmra.mxu0 %v1162
      %v1222 = vpop.f32.mrf.mxu0
      %v1223 = vadd.f32 0.0, %v1222
      %v1224 = vpop.f32.mrf.mxu0
      %v1225 = vpop.f32.mrf.mxu0
      %v1226 = vadd.f32 0.0, %v1225
      %v1227 = vpop.f32.mrf.mxu0
      %1228 = vdwg.mxu0
      %v1229 = vadd.f32 %v1106, %v1199
      %v1230 = vadd.f32 %v1107, %v1202
      %v1231 = vadd.f32 %v1108, %v1207
      %v1232 = vadd.f32 %v1109, %v1210
      %v1233 = vadd.f32 %v1110, %v1215
      %v1234 = vadd.f32 %v1111, %v1218
      %v1235 = vadd.f32 %v1112, %v1223
      %v1236 = vadd.f32 %v1113, %v1226
      %v1237 = vld [vmem:[%s1114] sm:$0xe]
      %v1238 = vld [vmem:[%s1114 + $0x4] sm:$0x1]
      %v1239 = vld [vmem:[%s1114 + $0x8] sm:$0xe]
      %v1240 = vld [vmem:[%s1114 + $0xc] sm:$0x1]
      %v1241 = vld [vmem:[%s1114 + $0x10] sm:$0xe]
      %v1242 = vld [vmem:[%s1114 + $0x14] sm:$0x1]
      %v1243 = vld [vmem:[%s1114 + $0x18] sm:$0xe]
      %v1244 = vld [vmem:[%s1114 + $0x1c] sm:$0x1]
      %v1245 = vld [vmem:[%s1114 + $0x20] sm:$0xe]
      %v1246 = vld [vmem:[%s1114 + $0x24] sm:$0x1]
      %v1247 = vld [vmem:[%s1114 + $0x28] sm:$0xe]
      %v1248 = vld [vmem:[%s1114 + $0x2c] sm:$0x1]
      %v1249 = vld [vmem:[%s1114 + $0x30] sm:$0xe]
      %v1250 = vld [vmem:[%s1114 + $0x34] sm:$0x1]
      %v1251 = vld [vmem:[%s1114 + $0x38] sm:$0xe]
      %v1252 = vld [vmem:[%s1114 + $0x3c] sm:$0x1]
      %v1269 = vrot.slane %v1237, 5
      %v1270 = vrot.slane %v1269, 4
      %v1271 = vrot.slane %v1238, 5
      %v1272 = vsel %vm243, %v1270, %v1271
      %v1273 = vrot.slane %v1239, 5
      %v1274 = vrot.slane %v1273, 4
      %v1275 = vrot.slane %v1240, 5
      %v1276 = vsel %vm243, %v1274, %v1275
      %v1277 = vrot.slane %v1241, 5
      %v1278 = vrot.slane %v1277, 4
      %v1279 = vrot.slane %v1242, 5
      %v1280 = vsel %vm243, %v1278, %v1279
      %v1281 = vrot.slane %v1243, 5
      %v1282 = vrot.slane %v1281, 4
      %v1283 = vrot.slane %v1244, 5
      %v1284 = vsel %vm243, %v1282, %v1283
      %v1285 = vrot.slane %v1245, 5
      %v1286 = vrot.slane %v1285, 4
      %v1287 = vrot.slane %v1246, 5
      %v1288 = vsel %vm243, %v1286, %v1287
      %v1289 = vrot.slane %v1247, 5
      %v1290 = vrot.slane %v1289, 4
      %v1291 = vrot.slane %v1248, 5
      %v1292 = vsel %vm243, %v1290, %v1291
      %v1293 = vrot.slane %v1249, 5
      %v1294 = vrot.slane %v1293, 4
      %v1295 = vrot.slane %v1250, 5
      %v1296 = vsel %vm243, %v1294, %v1295
      %v1297 = vrot.slane %v1251, 5
      %v1298 = vrot.slane %v1297, 4
      %v1299 = vrot.slane %v1252, 5
      %v1300 = vsel %vm243, %v1298, %v1299
      %s1301 = scalar_lea.vmem %s1, 56
      %v1302 = vld [vmem:[%s1301] sm:$0xf]
      %v1303 = vld [vmem:[%s1301 + $0x4] sm:$0xf]
      %v1304 = vunpack.c.l.b16 %v1272
      %v1305 = vunpack.c.l.b16 %v1276
      %v1306 = vunpack.c.l.b16 %v1280
      %v1307 = vunpack.c.l.b16 %v1284
      %v1308 = vunpack.c.l.b16 %v1288
      %v1309 = vunpack.c.l.b16 %v1292
      %v1310 = vunpack.c.l.b16 %v1296
      %v1311 = vunpack.c.l.b16 %v1300
      %v1312 = vpack.c.b16 %v1305, %v1304
      %v1313 = vpack.c.b16 %v1307, %v1306
      %v1314 = vpack.c.b16 %v1309, %v1308
      %v1315 = vpack.c.b16 %v1311, %v1310
      %v1318 = vunpack.c.l.b16 %v1302
      %v1319 = vunpack.c.l.b16 %v1303
      %v1320 = vpack.c.b16 %v1319, %v1318
      %v1323 = vsel %vm297, %v1312, 0
      %v1326 = vsel %vm297, %v1313, 0
      %v1329 = vsel %vm297, %v1314, 0
      %v1332 = vsel %vm297, %v1315, 0
      %1334 = vmatprep.subr.bf16.mxu0 0
      %1335 = vmatpush1.bf16.msra.mxu0 0
      %1336 = vmatprep.subr.bf16.mxu0 0
      %1337 = vmatpush1.bf16.msra.mxu0 0
      %1338 = vmatprep.subr.bf16.mxu0 0
      %1339 = vmatpush1.bf16.msra.mxu0 0
      %1340 = vmatprep.subr.bf16.mxu0 0
      %1341 = vmatpush1.bf16.msra.mxu0 0
      %1342 = vmatprep.subr.bf16.mxu0 0
      %1343 = vmatpush1.bf16.msra.mxu0 0
      %1344 = vmatprep.subr.bf16.mxu0 0
      %1345 = vmatpush1.bf16.msra.mxu0 0
      %1346 = vmatprep.subr.bf16.mxu0 0
      %1347 = vmatpush1.bf16.msra.mxu0 0
      %1348 = vmatprep.subr.bf16.mxu0 0
      %1349 = vmatpush1.bf16.msra.mxu0 %v1320
      %1350 = vmatprep.subr.bf16.mxu0 0
      %1351 = vmatpush2.bf16.msra.mxu0 0
      %1352 = vmatprep.subr.bf16.mxu0 0
      %1353 = vmatpush2.bf16.msra.mxu0 0
      %1354 = vmatprep.subr.bf16.mxu0 0
      %1355 = vmatpush2.bf16.msra.mxu0 0
      %1356 = vmatprep.subr.bf16.mxu0 0
      %1357 = vmatpush2.bf16.msra.mxu0 0
      %1358 = vmatprep.subr.bf16.mxu0 0
      %1359 = vmatpush2.bf16.msra.mxu0 0
      %1360 = vmatprep.subr.bf16.mxu0 0
      %1361 = vmatpush2.bf16.msra.mxu0 0
      %1362 = vmatprep.subr.bf16.mxu0 0
      %1363 = vmatpush2.bf16.msra.mxu0 0
      %1364 = vmatprep.subr.bf16.mxu0 0
      %1365 = vmatpush2.bf16.msra.mxu0 0
      %1366 = vmatprep.mubr.bf16.mxu0 0
      %1367 = vmatmul.mubr.bf16.gmra.mxu0 %v1323
      %v1368 = vpop.f32.mrf.mxu0
      %v1369 = vadd.f32 0.0, %v1368
      %v1370 = vpop.f32.mrf.mxu0
      %v1371 = vpop.f32.mrf.mxu0
      %v1372 = vadd.f32 0.0, %v1371
      %v1373 = vpop.f32.mrf.mxu0
      %1374 = vmatprep.mubr.bf16.mxu0 0
      %1375 = vmatmul.mubr.bf16.gmra.mxu0 %v1326
      %v1376 = vpop.f32.mrf.mxu0
      %v1377 = vadd.f32 0.0, %v1376
      %v1378 = vpop.f32.mrf.mxu0
      %v1379 = vpop.f32.mrf.mxu0
      %v1380 = vadd.f32 0.0, %v1379
      %v1381 = vpop.f32.mrf.mxu0
      %1382 = vmatprep.mubr.bf16.mxu0 0
      %1383 = vmatmul.mubr.bf16.gmra.mxu0 %v1329
      %v1384 = vpop.f32.mrf.mxu0
      %v1385 = vadd.f32 0.0, %v1384
      %v1386 = vpop.f32.mrf.mxu0
      %v1387 = vpop.f32.mrf.mxu0
      %v1388 = vadd.f32 0.0, %v1387
      %v1389 = vpop.f32.mrf.mxu0
      %1390 = vmatprep.mubr.bf16.mxu0 0
      %1391 = vmatmul.mubr.bf16.gmra.mxu0 %v1332
      %v1392 = vpop.f32.mrf.mxu0
      %v1393 = vadd.f32 0.0, %v1392
      %v1394 = vpop.f32.mrf.mxu0
      %v1395 = vpop.f32.mrf.mxu0
      %v1396 = vadd.f32 0.0, %v1395
      %v1397 = vpop.f32.mrf.mxu0
      %1398 = vdwg.mxu0
      %v1399 = vadd.f32 %v1229, %v1369
      %v1400 = vadd.f32 %v1230, %v1372
      %v1401 = vadd.f32 %v1231, %v1377
      %v1402 = vadd.f32 %v1232, %v1380
      %v1403 = vadd.f32 %v1233, %v1385
      %v1404 = vadd.f32 %v1234, %v1388
      %v1405 = vadd.f32 %v1235, %v1393
      %v1406 = vadd.f32 %v1236, %v1396
      %v1407 = vld [vmem:[%s1114] sm:$0xc]
      %v1408 = vld [vmem:[%s1114 + $0x4] sm:$0x3]
      %v1409 = vld [vmem:[%s1114 + $0x8] sm:$0xc]
      %v1410 = vld [vmem:[%s1114 + $0xc] sm:$0x3]
      %v1411 = vld [vmem:[%s1114 + $0x10] sm:$0xc]
      %v1412 = vld [vmem:[%s1114 + $0x14] sm:$0x3]
      %v1413 = vld [vmem:[%s1114 + $0x18] sm:$0xc]
      %v1414 = vld [vmem:[%s1114 + $0x1c] sm:$0x3]
      %v1415 = vld [vmem:[%s1114 + $0x20] sm:$0xc]
      %v1416 = vld [vmem:[%s1114 + $0x24] sm:$0x3]
      %v1417 = vld [vmem:[%s1114 + $0x28] sm:$0xc]
      %v1418 = vld [vmem:[%s1114 + $0x2c] sm:$0x3]
      %v1419 = vld [vmem:[%s1114 + $0x30] sm:$0xc]
      %v1420 = vld [vmem:[%s1114 + $0x34] sm:$0x3]
      %v1421 = vld [vmem:[%s1114 + $0x38] sm:$0xc]
      %v1422 = vld [vmem:[%s1114 + $0x3c] sm:$0x3]
      %v1439 = vrot.slane %v1407, 6
      %v1440 = vrot.slane %v1439, 4
      %v1441 = vrot.slane %v1408, 6
      %v1442 = vsel %vm512, %v1440, %v1441
      %v1443 = vrot.slane %v1409, 6
      %v1444 = vrot.slane %v1443, 4
      %v1445 = vrot.slane %v1410, 6
      %v1446 = vsel %vm512, %v1444, %v1445
      %v1447 = vrot.slane %v1411, 6
      %v1448 = vrot.slane %v1447, 4
      %v1449 = vrot.slane %v1412, 6
      %v1450 = vsel %vm512, %v1448, %v1449
      %v1451 = vrot.slane %v1413, 6
      %v1452 = vrot.slane %v1451, 4
      %v1453 = vrot.slane %v1414, 6
      %v1454 = vsel %vm512, %v1452, %v1453
      %v1455 = vrot.slane %v1415, 6
      %v1456 = vrot.slane %v1455, 4
      %v1457 = vrot.slane %v1416, 6
      %v1458 = vsel %vm512, %v1456, %v1457
      %v1459 = vrot.slane %v1417, 6
      %v1460 = vrot.slane %v1459, 4
      %v1461 = vrot.slane %v1418, 6
      %v1462 = vsel %vm512, %v1460, %v1461
      %v1463 = vrot.slane %v1419, 6
      %v1464 = vrot.slane %v1463, 4
      %v1465 = vrot.slane %v1420, 6
      %v1466 = vsel %vm512, %v1464, %v1465
      %v1467 = vrot.slane %v1421, 6
      %v1468 = vrot.slane %v1467, 4
      %v1469 = vrot.slane %v1422, 6
      %v1470 = vsel %vm512, %v1468, %v1469
      %s1471 = scalar_lea.vmem %s1, 64
      %v1472 = vld [vmem:[%s1471] sm:$0xf]
      %v1473 = vld [vmem:[%s1471 + $0x4] sm:$0xf]
      %v1474 = vunpack.c.l.b16 %v1442
      %v1475 = vunpack.c.l.b16 %v1446
      %v1476 = vunpack.c.l.b16 %v1450
      %v1477 = vunpack.c.l.b16 %v1454
      %v1478 = vunpack.c.l.b16 %v1458
      %v1479 = vunpack.c.l.b16 %v1462
      %v1480 = vunpack.c.l.b16 %v1466
      %v1481 = vunpack.c.l.b16 %v1470
      %v1482 = vpack.c.b16 %v1475, %v1474
      %v1483 = vpack.c.b16 %v1477, %v1476
      %v1484 = vpack.c.b16 %v1479, %v1478
      %v1485 = vpack.c.b16 %v1481, %v1480
      %v1488 = vunpack.c.l.b16 %v1472
      %v1489 = vunpack.c.l.b16 %v1473
      %v1490 = vpack.c.b16 %v1489, %v1488
      %v1493 = vsel %vm297, %v1482, 0
      %v1496 = vsel %vm297, %v1483, 0
      %v1499 = vsel %vm297, %v1484, 0
      %v1502 = vsel %vm297, %v1485, 0
      %1504 = vmatprep.subr.bf16.mxu0 0
      %1505 = vmatpush1.bf16.msra.mxu0 0
      %1506 = vmatprep.subr.bf16.mxu0 0
      %1507 = vmatpush1.bf16.msra.mxu0 0
      %1508 = vmatprep.subr.bf16.mxu0 0
      %1509 = vmatpush1.bf16.msra.mxu0 0
      %1510 = vmatprep.subr.bf16.mxu0 0
      %1511 = vmatpush1.bf16.msra.mxu0 0
      %1512 = vmatprep.subr.bf16.mxu0 0
      %1513 = vmatpush1.bf16.msra.mxu0 0
      %1514 = vmatprep.subr.bf16.mxu0 0
      %1515 = vmatpush1.bf16.msra.mxu0 0
      %1516 = vmatprep.subr.bf16.mxu0 0
      %1517 = vmatpush1.bf16.msra.mxu0 0
      %1518 = vmatprep.subr.bf16.mxu0 0
      %1519 = vmatpush1.bf16.msra.mxu0 %v1490
      %1520 = vmatprep.subr.bf16.mxu0 0
      %1521 = vmatpush2.bf16.msra.mxu0 0
      %1522 = vmatprep.subr.bf16.mxu0 0
      %1523 = vmatpush2.bf16.msra.mxu0 0
      %1524 = vmatprep.subr.bf16.mxu0 0
      %1525 = vmatpush2.bf16.msra.mxu0 0
      %1526 = vmatprep.subr.bf16.mxu0 0
      %1527 = vmatpush2.bf16.msra.mxu0 0
      %1528 = vmatprep.subr.bf16.mxu0 0
      %1529 = vmatpush2.bf16.msra.mxu0 0
      %1530 = vmatprep.subr.bf16.mxu0 0
      %1531 = vmatpush2.bf16.msra.mxu0 0
      %1532 = vmatprep.subr.bf16.mxu0 0
      %1533 = vmatpush2.bf16.msra.mxu0 0
      %1534 = vmatprep.subr.bf16.mxu0 0
      %1535 = vmatpush2.bf16.msra.mxu0 0
      %1536 = vmatprep.mubr.bf16.mxu0 0
      %1537 = vmatmul.mubr.bf16.gmra.mxu0 %v1493
      %v1538 = vpop.f32.mrf.mxu0
      %v1539 = vadd.f32 0.0, %v1538
      %v1540 = vpop.f32.mrf.mxu0
      %v1541 = vpop.f32.mrf.mxu0
      %v1542 = vadd.f32 0.0, %v1541
      %v1543 = vpop.f32.mrf.mxu0
      %1544 = vmatprep.mubr.bf16.mxu0 0
      %1545 = vmatmul.mubr.bf16.gmra.mxu0 %v1496
      %v1546 = vpop.f32.mrf.mxu0
      %v1547 = vadd.f32 0.0, %v1546
      %v1548 = vpop.f32.mrf.mxu0
      %v1549 = vpop.f32.mrf.mxu0
      %v1550 = vadd.f32 0.0, %v1549
      %v1551 = vpop.f32.mrf.mxu0
      %1552 = vmatprep.mubr.bf16.mxu0 0
      %1553 = vmatmul.mubr.bf16.gmra.mxu0 %v1499
      %v1554 = vpop.f32.mrf.mxu0
      %v1555 = vadd.f32 0.0, %v1554
      %v1556 = vpop.f32.mrf.mxu0
      %v1557 = vpop.f32.mrf.mxu0
      %v1558 = vadd.f32 0.0, %v1557
      %v1559 = vpop.f32.mrf.mxu0
      %1560 = vmatprep.mubr.bf16.mxu0 0
      %1561 = vmatmul.mubr.bf16.gmra.mxu0 %v1502
      %v1562 = vpop.f32.mrf.mxu0
      %v1563 = vadd.f32 0.0, %v1562
      %v1564 = vpop.f32.mrf.mxu0
      %v1565 = vpop.f32.mrf.mxu0
      %v1566 = vadd.f32 0.0, %v1565
      %v1567 = vpop.f32.mrf.mxu0
      %1568 = vdwg.mxu0
      %v1569 = vadd.f32 %v1399, %v1539
      %v1570 = vadd.f32 %v1400, %v1542
      %v1571 = vadd.f32 %v1401, %v1547
      %v1572 = vadd.f32 %v1402, %v1550
      %v1573 = vadd.f32 %v1403, %v1555
      %v1574 = vadd.f32 %v1404, %v1558
      %v1575 = vadd.f32 %v1405, %v1563
      %v1576 = vadd.f32 %v1406, %v1566
      %v1577 = vld [vmem:[%s2] sm:$0x1]
      %v1579 = vlaneseq
      %v1580 = vshrl.u32 %v1579, 7
      %v1581 = vsub.s32 0, %v1580
      %v1582 = vrot.slane %v1577, %v1581
      %v1584 = vmul.f32 %v1569, %v1582
      %v1585 = vmul.f32 %v1570, %v1582
      %v1586 = vmul.f32 %v1571, %v1582
      %v1587 = vmul.f32 %v1572, %v1582
      %v1588 = vmul.f32 %v1573, %v1582
      %v1589 = vmul.f32 %v1574, %v1582
      %v1590 = vmul.f32 %v1575, %v1582
      %v1591 = vmul.f32 %v1576, %v1582
      %v1592 = vld [vmem:[%s3] sm:$0x1]
      %v1594 = vlaneseq
      %v1595 = vshrl.u32 %v1594, 7
      %v1596 = vsub.s32 0, %v1595
      %v1597 = vrot.slane %v1592, %v1596
      %v1599 = vadd.f32 %v1584, %v1597
      %v1600 = vadd.f32 %v1585, %v1597
      %v1601 = vadd.f32 %v1586, %v1597
      %v1602 = vadd.f32 %v1587, %v1597
      %v1603 = vadd.f32 %v1588, %v1597
      %v1604 = vadd.f32 %v1589, %v1597
      %v1605 = vadd.f32 %v1590, %v1597
      %v1606 = vadd.f32 %v1591, %v1597
      %v1607 = vmax.f32 %v1599, 0.0
      %v1608 = vmax.f32 %v1600, 0.0
      %v1609 = vmax.f32 %v1601, 0.0
      %v1610 = vmax.f32 %v1602, 0.0
      %v1611 = vmax.f32 %v1603, 0.0
      %v1612 = vmax.f32 %v1604, 0.0
      %v1613 = vmax.f32 %v1605, 0.0
      %v1614 = vmax.f32 %v1606, 0.0
      %v1615 = vpack.c.bf16 %v1607, %v1607
      %v1616 = vpack.c.bf16 %v1608, %v1608
      %v1617 = vpack.c.bf16 %v1609, %v1609
      %v1618 = vpack.c.bf16 %v1610, %v1610
      %v1619 = vpack.c.bf16 %v1611, %v1611
      %v1620 = vpack.c.bf16 %v1612, %v1612
      %v1621 = vpack.c.bf16 %v1613, %v1613
      %v1622 = vpack.c.bf16 %v1614, %v1614
      %vm1623 = vcmask 125952
      %1624 = vst.msk [vmem:[%s197] sm:$0xf] %vm1623, %v1615
      %1625 = vst.msk [vmem:[%s197 + $0x4] sm:$0xf] %vm1623, %v1616
      %1626 = vst.msk [vmem:[%s197 + $0x8] sm:$0xf] %vm1623, %v1617
      %1627 = vst.msk [vmem:[%s197 + $0xc] sm:$0xf] %vm1623, %v1618
      %1628 = vst.msk [vmem:[%s197 + $0x10] sm:$0xf] %vm1623, %v1619
      %1629 = vst.msk [vmem:[%s197 + $0x14] sm:$0xf] %vm1623, %v1620
      %1630 = vst.msk [vmem:[%s197 + $0x18] sm:$0xf] %vm1623, %v1621
      %1631 = vst.msk [vmem:[%s197 + $0x1c] sm:$0xf] %vm1623, %v1622
      %p1632 = scmp.lt.s32.totalorder %s15, 1
      %s1633 = scalar_select %p1632, %s15, 1
      %s1634 = smul.addr %s1633, 8
      %s1635 = smul.addr %s1634, 4
      %s1636 = scalar_lea.vmem %s4, %s1635
      // Predicated region
      $region37: #{fwd.12} parent=35 // pred_check
        %p1637 = pneg %p122
      $region38: #{fwd.12} parent=35 // pred_check_branch
        %1639 = sbr.rel (%p1637) target = $region40
      $region39: #{fwd.12} parent=35 // pred_region
        _
      $region40: #{fwd.12} parent=35 // pred_fallthru
        _
    $region36: #{fwd.12} parent=5 // pred_fallthru
      _
    %p1640 = scmp.le.s32.totalorder 2, %s10
    // Predicated region
    $region41: #{fwd.12} parent=5 // pred_check
      %p1641 = pneg %p1640
    $region42: #{fwd.12} parent=5 // pred_check_branch
      %1643 = sbr.rel (%p1641) target = $region44
    $region43: #{fwd.12} parent=5 // pred_region
      %s1644 = ssub.s32 %s10, 2
      // Predicated region
      $region45: #{fwd.12} parent=43 // pred_check
        %p1645 = pneg %p128
      $region46: #{fwd.12} parent=43 // pred_check_branch
        %1647 = sbr.rel (%p1645) target = $region48
      $region47: #{fwd.12} parent=43 // pred_region
        %p1648 = scmp.lt.s32.totalorder %s16, 1
        %s1649 = scalar_select %p1648, %s16, 1
        %s1650 = smul.addr %s1649, 8
        %s1651 = smul.addr %s1650, 4
        %s1652 = scalar_lea.vmem %s4, %s1651
      $region48: #{fwd.12} parent=43 // pred_fallthru
        _
    $region44: #{fwd.12} parent=5 // pred_fallthru
      _
  $region6: #{fwd.12} parent=0 // loop_footer
    %s14 = sadd.s32 1, %s10
  $region7: #{fwd.12} parent=0 // loop_footer_branch
    %9 = sbr.rel target = $region3
  $region8: #{fwd.12} parent=0 // loop_exit
    _

</llo_original>
